<compile_context>
chip_gen: v7x
topology: tpu7x:2x2x1
jax: 0.10.0
libtpu: 0.0.40
codegen_flags: <defaults>
</compile_context>

<pallas_src>
import functools

import jax
import jax.numpy as jnp
from jax.experimental import pallas as pl
from jax.experimental.pallas import tpu as pltpu


# --------------------------------------------------------------------------
# small helpers
# --------------------------------------------------------------------------
def _round_up(x, m):
    return -(-x // m) * m


def _conv_out(size, k, s):
    return (size - k) // s + 1


def _pick_batch_tile(n, cap):
    """Batch tile: multiple of 16 (bf16 sublane tile) that divides the padded
    batch exactly (no over-padding), capped for VMEM, and preferring >=2 grid
    steps when the batch allows it (so v7x's two TensorCores both get work)."""
    n_pad = _round_up(max(n, 16), 16)
    eff_cap = min(cap, n_pad if n_pad < 32 else max(16, n_pad // 2))
    nb = 16
    t = 32
    while t <= eff_cap:
        if n_pad % t == 0:
            nb = t
        t += 16
    return nb, n_pad


def im2col_pixel_major(x, k, s):
    """x: (N, C, H, W) -> patches (OH*OW, N, C*K*K), K flattened in (c, kh, kw)
    order so it matches weight.reshape(Cout, Cin*K*K).  One-time XLA glue."""
    n, c, h, w = x.shape
    oh, ow = _conv_out(h, k, s), _conv_out(w, k, s)
    cols = []
    for i in range(k):
        for j in range(k):
            cols.append(x[:, :, i:i + s * oh:s, j:j + s * ow:s])
    p = jnp.stack(cols, axis=2)               # (N, C, K*K, OH, OW)
    p = p.reshape(n, c * k * k, oh * ow)      # K order = (c, kh, kw)
    p = p.transpose(2, 0, 1)                  # (OH*OW, N, K)
    return p, oh, ow


# --------------------------------------------------------------------------
# fused Pallas kernel: conv1+ReLU -> conv2+ReLU -> conv3+ReLU, one batch tile
# --------------------------------------------------------------------------
def dqn_fused_kernel(p1_ref, w1_ref, b1_ref, w2_ref, b2_ref, w3_ref, b3_ref,
                     o_ref, y1_ref, y2_ref, *, geom):
    (nb, c1, c2, c3, oh1, ow1, k2, s2, oh2, ow2, k3, s3, oh3, ow3) = geom
    f32, bf16 = jnp.float32, jnp.bfloat16
    kk1 = w1_ref.shape[0]

    # ---- layer 1: conv 8x8 / stride 4 + ReLU ------------------------------
    # One (ow1*nb, kk1)@(kk1, c1) weight-stationary MXU matmul per output row,
    # vectorized bias+ReLU+bf16 epilogue, scattered into the lane-packed
    # y1 scratch (oh1, nb, ow1*c1) that layer 2 reads with contiguous
    # (kw, cin) lane slices.
    w1 = w1_ref[...]
    row_m = ow1 * nb
    b1b = jnp.broadcast_to(b1_ref[...], (row_m, c1))          # hoisted
    for oh in range(oh1):
        a = p1_ref[oh * ow1:(oh + 1) * ow1].reshape(row_m, kk1)
        acc = jnp.dot(a, w1, preferred_element_type=f32)
        r = jnp.maximum(acc + b1b, 0.0).astype(bf16)          # (ow1*nb, c1)
        for ow in range(ow1):                                 # (nb, c1) tiles
            y1_ref[oh, :, ow * c1:(ow + 1) * c1] = r[ow * nb:(ow + 1) * nb]

    # ---- layer 2: conv 4x4 / stride 2 + ReLU ------------------------------
    # kw folded into the contraction: k2 matmuls of (nb, k2*c1)@(k2*c1, c2)
    # per output pixel instead of k2*k2 shallow K=c1 matmuls.
    w2b = [w2_ref[kh * k2 * c1:(kh + 1) * k2 * c1] for kh in range(k2)]
    b2b = jnp.broadcast_to(b2_ref[...], (nb, c2))
    for oho in range(oh2):
        for owo in range(ow2):
            acc = None
            for kh in range(k2):
                lhs = y1_ref[s2 * oho + kh, :, pl.ds(s2 * owo * c1, k2 * c1)]
                d = jnp.dot(lhs, w2b[kh], preferred_element_type=f32)
                acc = d if acc is None else acc + d
            y2_ref[oho, :, owo * c2:(owo + 1) * c2] = (
                jnp.maximum(acc + b2b, 0.0).astype(bf16))

    # ---- layer 3: conv 3x3 / stride 1 + ReLU ------------------------------
    # k3 matmuls of (nb, k3*c2)@(k3*c2, c3) per output pixel; results written
    # pixel-major into the lane-dense (nb, num_p3*c3) output block.
    w3b = [w3_ref[kh * k3 * c2:(kh + 1) * k3 * c2] for kh in range(k3)]
    b3b = jnp.broadcast_to(b3_ref[...], (nb, c3))
    for oho in range(oh3):
        for owo in range(ow3):
            acc = None
            for kh in range(k3):
                lhs = y2_ref[s3 * oho + kh, :, pl.ds(s3 * owo * c2, k3 * c2)]
                d = jnp.dot(lhs, w3b[kh], preferred_element_type=f32)
                acc = d if acc is None else acc + d
            pix = oho * ow3 + owo
            o_ref[:, pix * c3:(pix + 1) * c3] = jnp.maximum(acc + b3b, 0.0)


# --------------------------------------------------------------------------
# DQNBase forward wrapper
# --------------------------------------------------------------------------
def dqn_base_forward(x, params, batch_tile=32):
    (w1, b1, k1, s1), (w2, b2, k2, s2), (w3, b3, k3, s3) = params
    n, cin, h, w = x.shape
    c1, c2, c3 = w1.shape[0], w2.shape[0], w3.shape[0]

    oh1, ow1 = _conv_out(h, k1, s1), _conv_out(w, k1, s1)
    oh2, ow2 = _conv_out(oh1, k2, s2), _conv_out(ow1, k2, s2)
    oh3, ow3 = _conv_out(oh2, k3, s3), _conv_out(ow2, k3, s3)
    num_p1, num_p3 = oh1 * ow1, oh3 * ow3
    kk1 = cin * k1 * k1

    nb, n_pad = _pick_batch_tile(n, batch_tile)
    if n_pad != n:
        x = jnp.pad(x, ((0, n_pad - n), (0, 0), (0, 0), (0, 0)))

    # one-time XLA glue on the raw input; bf16 MXU operand halves patch DMA.
    # TODO(synk): stream the raw (nb, Cin, H, W) tile and build layer-1 patches
    # in-kernel to drop the k^2/s^2 im2col HBM inflation at Atari-scale inputs.
    p1, _, _ = im2col_pixel_major(x, k1, s1)          # (num_p1, n_pad, kk1)
    p1 = p1.astype(jnp.bfloat16)

    # weights as 2-D lane-friendly matrices, bf16 for the MXU; biases f32.
    # K-order of w2/w3 rows is (kh, kw, cin) so the per-kh row slice matches the
    # (kw, cin) lane layout of the y1/y2 scratch slices.
    w1_mat = jnp.transpose(w1.reshape(c1, kk1)).astype(jnp.bfloat16)          # (kk1, c1)
    w2_mat = jnp.transpose(w2, (2, 3, 1, 0)).reshape(k2 * k2 * c1, c2).astype(jnp.bfloat16)
    w3_mat = jnp.transpose(w3, (2, 3, 1, 0)).reshape(k3 * k3 * c2, c3).astype(jnp.bfloat16)
    b1r, b2r, b3r = b1.reshape(1, c1), b2.reshape(1, c2), b3.reshape(1, c3)

    flops = 2 * n_pad * (num_p1 * kk1 * c1
                         + oh2 * ow2 * (k2 * k2 * c1) * c2
                         + num_p3 * (k3 * k3 * c2) * c3)
    bytes_accessed = (p1.size * 2
                      + (w1_mat.size + w2_mat.size + w3_mat.size) * 2
                      + (b1r.size + b2r.size + b3r.size) * 4
                      + n_pad * num_p3 * c3 * 4)

    kernel = functools.partial(
        dqn_fused_kernel,
        geom=(nb, c1, c2, c3, oh1, ow1, k2, s2, oh2, ow2, k3, s3, oh3, ow3))

    out = pl.pallas_call(
        kernel,
        out_shape=jax.ShapeDtypeStruct((n_pad, num_p3 * c3), jnp.float32),
        grid=(n_pad // nb,),
        in_specs=[
            # layer-1 patches: batch-tiled, double-buffered by the pipeline
            pl.BlockSpec((num_p1, nb, kk1), lambda i: (0, i, 0)),
            # weights / biases: constant index_map -> fetched once, resident
            pl.BlockSpec((kk1, c1), lambda i: (0, 0)),
            pl.BlockSpec((1, c1), lambda i: (0, 0)),
            pl.BlockSpec((k2 * k2 * c1, c2), lambda i: (0, 0)),
            pl.BlockSpec((1, c2), lambda i: (0, 0)),
            pl.BlockSpec((k3 * k3 * c2, c3), lambda i: (0, 0)),
            pl.BlockSpec((1, c3), lambda i: (0, 0)),
        ],
        out_specs=pl.BlockSpec((nb, num_p3 * c3), lambda i: (i, 0)),
        scratch_shapes=[
            pltpu.VMEM((oh1, nb, ow1 * c1), jnp.bfloat16),   # y1 activations
            pltpu.VMEM((oh2, nb, ow2 * c2), jnp.bfloat16),   # y2 activations
        ],
        compiler_params=pltpu.CompilerParams(
            dimension_semantics=("parallel",),
            vmem_limit_bytes=48 * 1024 * 1024),
        cost_estimate=pl.CostEstimate(
            flops=flops, transcendentals=0, bytes_accessed=bytes_accessed),
    )(p1, w1_mat, b1r, w2_mat, b2r, w3_mat, b3r)

    out = out[:n]  # drop batch padding
    # restore PyTorch's channel-major Flatten once, on the tiny final output
    return out.reshape(n, num_p3, c3).transpose(0, 2, 1).reshape(n, c3 * num_p3)


# --------------------------------------------------------------------------
# Deterministic He (kaiming_uniform_) init, matching PyTorch semantics
# --------------------------------------------------------------------------
def he_uniform(key, shape):
    # shape = (Cout, Cin, KH, KW); fan_in = Cin*KH*KW; bound = sqrt(6/fan_in)
    fan_in = shape[1] * shape[2] * shape[3]
    bound = (6.0 / fan_in) ** 0.5
    return jax.random.uniform(key, shape, jnp.float32, -bound, bound)


# --------------------------------------------------------------------------
# Reference (XLA conv) with matching bf16-operand / f32-accumulate quantization
# --------------------------------------------------------------------------
def reference_forward(x, params):
    out = x
    for (wt, b, k, s) in params:
        out = jax.lax.conv_general_dilated(
            out.astype(jnp.bfloat16), wt.astype(jnp.bfloat16),
            window_strides=(s, s), padding="VALID",
            dimension_numbers=("NCHW", "OIHW", "NCHW"),
            preferred_element_type=jnp.float32)
        out = jnp.maximum(out + b.reshape(1, -1, 1, 1), 0.0)
    return out.reshape(out.shape[0], -1)


if __name__ == "__main__":
    key = jax.random.PRNGKey(0)
    k_x, k_w1, k_w2, k_w3 = jax.random.split(key, 4)

    batch = 2
    num_channels = 4
    spatial = 36  # 36 -> 8 -> 3 -> 1 under (k8,s4), (k4,s2), (k3,s1)

    # input states, NCHW (PyTorch convention)
    x = jax.random.uniform(k_x, (batch, num_channels, spatial, spatial), jnp.float32)

    # parameters (He-uniform weights, zero biases) — deterministic, in-script
    w1 = he_uniform(k_w1, (32, num_channels, 8, 8))
    w2 = he_uniform(k_w2, (64, 32, 4, 4))
    w3 = he_uniform(k_w3, (64, 64, 3, 3))
    b1 = jnp.zeros((32,), jnp.float32)
    b2 = jnp.zeros((64,), jnp.float32)
    b3 = jnp.zeros((64,), jnp.float32)

    params = [(w1, b1, 8, 4), (w2, b2, 4, 2), (w3, b3, 3, 1)]

    fwd = jax.jit(functools.partial(dqn_base_forward, params=params))
    out = jax.block_until_ready(fwd(x))

    ref = jax.block_until_ready(reference_forward(x, params))
    assert out.shape == (batch, 64 * 1 * 1), out.shape
    err = float(jnp.max(jnp.abs(out - ref)))
    assert jnp.allclose(out, ref, atol=2e-2, rtol=2e-2), err

    print("KERNEL_OK")
</pallas_src>

<mosaic_0001>
module attributes {stable_mosaic.version = 11 : i64} {
  func.func @dqn_fused_kernel(%arg0: i32, %arg1: memref<64x16x256xbf16, #tpu.memory_space<vmem>>, %arg2: memref<256x32xbf16, #tpu.memory_space<vmem>>, %arg3: memref<1x32xf32, #tpu.memory_space<vmem>>, %arg4: memref<512x64xbf16, #tpu.memory_space<vmem>>, %arg5: memref<1x64xf32, #tpu.memory_space<vmem>>, %arg6: memref<576x64xbf16, #tpu.memory_space<vmem>>, %arg7: memref<1x64xf32, #tpu.memory_space<vmem>>, %arg8: memref<16x64xf32, #tpu.memory_space<vmem>>, %arg9: memref<8x16x256xbf16, #tpu.memory_space<vmem>>, %arg10: memref<3x16x192xbf16, #tpu.memory_space<vmem>>) attributes {dimension_semantics = [#tpu.dimension_semantics<parallel>], iteration_bounds = array<i64: 1>, scalar_prefetch = 0 : i64, scratch_operands = 2 : i64, tpu.core_type = #tpu.core_type<tc>, window_params = [{transform_indices = @transform_0, window_bounds = array<i64: 64, 16, 256>}, {pipeline_mode = #tpu.pipeline_mode<synchronous>, transform_indices = @transform_1, window_bounds = array<i64: 256, 32>}, {pipeline_mode = #tpu.pipeline_mode<synchronous>, transform_indices = @transform_2, window_bounds = array<i64: 1, 32>}, {pipeline_mode = #tpu.pipeline_mode<synchronous>, transform_indices = @transform_3, window_bounds = array<i64: 512, 64>}, {pipeline_mode = #tpu.pipeline_mode<synchronous>, transform_indices = @transform_4, window_bounds = array<i64: 1, 64>}, {pipeline_mode = #tpu.pipeline_mode<synchronous>, transform_indices = @transform_5, window_bounds = array<i64: 576, 64>}, {pipeline_mode = #tpu.pipeline_mode<synchronous>, transform_indices = @transform_6, window_bounds = array<i64: 1, 64>}, {transform_indices = @transform_7, window_bounds = array<i64: 16, 64>}]} {
    %c0 = arith.constant 0 : index
    %c0_0 = arith.constant 0 : index
    %0 = vector.load %arg2[%c0, %c0_0] : memref<256x32xbf16, #tpu.memory_space<vmem>>, vector<256x32xbf16>
    %c0_1 = arith.constant 0 : index
    %c0_2 = arith.constant 0 : index
    %1 = vector.load %arg3[%c0_1, %c0_2] : memref<1x32xf32, #tpu.memory_space<vmem>>, vector<1x32xf32>
    %2 = vector.shape_cast %1 : vector<1x32xf32> to vector<1x32xf32>
    %3 = vector.broadcast %2 : vector<1x32xf32> to vector<128x32xf32>
    %c0_3 = arith.constant 0 : index
    %c0_4 = arith.constant 0 : index
    %c0_5 = arith.constant 0 : index
    %4 = vector.load %arg1[%c0_3, %c0_4, %c0_5] : memref<64x16x256xbf16, #tpu.memory_space<vmem>>, vector<8x16x256xbf16>
    %5 = vector.shape_cast %4 : vector<8x16x256xbf16> to vector<128x256xbf16>
    %cst = arith.constant dense<0.000000e+00> : vector<128x32xf32>
    %6 = tpu.matmul %5, %0, %cst {dimension_numbers = #tpu.dot_dimension_numbers<[1], [0], [0], [1], [0, 0, 1, 1], [], []>} : vector<128x256xbf16>, vector<256x32xbf16>, vector<128x32xf32> -> vector<128x32xf32>
    %7 = arith.addf %6, %3 : vector<128x32xf32>
    %cst_6 = arith.constant 0.000000e+00 : f32
    %8 = vector.broadcast %cst_6 : f32 to vector<128x32xf32>
    %9 = arith.maximumf %7, %8 : vector<128x32xf32>
    %10 = arith.truncf %9 : vector<128x32xf32> to vector<128x32xbf16>
    %11 = vector.extract_strided_slice %10 {offsets = [0, 0], sizes = [16, 32], strides = [1, 1]} : vector<128x32xbf16> to vector<16x32xbf16>
    %c0_7 = arith.constant 0 : index
    %c0_8 = arith.constant 0 : index
    %c0_9 = arith.constant 0 : index
    %12 = vector.load %arg9[%c0_7, %c0_8, %c0_9] : memref<8x16x256xbf16, #tpu.memory_space<vmem>>, vector<1x16x32xbf16>
    %13 = vector.shape_cast %12 : vector<1x16x32xbf16> to vector<16x32xbf16>
    %14 = vector.shape_cast %11 : vector<16x32xbf16> to vector<1x16x32xbf16>
    tpu.vector_store %arg9[%c0_7, %c0_8, %c0_9], %14 {strides = array<i32>} : memref<8x16x256xbf16, #tpu.memory_space<vmem>>, vector<1x16x32xbf16>,
    %15 = vector.extract_strided_slice %10 {offsets = [16, 0], sizes = [16, 32], strides = [1, 1]} : vector<128x32xbf16> to vector<16x32xbf16>
    %c0_10 = arith.constant 0 : index
    %c0_11 = arith.constant 0 : index
    %c32 = arith.constant 32 : index
    %16 = vector.load %arg9[%c0_10, %c0_11, %c32] : memref<8x16x256xbf16, #tpu.memory_space<vmem>>, vector<1x16x32xbf16>
    %17 = vector.shape_cast %16 : vector<1x16x32xbf16> to vector<16x32xbf16>
    %18 = vector.shape_cast %15 : vector<16x32xbf16> to vector<1x16x32xbf16>
    tpu.vector_store %arg9[%c0_10, %c0_11, %c32], %18 {strides = array<i32>} : memref<8x16x256xbf16, #tpu.memory_space<vmem>>, vector<1x16x32xbf16>,
    %19 = vector.extract_strided_slice %10 {offsets = [32, 0], sizes = [16, 32], strides = [1, 1]} : vector<128x32xbf16> to vector<16x32xbf16>
    %c0_12 = arith.constant 0 : index
    %c0_13 = arith.constant 0 : index
    %c64 = arith.constant 64 : index
    %20 = vector.load %arg9[%c0_12, %c0_13, %c64] : memref<8x16x256xbf16, #tpu.memory_space<vmem>>, vector<1x16x32xbf16>
    %21 = vector.shape_cast %20 : vector<1x16x32xbf16> to vector<16x32xbf16>
    %22 = vector.shape_cast %19 : vector<16x32xbf16> to vector<1x16x32xbf16>
    tpu.vector_store %arg9[%c0_12, %c0_13, %c64], %22 {strides = array<i32>} : memref<8x16x256xbf16, #tpu.memory_space<vmem>>, vector<1x16x32xbf16>,
    %23 = vector.extract_strided_slice %10 {offsets = [48, 0], sizes = [16, 32], strides = [1, 1]} : vector<128x32xbf16> to vector<16x32xbf16>
    %c0_14 = arith.constant 0 : index
    %c0_15 = arith.constant 0 : index
    %c96 = arith.constant 96 : index
    %24 = vector.load %arg9[%c0_14, %c0_15, %c96] : memref<8x16x256xbf16, #tpu.memory_space<vmem>>, vector<1x16x32xbf16>
    %25 = vector.shape_cast %24 : vector<1x16x32xbf16> to vector<16x32xbf16>
    %26 = vector.shape_cast %23 : vector<16x32xbf16> to vector<1x16x32xbf16>
    tpu.vector_store %arg9[%c0_14, %c0_15, %c96], %26 {strides = array<i32>} : memref<8x16x256xbf16, #tpu.memory_space<vmem>>, vector<1x16x32xbf16>,
    %27 = vector.extract_strided_slice %10 {offsets = [64, 0], sizes = [16, 32], strides = [1, 1]} : vector<128x32xbf16> to vector<16x32xbf16>
    %c0_16 = arith.constant 0 : index
    %c0_17 = arith.constant 0 : index
    %c128 = arith.constant 128 : index
    %28 = vector.load %arg9[%c0_16, %c0_17, %c128] : memref<8x16x256xbf16, #tpu.memory_space<vmem>>, vector<1x16x32xbf16>
    %29 = vector.shape_cast %28 : vector<1x16x32xbf16> to vector<16x32xbf16>
    %30 = vector.shape_cast %27 : vector<16x32xbf16> to vector<1x16x32xbf16>
    tpu.vector_store %arg9[%c0_16, %c0_17, %c128], %30 {strides = array<i32>} : memref<8x16x256xbf16, #tpu.memory_space<vmem>>, vector<1x16x32xbf16>,
    %31 = vector.extract_strided_slice %10 {offsets = [80, 0], sizes = [16, 32], strides = [1, 1]} : vector<128x32xbf16> to vector<16x32xbf16>
    %c0_18 = arith.constant 0 : index
    %c0_19 = arith.constant 0 : index
    %c160 = arith.constant 160 : index
    %32 = vector.load %arg9[%c0_18, %c0_19, %c160] : memref<8x16x256xbf16, #tpu.memory_space<vmem>>, vector<1x16x32xbf16>
    %33 = vector.shape_cast %32 : vector<1x16x32xbf16> to vector<16x32xbf16>
    %34 = vector.shape_cast %31 : vector<16x32xbf16> to vector<1x16x32xbf16>
    tpu.vector_store %arg9[%c0_18, %c0_19, %c160], %34 {strides = array<i32>} : memref<8x16x256xbf16, #tpu.memory_space<vmem>>, vector<1x16x32xbf16>,
    %35 = vector.extract_strided_slice %10 {offsets = [96, 0], sizes = [16, 32], strides = [1, 1]} : vector<128x32xbf16> to vector<16x32xbf16>
    %c0_20 = arith.constant 0 : index
    %c0_21 = arith.constant 0 : index
    %c192 = arith.constant 192 : index
    %36 = vector.load %arg9[%c0_20, %c0_21, %c192] : memref<8x16x256xbf16, #tpu.memory_space<vmem>>, vector<1x16x32xbf16>
    %37 = vector.shape_cast %36 : vector<1x16x32xbf16> to vector<16x32xbf16>
    %38 = vector.shape_cast %35 : vector<16x32xbf16> to vector<1x16x32xbf16>
    tpu.vector_store %arg9[%c0_20, %c0_21, %c192], %38 {strides = array<i32>} : memref<8x16x256xbf16, #tpu.memory_space<vmem>>, vector<1x16x32xbf16>,
    %39 = vector.extract_strided_slice %10 {offsets = [112, 0], sizes = [16, 32], strides = [1, 1]} : vector<128x32xbf16> to vector<16x32xbf16>
    %c0_22 = arith.constant 0 : index
    %c0_23 = arith.constant 0 : index
    %c224 = arith.constant 224 : index
    %40 = vector.load %arg9[%c0_22, %c0_23, %c224] : memref<8x16x256xbf16, #tpu.memory_space<vmem>>, vector<1x16x32xbf16>
    %41 = vector.shape_cast %40 : vector<1x16x32xbf16> to vector<16x32xbf16>
    %42 = vector.shape_cast %39 : vector<16x32xbf16> to vector<1x16x32xbf16>
    tpu.vector_store %arg9[%c0_22, %c0_23, %c224], %42 {strides = array<i32>} : memref<8x16x256xbf16, #tpu.memory_space<vmem>>, vector<1x16x32xbf16>,
    %c8 = arith.constant 8 : index
    %c0_24 = arith.constant 0 : index
    %c0_25 = arith.constant 0 : index
    %43 = vector.load %arg1[%c8, %c0_24, %c0_25] : memref<64x16x256xbf16, #tpu.memory_space<vmem>>, vector<8x16x256xbf16>
    %44 = vector.shape_cast %43 : vector<8x16x256xbf16> to vector<128x256xbf16>
    %cst_26 = arith.constant dense<0.000000e+00> : vector<128x32xf32>
    %45 = tpu.matmul %44, %0, %cst_26 {dimension_numbers = #tpu.dot_dimension_numbers<[1], [0], [0], [1], [0, 0, 1, 1], [], []>} : vector<128x256xbf16>, vector<256x32xbf16>, vector<128x32xf32> -> vector<128x32xf32>
    %46 = arith.addf %45, %3 : vector<128x32xf32>
    %cst_27 = arith.constant 0.000000e+00 : f32
    %47 = vector.broadcast %cst_27 : f32 to vector<128x32xf32>
    %48 = arith.maximumf %46, %47 : vector<128x32xf32>
    %49 = arith.truncf %48 : vector<128x32xf32> to vector<128x32xbf16>
    %50 = vector.extract_strided_slice %49 {offsets = [0, 0], sizes = [16, 32], strides = [1, 1]} : vector<128x32xbf16> to vector<16x32xbf16>
    %c1 = arith.constant 1 : index
    %c0_28 = arith.constant 0 : index
    %c0_29 = arith.constant 0 : index
    %51 = vector.load %arg9[%c1, %c0_28, %c0_29] : memref<8x16x256xbf16, #tpu.memory_space<vmem>>, vector<1x16x32xbf16>
    %52 = vector.shape_cast %51 : vector<1x16x32xbf16> to vector<16x32xbf16>
    %53 = vector.shape_cast %50 : vector<16x32xbf16> to vector<1x16x32xbf16>
    tpu.vector_store %arg9[%c1, %c0_28, %c0_29], %53 {strides = array<i32>} : memref<8x16x256xbf16, #tpu.memory_space<vmem>>, vector<1x16x32xbf16>,
    %54 = vector.extract_strided_slice %49 {offsets = [16, 0], sizes = [16, 32], strides = [1, 1]} : vector<128x32xbf16> to vector<16x32xbf16>
    %c1_30 = arith.constant 1 : index
    %c0_31 = arith.constant 0 : index
    %c32_32 = arith.constant 32 : index
    %55 = vector.load %arg9[%c1_30, %c0_31, %c32_32] : memref<8x16x256xbf16, #tpu.memory_space<vmem>>, vector<1x16x32xbf16>
    %56 = vector.shape_cast %55 : vector<1x16x32xbf16> to vector<16x32xbf16>
    %57 = vector.shape_cast %54 : vector<16x32xbf16> to vector<1x16x32xbf16>
    tpu.vector_store %arg9[%c1_30, %c0_31, %c32_32], %57 {strides = array<i32>} : memref<8x16x256xbf16, #tpu.memory_space<vmem>>, vector<1x16x32xbf16>,
    %58 = vector.extract_strided_slice %49 {offsets = [32, 0], sizes = [16, 32], strides = [1, 1]} : vector<128x32xbf16> to vector<16x32xbf16>
    %c1_33 = arith.constant 1 : index
    %c0_34 = arith.constant 0 : index
    %c64_35 = arith.constant 64 : index
    %59 = vector.load %arg9[%c1_33, %c0_34, %c64_35] : memref<8x16x256xbf16, #tpu.memory_space<vmem>>, vector<1x16x32xbf16>
    %60 = vector.shape_cast %59 : vector<1x16x32xbf16> to vector<16x32xbf16>
    %61 = vector.shape_cast %58 : vector<16x32xbf16> to vector<1x16x32xbf16>
    tpu.vector_store %arg9[%c1_33, %c0_34, %c64_35], %61 {strides = array<i32>} : memref<8x16x256xbf16, #tpu.memory_space<vmem>>, vector<1x16x32xbf16>,
    %62 = vector.extract_strided_slice %49 {offsets = [48, 0], sizes = [16, 32], strides = [1, 1]} : vector<128x32xbf16> to vector<16x32xbf16>
    %c1_36 = arith.constant 1 : index
    %c0_37 = arith.constant 0 : index
    %c96_38 = arith.constant 96 : index
    %63 = vector.load %arg9[%c1_36, %c0_37, %c96_38] : memref<8x16x256xbf16, #tpu.memory_space<vmem>>, vector<1x16x32xbf16>
    %64 = vector.shape_cast %63 : vector<1x16x32xbf16> to vector<16x32xbf16>
    %65 = vector.shape_cast %62 : vector<16x32xbf16> to vector<1x16x32xbf16>
    tpu.vector_store %arg9[%c1_36, %c0_37, %c96_38], %65 {strides = array<i32>} : memref<8x16x256xbf16, #tpu.memory_space<vmem>>, vector<1x16x32xbf16>,
    %66 = vector.extract_strided_slice %49 {offsets = [64, 0], sizes = [16, 32], strides = [1, 1]} : vector<128x32xbf16> to vector<16x32xbf16>
    %c1_39 = arith.constant 1 : index
    %c0_40 = arith.constant 0 : index
    %c128_41 = arith.constant 128 : index
    %67 = vector.load %arg9[%c1_39, %c0_40, %c128_41] : memref<8x16x256xbf16, #tpu.memory_space<vmem>>, vector<1x16x32xbf16>
    %68 = vector.shape_cast %67 : vector<1x16x32xbf16> to vector<16x32xbf16>
    %69 = vector.shape_cast %66 : vector<16x32xbf16> to vector<1x16x32xbf16>
    tpu.vector_store %arg9[%c1_39, %c0_40, %c128_41], %69 {strides = array<i32>} : memref<8x16x256xbf16, #tpu.memory_space<vmem>>, vector<1x16x32xbf16>,
    %70 = vector.extract_strided_slice %49 {offsets = [80, 0], sizes = [16, 32], strides = [1, 1]} : vector<128x32xbf16> to vector<16x32xbf16>
    %c1_42 = arith.constant 1 : index
    %c0_43 = arith.constant 0 : index
    %c160_44 = arith.constant 160 : index
    %71 = vector.load %arg9[%c1_42, %c0_43, %c160_44] : memref<8x16x256xbf16, #tpu.memory_space<vmem>>, vector<1x16x32xbf16>
    %72 = vector.shape_cast %71 : vector<1x16x32xbf16> to vector<16x32xbf16>
    %73 = vector.shape_cast %70 : vector<16x32xbf16> to vector<1x16x32xbf16>
    tpu.vector_store %arg9[%c1_42, %c0_43, %c160_44], %73 {strides = array<i32>} : memref<8x16x256xbf16, #tpu.memory_space<vmem>>, vector<1x16x32xbf16>,
    %74 = vector.extract_strided_slice %49 {offsets = [96, 0], sizes = [16, 32], strides = [1, 1]} : vector<128x32xbf16> to vector<16x32xbf16>
    %c1_45 = arith.constant 1 : index
    %c0_46 = arith.constant 0 : index
    %c192_47 = arith.constant 192 : index
    %75 = vector.load %arg9[%c1_45, %c0_46, %c192_47] : memref<8x16x256xbf16, #tpu.memory_space<vmem>>, vector<1x16x32xbf16>
    %76 = vector.shape_cast %75 : vector<1x16x32xbf16> to vector<16x32xbf16>
    %77 = vector.shape_cast %74 : vector<16x32xbf16> to vector<1x16x32xbf16>
    tpu.vector_store %arg9[%c1_45, %c0_46, %c192_47], %77 {strides = array<i32>} : memref<8x16x256xbf16, #tpu.memory_space<vmem>>, vector<1x16x32xbf16>,
    %78 = vector.extract_strided_slice %49 {offsets = [112, 0], sizes = [16, 32], strides = [1, 1]} : vector<128x32xbf16> to vector<16x32xbf16>
    %c1_48 = arith.constant 1 : index
    %c0_49 = arith.constant 0 : index
    %c224_50 = arith.constant 224 : index
    %79 = vector.load %arg9[%c1_48, %c0_49, %c224_50] : memref<8x16x256xbf16, #tpu.memory_space<vmem>>, vector<1x16x32xbf16>
    %80 = vector.shape_cast %79 : vector<1x16x32xbf16> to vector<16x32xbf16>
    %81 = vector.shape_cast %78 : vector<16x32xbf16> to vector<1x16x32xbf16>
    tpu.vector_store %arg9[%c1_48, %c0_49, %c224_50], %81 {strides = array<i32>} : memref<8x16x256xbf16, #tpu.memory_space<vmem>>, vector<1x16x32xbf16>,
    %c16 = arith.constant 16 : index
    %c0_51 = arith.constant 0 : index
    %c0_52 = arith.constant 0 : index
    %82 = vector.load %arg1[%c16, %c0_51, %c0_52] : memref<64x16x256xbf16, #tpu.memory_space<vmem>>, vector<8x16x256xbf16>
    %83 = vector.shape_cast %82 : vector<8x16x256xbf16> to vector<128x256xbf16>
    %cst_53 = arith.constant dense<0.000000e+00> : vector<128x32xf32>
    %84 = tpu.matmul %83, %0, %cst_53 {dimension_numbers = #tpu.dot_dimension_numbers<[1], [0], [0], [1], [0, 0, 1, 1], [], []>} : vector<128x256xbf16>, vector<256x32xbf16>, vector<128x32xf32> -> vector<128x32xf32>
    %85 = arith.addf %84, %3 : vector<128x32xf32>
    %cst_54 = arith.constant 0.000000e+00 : f32
    %86 = vector.broadcast %cst_54 : f32 to vector<128x32xf32>
    %87 = arith.maximumf %85, %86 : vector<128x32xf32>
    %88 = arith.truncf %87 : vector<128x32xf32> to vector<128x32xbf16>
    %89 = vector.extract_strided_slice %88 {offsets = [0, 0], sizes = [16, 32], strides = [1, 1]} : vector<128x32xbf16> to vector<16x32xbf16>
    %c2 = arith.constant 2 : index
    %c0_55 = arith.constant 0 : index
    %c0_56 = arith.constant 0 : index
    %90 = vector.load %arg9[%c2, %c0_55, %c0_56] : memref<8x16x256xbf16, #tpu.memory_space<vmem>>, vector<1x16x32xbf16>
    %91 = vector.shape_cast %90 : vector<1x16x32xbf16> to vector<16x32xbf16>
    %92 = vector.shape_cast %89 : vector<16x32xbf16> to vector<1x16x32xbf16>
    tpu.vector_store %arg9[%c2, %c0_55, %c0_56], %92 {strides = array<i32>} : memref<8x16x256xbf16, #tpu.memory_space<vmem>>, vector<1x16x32xbf16>,
    %93 = vector.extract_strided_slice %88 {offsets = [16, 0], sizes = [16, 32], strides = [1, 1]} : vector<128x32xbf16> to vector<16x32xbf16>
    %c2_57 = arith.constant 2 : index
    %c0_58 = arith.constant 0 : index
    %c32_59 = arith.constant 32 : index
    %94 = vector.load %arg9[%c2_57, %c0_58, %c32_59] : memref<8x16x256xbf16, #tpu.memory_space<vmem>>, vector<1x16x32xbf16>
    %95 = vector.shape_cast %94 : vector<1x16x32xbf16> to vector<16x32xbf16>
    %96 = vector.shape_cast %93 : vector<16x32xbf16> to vector<1x16x32xbf16>
    tpu.vector_store %arg9[%c2_57, %c0_58, %c32_59], %96 {strides = array<i32>} : memref<8x16x256xbf16, #tpu.memory_space<vmem>>, vector<1x16x32xbf16>,
    %97 = vector.extract_strided_slice %88 {offsets = [32, 0], sizes = [16, 32], strides = [1, 1]} : vector<128x32xbf16> to vector<16x32xbf16>
    %c2_60 = arith.constant 2 : index
    %c0_61 = arith.constant 0 : index
    %c64_62 = arith.constant 64 : index
    %98 = vector.load %arg9[%c2_60, %c0_61, %c64_62] : memref<8x16x256xbf16, #tpu.memory_space<vmem>>, vector<1x16x32xbf16>
    %99 = vector.shape_cast %98 : vector<1x16x32xbf16> to vector<16x32xbf16>
    %100 = vector.shape_cast %97 : vector<16x32xbf16> to vector<1x16x32xbf16>
    tpu.vector_store %arg9[%c2_60, %c0_61, %c64_62], %100 {strides = array<i32>} : memref<8x16x256xbf16, #tpu.memory_space<vmem>>, vector<1x16x32xbf16>,
    %101 = vector.extract_strided_slice %88 {offsets = [48, 0], sizes = [16, 32], strides = [1, 1]} : vector<128x32xbf16> to vector<16x32xbf16>
    %c2_63 = arith.constant 2 : index
    %c0_64 = arith.constant 0 : index
    %c96_65 = arith.constant 96 : index
    %102 = vector.load %arg9[%c2_63, %c0_64, %c96_65] : memref<8x16x256xbf16, #tpu.memory_space<vmem>>, vector<1x16x32xbf16>
    %103 = vector.shape_cast %102 : vector<1x16x32xbf16> to vector<16x32xbf16>
    %104 = vector.shape_cast %101 : vector<16x32xbf16> to vector<1x16x32xbf16>
    tpu.vector_store %arg9[%c2_63, %c0_64, %c96_65], %104 {strides = array<i32>} : memref<8x16x256xbf16, #tpu.memory_space<vmem>>, vector<1x16x32xbf16>,
    %105 = vector.extract_strided_slice %88 {offsets = [64, 0], sizes = [16, 32], strides = [1, 1]} : vector<128x32xbf16> to vector<16x32xbf16>
    %c2_66 = arith.constant 2 : index
    %c0_67 = arith.constant 0 : index
    %c128_68 = arith.constant 128 : index
    %106 = vector.load %arg9[%c2_66, %c0_67, %c128_68] : memref<8x16x256xbf16, #tpu.memory_space<vmem>>, vector<1x16x32xbf16>
    %107 = vector.shape_cast %106 : vector<1x16x32xbf16> to vector<16x32xbf16>
    %108 = vector.shape_cast %105 : vector<16x32xbf16> to vector<1x16x32xbf16>
    tpu.vector_store %arg9[%c2_66, %c0_67, %c128_68], %108 {strides = array<i32>} : memref<8x16x256xbf16, #tpu.memory_space<vmem>>, vector<1x16x32xbf16>,
    %109 = vector.extract_strided_slice %88 {offsets = [80, 0], sizes = [16, 32], strides = [1, 1]} : vector<128x32xbf16> to vector<16x32xbf16>
    %c2_69 = arith.constant 2 : index
    %c0_70 = arith.constant 0 : index
    %c160_71 = arith.constant 160 : index
    %110 = vector.load %arg9[%c2_69, %c0_70, %c160_71] : memref<8x16x256xbf16, #tpu.memory_space<vmem>>, vector<1x16x32xbf16>
    %111 = vector.shape_cast %110 : vector<1x16x32xbf16> to vector<16x32xbf16>
    %112 = vector.shape_cast %109 : vector<16x32xbf16> to vector<1x16x32xbf16>
    tpu.vector_store %arg9[%c2_69, %c0_70, %c160_71], %112 {strides = array<i32>} : memref<8x16x256xbf16, #tpu.memory_space<vmem>>, vector<1x16x32xbf16>,
    %113 = vector.extract_strided_slice %88 {offsets = [96, 0], sizes = [16, 32], strides = [1, 1]} : vector<128x32xbf16> to vector<16x32xbf16>
    %c2_72 = arith.constant 2 : index
    %c0_73 = arith.constant 0 : index
    %c192_74 = arith.constant 192 : index
    %114 = vector.load %arg9[%c2_72, %c0_73, %c192_74] : memref<8x16x256xbf16, #tpu.memory_space<vmem>>, vector<1x16x32xbf16>
    %115 = vector.shape_cast %114 : vector<1x16x32xbf16> to vector<16x32xbf16>
    %116 = vector.shape_cast %113 : vector<16x32xbf16> to vector<1x16x32xbf16>
    tpu.vector_store %arg9[%c2_72, %c0_73, %c192_74], %116 {strides = array<i32>} : memref<8x16x256xbf16, #tpu.memory_space<vmem>>, vector<1x16x32xbf16>,
    %117 = vector.extract_strided_slice %88 {offsets = [112, 0], sizes = [16, 32], strides = [1, 1]} : vector<128x32xbf16> to vector<16x32xbf16>
    %c2_75 = arith.constant 2 : index
    %c0_76 = arith.constant 0 : index
    %c224_77 = arith.constant 224 : index
    %118 = vector.load %arg9[%c2_75, %c0_76, %c224_77] : memref<8x16x256xbf16, #tpu.memory_space<vmem>>, vector<1x16x32xbf16>
    %119 = vector.shape_cast %118 : vector<1x16x32xbf16> to vector<16x32xbf16>
    %120 = vector.shape_cast %117 : vector<16x32xbf16> to vector<1x16x32xbf16>
    tpu.vector_store %arg9[%c2_75, %c0_76, %c224_77], %120 {strides = array<i32>} : memref<8x16x256xbf16, #tpu.memory_space<vmem>>, vector<1x16x32xbf16>,
    %c24 = arith.constant 24 : index
    %c0_78 = arith.constant 0 : index
    %c0_79 = arith.constant 0 : index
    %121 = vector.load %arg1[%c24, %c0_78, %c0_79] : memref<64x16x256xbf16, #tpu.memory_space<vmem>>, vector<8x16x256xbf16>
    %122 = vector.shape_cast %121 : vector<8x16x256xbf16> to vector<128x256xbf16>
    %cst_80 = arith.constant dense<0.000000e+00> : vector<128x32xf32>
    %123 = tpu.matmul %122, %0, %cst_80 {dimension_numbers = #tpu.dot_dimension_numbers<[1], [0], [0], [1], [0, 0, 1, 1], [], []>} : vector<128x256xbf16>, vector<256x32xbf16>, vector<128x32xf32> -> vector<128x32xf32>
    %124 = arith.addf %123, %3 : vector<128x32xf32>
    %cst_81 = arith.constant 0.000000e+00 : f32
    %125 = vector.broadcast %cst_81 : f32 to vector<128x32xf32>
    %126 = arith.maximumf %124, %125 : vector<128x32xf32>
    %127 = arith.truncf %126 : vector<128x32xf32> to vector<128x32xbf16>
    %128 = vector.extract_strided_slice %127 {offsets = [0, 0], sizes = [16, 32], strides = [1, 1]} : vector<128x32xbf16> to vector<16x32xbf16>
    %c3 = arith.constant 3 : index
    %c0_82 = arith.constant 0 : index
    %c0_83 = arith.constant 0 : index
    %129 = vector.load %arg9[%c3, %c0_82, %c0_83] : memref<8x16x256xbf16, #tpu.memory_space<vmem>>, vector<1x16x32xbf16>
    %130 = vector.shape_cast %129 : vector<1x16x32xbf16> to vector<16x32xbf16>
    %131 = vector.shape_cast %128 : vector<16x32xbf16> to vector<1x16x32xbf16>
    tpu.vector_store %arg9[%c3, %c0_82, %c0_83], %131 {strides = array<i32>} : memref<8x16x256xbf16, #tpu.memory_space<vmem>>, vector<1x16x32xbf16>,
    %132 = vector.extract_strided_slice %127 {offsets = [16, 0], sizes = [16, 32], strides = [1, 1]} : vector<128x32xbf16> to vector<16x32xbf16>
    %c3_84 = arith.constant 3 : index
    %c0_85 = arith.constant 0 : index
    %c32_86 = arith.constant 32 : index
    %133 = vector.load %arg9[%c3_84, %c0_85, %c32_86] : memref<8x16x256xbf16, #tpu.memory_space<vmem>>, vector<1x16x32xbf16>
    %134 = vector.shape_cast %133 : vector<1x16x32xbf16> to vector<16x32xbf16>
    %135 = vector.shape_cast %132 : vector<16x32xbf16> to vector<1x16x32xbf16>
    tpu.vector_store %arg9[%c3_84, %c0_85, %c32_86], %135 {strides = array<i32>} : memref<8x16x256xbf16, #tpu.memory_space<vmem>>, vector<1x16x32xbf16>,
    %136 = vector.extract_strided_slice %127 {offsets = [32, 0], sizes = [16, 32], strides = [1, 1]} : vector<128x32xbf16> to vector<16x32xbf16>
    %c3_87 = arith.constant 3 : index
    %c0_88 = arith.constant 0 : index
    %c64_89 = arith.constant 64 : index
    %137 = vector.load %arg9[%c3_87, %c0_88, %c64_89] : memref<8x16x256xbf16, #tpu.memory_space<vmem>>, vector<1x16x32xbf16>
    %138 = vector.shape_cast %137 : vector<1x16x32xbf16> to vector<16x32xbf16>
    %139 = vector.shape_cast %136 : vector<16x32xbf16> to vector<1x16x32xbf16>
    tpu.vector_store %arg9[%c3_87, %c0_88, %c64_89], %139 {strides = array<i32>} : memref<8x16x256xbf16, #tpu.memory_space<vmem>>, vector<1x16x32xbf16>,
    %140 = vector.extract_strided_slice %127 {offsets = [48, 0], sizes = [16, 32], strides = [1, 1]} : vector<128x32xbf16> to vector<16x32xbf16>
    %c3_90 = arith.constant 3 : index
    %c0_91 = arith.constant 0 : index
    %c96_92 = arith.constant 96 : index
    %141 = vector.load %arg9[%c3_90, %c0_91, %c96_92] : memref<8x16x256xbf16, #tpu.memory_space<vmem>>, vector<1x16x32xbf16>
    %142 = vector.shape_cast %141 : vector<1x16x32xbf16> to vector<16x32xbf16>
    %143 = vector.shape_cast %140 : vector<16x32xbf16> to vector<1x16x32xbf16>
    tpu.vector_store %arg9[%c3_90, %c0_91, %c96_92], %143 {strides = array<i32>} : memref<8x16x256xbf16, #tpu.memory_space<vmem>>, vector<1x16x32xbf16>,
    %144 = vector.extract_strided_slice %127 {offsets = [64, 0], sizes = [16, 32], strides = [1, 1]} : vector<128x32xbf16> to vector<16x32xbf16>
    %c3_93 = arith.constant 3 : index
    %c0_94 = arith.constant 0 : index
    %c128_95 = arith.constant 128 : index
    %145 = vector.load %arg9[%c3_93, %c0_94, %c128_95] : memref<8x16x256xbf16, #tpu.memory_space<vmem>>, vector<1x16x32xbf16>
    %146 = vector.shape_cast %145 : vector<1x16x32xbf16> to vector<16x32xbf16>
    %147 = vector.shape_cast %144 : vector<16x32xbf16> to vector<1x16x32xbf16>
    tpu.vector_store %arg9[%c3_93, %c0_94, %c128_95], %147 {strides = array<i32>} : memref<8x16x256xbf16, #tpu.memory_space<vmem>>, vector<1x16x32xbf16>,
    %148 = vector.extract_strided_slice %127 {offsets = [80, 0], sizes = [16, 32], strides = [1, 1]} : vector<128x32xbf16> to vector<16x32xbf16>
    %c3_96 = arith.constant 3 : index
    %c0_97 = arith.constant 0 : index
    %c160_98 = arith.constant 160 : index
    %149 = vector.load %arg9[%c3_96, %c0_97, %c160_98] : memref<8x16x256xbf16, #tpu.memory_space<vmem>>, vector<1x16x32xbf16>
    %150 = vector.shape_cast %149 : vector<1x16x32xbf16> to vector<16x32xbf16>
    %151 = vector.shape_cast %148 : vector<16x32xbf16> to vector<1x16x32xbf16>
    tpu.vector_store %arg9[%c3_96, %c0_97, %c160_98], %151 {strides = array<i32>} : memref<8x16x256xbf16, #tpu.memory_space<vmem>>, vector<1x16x32xbf16>,
    %152 = vector.extract_strided_slice %127 {offsets = [96, 0], sizes = [16, 32], strides = [1, 1]} : vector<128x32xbf16> to vector<16x32xbf16>
    %c3_99 = arith.constant 3 : index
    %c0_100 = arith.constant 0 : index
    %c192_101 = arith.constant 192 : index
    %153 = vector.load %arg9[%c3_99, %c0_100, %c192_101] : memref<8x16x256xbf16, #tpu.memory_space<vmem>>, vector<1x16x32xbf16>
    %154 = vector.shape_cast %153 : vector<1x16x32xbf16> to vector<16x32xbf16>
    %155 = vector.shape_cast %152 : vector<16x32xbf16> to vector<1x16x32xbf16>
    tpu.vector_store %arg9[%c3_99, %c0_100, %c192_101], %155 {strides = array<i32>} : memref<8x16x256xbf16, #tpu.memory_space<vmem>>, vector<1x16x32xbf16>,
    %156 = vector.extract_strided_slice %127 {offsets = [112, 0], sizes = [16, 32], strides = [1, 1]} : vector<128x32xbf16> to vector<16x32xbf16>
    %c3_102 = arith.constant 3 : index
    %c0_103 = arith.constant 0 : index
    %c224_104 = arith.constant 224 : index
    %157 = vector.load %arg9[%c3_102, %c0_103, %c224_104] : memref<8x16x256xbf16, #tpu.memory_space<vmem>>, vector<1x16x32xbf16>
    %158 = vector.shape_cast %157 : vector<1x16x32xbf16> to vector<16x32xbf16>
    %159 = vector.shape_cast %156 : vector<16x32xbf16> to vector<1x16x32xbf16>
    tpu.vector_store %arg9[%c3_102, %c0_103, %c224_104], %159 {strides = array<i32>} : memref<8x16x256xbf16, #tpu.memory_space<vmem>>, vector<1x16x32xbf16>,
    %c32_105 = arith.constant 32 : index
    %c0_106 = arith.constant 0 : index
    %c0_107 = arith.constant 0 : index
    %160 = vector.load %arg1[%c32_105, %c0_106, %c0_107] : memref<64x16x256xbf16, #tpu.memory_space<vmem>>, vector<8x16x256xbf16>
    %161 = vector.shape_cast %160 : vector<8x16x256xbf16> to vector<128x256xbf16>
    %cst_108 = arith.constant dense<0.000000e+00> : vector<128x32xf32>
    %162 = tpu.matmul %161, %0, %cst_108 {dimension_numbers = #tpu.dot_dimension_numbers<[1], [0], [0], [1], [0, 0, 1, 1], [], []>} : vector<128x256xbf16>, vector<256x32xbf16>, vector<128x32xf32> -> vector<128x32xf32>
    %163 = arith.addf %162, %3 : vector<128x32xf32>
    %cst_109 = arith.constant 0.000000e+00 : f32
    %164 = vector.broadcast %cst_109 : f32 to vector<128x32xf32>
    %165 = arith.maximumf %163, %164 : vector<128x32xf32>
    %166 = arith.truncf %165 : vector<128x32xf32> to vector<128x32xbf16>
    %167 = vector.extract_strided_slice %166 {offsets = [0, 0], sizes = [16, 32], strides = [1, 1]} : vector<128x32xbf16> to vector<16x32xbf16>
    %c4 = arith.constant 4 : index
    %c0_110 = arith.constant 0 : index
    %c0_111 = arith.constant 0 : index
    %168 = vector.load %arg9[%c4, %c0_110, %c0_111] : memref<8x16x256xbf16, #tpu.memory_space<vmem>>, vector<1x16x32xbf16>
    %169 = vector.shape_cast %168 : vector<1x16x32xbf16> to vector<16x32xbf16>
    %170 = vector.shape_cast %167 : vector<16x32xbf16> to vector<1x16x32xbf16>
    tpu.vector_store %arg9[%c4, %c0_110, %c0_111], %170 {strides = array<i32>} : memref<8x16x256xbf16, #tpu.memory_space<vmem>>, vector<1x16x32xbf16>,
    %171 = vector.extract_strided_slice %166 {offsets = [16, 0], sizes = [16, 32], strides = [1, 1]} : vector<128x32xbf16> to vector<16x32xbf16>
    %c4_112 = arith.constant 4 : index
    %c0_113 = arith.constant 0 : index
    %c32_114 = arith.constant 32 : index
    %172 = vector.load %arg9[%c4_112, %c0_113, %c32_114] : memref<8x16x256xbf16, #tpu.memory_space<vmem>>, vector<1x16x32xbf16>
    %173 = vector.shape_cast %172 : vector<1x16x32xbf16> to vector<16x32xbf16>
    %174 = vector.shape_cast %171 : vector<16x32xbf16> to vector<1x16x32xbf16>
    tpu.vector_store %arg9[%c4_112, %c0_113, %c32_114], %174 {strides = array<i32>} : memref<8x16x256xbf16, #tpu.memory_space<vmem>>, vector<1x16x32xbf16>,
    %175 = vector.extract_strided_slice %166 {offsets = [32, 0], sizes = [16, 32], strides = [1, 1]} : vector<128x32xbf16> to vector<16x32xbf16>
    %c4_115 = arith.constant 4 : index
    %c0_116 = arith.constant 0 : index
    %c64_117 = arith.constant 64 : index
    %176 = vector.load %arg9[%c4_115, %c0_116, %c64_117] : memref<8x16x256xbf16, #tpu.memory_space<vmem>>, vector<1x16x32xbf16>
    %177 = vector.shape_cast %176 : vector<1x16x32xbf16> to vector<16x32xbf16>
    %178 = vector.shape_cast %175 : vector<16x32xbf16> to vector<1x16x32xbf16>
    tpu.vector_store %arg9[%c4_115, %c0_116, %c64_117], %178 {strides = array<i32>} : memref<8x16x256xbf16, #tpu.memory_space<vmem>>, vector<1x16x32xbf16>,
    %179 = vector.extract_strided_slice %166 {offsets = [48, 0], sizes = [16, 32], strides = [1, 1]} : vector<128x32xbf16> to vector<16x32xbf16>
    %c4_118 = arith.constant 4 : index
    %c0_119 = arith.constant 0 : index
    %c96_120 = arith.constant 96 : index
    %180 = vector.load %arg9[%c4_118, %c0_119, %c96_120] : memref<8x16x256xbf16, #tpu.memory_space<vmem>>, vector<1x16x32xbf16>
    %181 = vector.shape_cast %180 : vector<1x16x32xbf16> to vector<16x32xbf16>
    %182 = vector.shape_cast %179 : vector<16x32xbf16> to vector<1x16x32xbf16>
    tpu.vector_store %arg9[%c4_118, %c0_119, %c96_120], %182 {strides = array<i32>} : memref<8x16x256xbf16, #tpu.memory_space<vmem>>, vector<1x16x32xbf16>,
    %183 = vector.extract_strided_slice %166 {offsets = [64, 0], sizes = [16, 32], strides = [1, 1]} : vector<128x32xbf16> to vector<16x32xbf16>
    %c4_121 = arith.constant 4 : index
    %c0_122 = arith.constant 0 : index
    %c128_123 = arith.constant 128 : index
    %184 = vector.load %arg9[%c4_121, %c0_122, %c128_123] : memref<8x16x256xbf16, #tpu.memory_space<vmem>>, vector<1x16x32xbf16>
    %185 = vector.shape_cast %184 : vector<1x16x32xbf16> to vector<16x32xbf16>
    %186 = vector.shape_cast %183 : vector<16x32xbf16> to vector<1x16x32xbf16>
    tpu.vector_store %arg9[%c4_121, %c0_122, %c128_123], %186 {strides = array<i32>} : memref<8x16x256xbf16, #tpu.memory_space<vmem>>, vector<1x16x32xbf16>,
    %187 = vector.extract_strided_slice %166 {offsets = [80, 0], sizes = [16, 32], strides = [1, 1]} : vector<128x32xbf16> to vector<16x32xbf16>
    %c4_124 = arith.constant 4 : index
    %c0_125 = arith.constant 0 : index
    %c160_126 = arith.constant 160 : index
    %188 = vector.load %arg9[%c4_124, %c0_125, %c160_126] : memref<8x16x256xbf16, #tpu.memory_space<vmem>>, vector<1x16x32xbf16>
    %189 = vector.shape_cast %188 : vector<1x16x32xbf16> to vector<16x32xbf16>
    %190 = vector.shape_cast %187 : vector<16x32xbf16> to vector<1x16x32xbf16>
    tpu.vector_store %arg9[%c4_124, %c0_125, %c160_126], %190 {strides = array<i32>} : memref<8x16x256xbf16, #tpu.memory_space<vmem>>, vector<1x16x32xbf16>,
    %191 = vector.extract_strided_slice %166 {offsets = [96, 0], sizes = [16, 32], strides = [1, 1]} : vector<128x32xbf16> to vector<16x32xbf16>
    %c4_127 = arith.constant 4 : index
    %c0_128 = arith.constant 0 : index
    %c192_129 = arith.constant 192 : index
    %192 = vector.load %arg9[%c4_127, %c0_128, %c192_129] : memref<8x16x256xbf16, #tpu.memory_space<vmem>>, vector<1x16x32xbf16>
    %193 = vector.shape_cast %192 : vector<1x16x32xbf16> to vector<16x32xbf16>
    %194 = vector.shape_cast %191 : vector<16x32xbf16> to vector<1x16x32xbf16>
    tpu.vector_store %arg9[%c4_127, %c0_128, %c192_129], %194 {strides = array<i32>} : memref<8x16x256xbf16, #tpu.memory_space<vmem>>, vector<1x16x32xbf16>,
    %195 = vector.extract_strided_slice %166 {offsets = [112, 0], sizes = [16, 32], strides = [1, 1]} : vector<128x32xbf16> to vector<16x32xbf16>
    %c4_130 = arith.constant 4 : index
    %c0_131 = arith.constant 0 : index
    %c224_132 = arith.constant 224 : index
    %196 = vector.load %arg9[%c4_130, %c0_131, %c224_132] : memref<8x16x256xbf16, #tpu.memory_space<vmem>>, vector<1x16x32xbf16>
    %197 = vector.shape_cast %196 : vector<1x16x32xbf16> to vector<16x32xbf16>
    %198 = vector.shape_cast %195 : vector<16x32xbf16> to vector<1x16x32xbf16>
    tpu.vector_store %arg9[%c4_130, %c0_131, %c224_132], %198 {strides = array<i32>} : memref<8x16x256xbf16, #tpu.memory_space<vmem>>, vector<1x16x32xbf16>,
    %c40 = arith.constant 40 : index
    %c0_133 = arith.constant 0 : index
    %c0_134 = arith.constant 0 : index
    %199 = vector.load %arg1[%c40, %c0_133, %c0_134] : memref<64x16x256xbf16, #tpu.memory_space<vmem>>, vector<8x16x256xbf16>
    %200 = vector.shape_cast %199 : vector<8x16x256xbf16> to vector<128x256xbf16>
    %cst_135 = arith.constant dense<0.000000e+00> : vector<128x32xf32>
    %201 = tpu.matmul %200, %0, %cst_135 {dimension_numbers = #tpu.dot_dimension_numbers<[1], [0], [0], [1], [0, 0, 1, 1], [], []>} : vector<128x256xbf16>, vector<256x32xbf16>, vector<128x32xf32> -> vector<128x32xf32>
    %202 = arith.addf %201, %3 : vector<128x32xf32>
    %cst_136 = arith.constant 0.000000e+00 : f32
    %203 = vector.broadcast %cst_136 : f32 to vector<128x32xf32>
    %204 = arith.maximumf %202, %203 : vector<128x32xf32>
    %205 = arith.truncf %204 : vector<128x32xf32> to vector<128x32xbf16>
    %206 = vector.extract_strided_slice %205 {offsets = [0, 0], sizes = [16, 32], strides = [1, 1]} : vector<128x32xbf16> to vector<16x32xbf16>
    %c5 = arith.constant 5 : index
    %c0_137 = arith.constant 0 : index
    %c0_138 = arith.constant 0 : index
    %207 = vector.load %arg9[%c5, %c0_137, %c0_138] : memref<8x16x256xbf16, #tpu.memory_space<vmem>>, vector<1x16x32xbf16>
    %208 = vector.shape_cast %207 : vector<1x16x32xbf16> to vector<16x32xbf16>
    %209 = vector.shape_cast %206 : vector<16x32xbf16> to vector<1x16x32xbf16>
    tpu.vector_store %arg9[%c5, %c0_137, %c0_138], %209 {strides = array<i32>} : memref<8x16x256xbf16, #tpu.memory_space<vmem>>, vector<1x16x32xbf16>,
    %210 = vector.extract_strided_slice %205 {offsets = [16, 0], sizes = [16, 32], strides = [1, 1]} : vector<128x32xbf16> to vector<16x32xbf16>
    %c5_139 = arith.constant 5 : index
    %c0_140 = arith.constant 0 : index
    %c32_141 = arith.constant 32 : index
    %211 = vector.load %arg9[%c5_139, %c0_140, %c32_141] : memref<8x16x256xbf16, #tpu.memory_space<vmem>>, vector<1x16x32xbf16>
    %212 = vector.shape_cast %211 : vector<1x16x32xbf16> to vector<16x32xbf16>
    %213 = vector.shape_cast %210 : vector<16x32xbf16> to vector<1x16x32xbf16>
    tpu.vector_store %arg9[%c5_139, %c0_140, %c32_141], %213 {strides = array<i32>} : memref<8x16x256xbf16, #tpu.memory_space<vmem>>, vector<1x16x32xbf16>,
    %214 = vector.extract_strided_slice %205 {offsets = [32, 0], sizes = [16, 32], strides = [1, 1]} : vector<128x32xbf16> to vector<16x32xbf16>
    %c5_142 = arith.constant 5 : index
    %c0_143 = arith.constant 0 : index
    %c64_144 = arith.constant 64 : index
    %215 = vector.load %arg9[%c5_142, %c0_143, %c64_144] : memref<8x16x256xbf16, #tpu.memory_space<vmem>>, vector<1x16x32xbf16>
    %216 = vector.shape_cast %215 : vector<1x16x32xbf16> to vector<16x32xbf16>
    %217 = vector.shape_cast %214 : vector<16x32xbf16> to vector<1x16x32xbf16>
    tpu.vector_store %arg9[%c5_142, %c0_143, %c64_144], %217 {strides = array<i32>} : memref<8x16x256xbf16, #tpu.memory_space<vmem>>, vector<1x16x32xbf16>,
    %218 = vector.extract_strided_slice %205 {offsets = [48, 0], sizes = [16, 32], strides = [1, 1]} : vector<128x32xbf16> to vector<16x32xbf16>
    %c5_145 = arith.constant 5 : index
    %c0_146 = arith.constant 0 : index
    %c96_147 = arith.constant 96 : index
    %219 = vector.load %arg9[%c5_145, %c0_146, %c96_147] : memref<8x16x256xbf16, #tpu.memory_space<vmem>>, vector<1x16x32xbf16>
    %220 = vector.shape_cast %219 : vector<1x16x32xbf16> to vector<16x32xbf16>
    %221 = vector.shape_cast %218 : vector<16x32xbf16> to vector<1x16x32xbf16>
    tpu.vector_store %arg9[%c5_145, %c0_146, %c96_147], %221 {strides = array<i32>} : memref<8x16x256xbf16, #tpu.memory_space<vmem>>, vector<1x16x32xbf16>,
    %222 = vector.extract_strided_slice %205 {offsets = [64, 0], sizes = [16, 32], strides = [1, 1]} : vector<128x32xbf16> to vector<16x32xbf16>
    %c5_148 = arith.constant 5 : index
    %c0_149 = arith.constant 0 : index
    %c128_150 = arith.constant 128 : index
    %223 = vector.load %arg9[%c5_148, %c0_149, %c128_150] : memref<8x16x256xbf16, #tpu.memory_space<vmem>>, vector<1x16x32xbf16>
    %224 = vector.shape_cast %223 : vector<1x16x32xbf16> to vector<16x32xbf16>
    %225 = vector.shape_cast %222 : vector<16x32xbf16> to vector<1x16x32xbf16>
    tpu.vector_store %arg9[%c5_148, %c0_149, %c128_150], %225 {strides = array<i32>} : memref<8x16x256xbf16, #tpu.memory_space<vmem>>, vector<1x16x32xbf16>,
    %226 = vector.extract_strided_slice %205 {offsets = [80, 0], sizes = [16, 32], strides = [1, 1]} : vector<128x32xbf16> to vector<16x32xbf16>
    %c5_151 = arith.constant 5 : index
    %c0_152 = arith.constant 0 : index
    %c160_153 = arith.constant 160 : index
    %227 = vector.load %arg9[%c5_151, %c0_152, %c160_153] : memref<8x16x256xbf16, #tpu.memory_space<vmem>>, vector<1x16x32xbf16>
    %228 = vector.shape_cast %227 : vector<1x16x32xbf16> to vector<16x32xbf16>
    %229 = vector.shape_cast %226 : vector<16x32xbf16> to vector<1x16x32xbf16>
    tpu.vector_store %arg9[%c5_151, %c0_152, %c160_153], %229 {strides = array<i32>} : memref<8x16x256xbf16, #tpu.memory_space<vmem>>, vector<1x16x32xbf16>,
    %230 = vector.extract_strided_slice %205 {offsets = [96, 0], sizes = [16, 32], strides = [1, 1]} : vector<128x32xbf16> to vector<16x32xbf16>
    %c5_154 = arith.constant 5 : index
    %c0_155 = arith.constant 0 : index
    %c192_156 = arith.constant 192 : index
    %231 = vector.load %arg9[%c5_154, %c0_155, %c192_156] : memref<8x16x256xbf16, #tpu.memory_space<vmem>>, vector<1x16x32xbf16>
    %232 = vector.shape_cast %231 : vector<1x16x32xbf16> to vector<16x32xbf16>
    %233 = vector.shape_cast %230 : vector<16x32xbf16> to vector<1x16x32xbf16>
    tpu.vector_store %arg9[%c5_154, %c0_155, %c192_156], %233 {strides = array<i32>} : memref<8x16x256xbf16, #tpu.memory_space<vmem>>, vector<1x16x32xbf16>,
    %234 = vector.extract_strided_slice %205 {offsets = [112, 0], sizes = [16, 32], strides = [1, 1]} : vector<128x32xbf16> to vector<16x32xbf16>
    %c5_157 = arith.constant 5 : index
    %c0_158 = arith.constant 0 : index
    %c224_159 = arith.constant 224 : index
    %235 = vector.load %arg9[%c5_157, %c0_158, %c224_159] : memref<8x16x256xbf16, #tpu.memory_space<vmem>>, vector<1x16x32xbf16>
    %236 = vector.shape_cast %235 : vector<1x16x32xbf16> to vector<16x32xbf16>
    %237 = vector.shape_cast %234 : vector<16x32xbf16> to vector<1x16x32xbf16>
    tpu.vector_store %arg9[%c5_157, %c0_158, %c224_159], %237 {strides = array<i32>} : memref<8x16x256xbf16, #tpu.memory_space<vmem>>, vector<1x16x32xbf16>,
    %c48 = arith.constant 48 : index
    %c0_160 = arith.constant 0 : index
    %c0_161 = arith.constant 0 : index
    %238 = vector.load %arg1[%c48, %c0_160, %c0_161] : memref<64x16x256xbf16, #tpu.memory_space<vmem>>, vector<8x16x256xbf16>
    %239 = vector.shape_cast %238 : vector<8x16x256xbf16> to vector<128x256xbf16>
    %cst_162 = arith.constant dense<0.000000e+00> : vector<128x32xf32>
    %240 = tpu.matmul %239, %0, %cst_162 {dimension_numbers = #tpu.dot_dimension_numbers<[1], [0], [0], [1], [0, 0, 1, 1], [], []>} : vector<128x256xbf16>, vector<256x32xbf16>, vector<128x32xf32> -> vector<128x32xf32>
    %241 = arith.addf %240, %3 : vector<128x32xf32>
    %cst_163 = arith.constant 0.000000e+00 : f32
    %242 = vector.broadcast %cst_163 : f32 to vector<128x32xf32>
    %243 = arith.maximumf %241, %242 : vector<128x32xf32>
    %244 = arith.truncf %243 : vector<128x32xf32> to vector<128x32xbf16>
    %245 = vector.extract_strided_slice %244 {offsets = [0, 0], sizes = [16, 32], strides = [1, 1]} : vector<128x32xbf16> to vector<16x32xbf16>
    %c6 = arith.constant 6 : index
    %c0_164 = arith.constant 0 : index
    %c0_165 = arith.constant 0 : index
    %246 = vector.load %arg9[%c6, %c0_164, %c0_165] : memref<8x16x256xbf16, #tpu.memory_space<vmem>>, vector<1x16x32xbf16>
    %247 = vector.shape_cast %246 : vector<1x16x32xbf16> to vector<16x32xbf16>
    %248 = vector.shape_cast %245 : vector<16x32xbf16> to vector<1x16x32xbf16>
    tpu.vector_store %arg9[%c6, %c0_164, %c0_165], %248 {strides = array<i32>} : memref<8x16x256xbf16, #tpu.memory_space<vmem>>, vector<1x16x32xbf16>,
    %249 = vector.extract_strided_slice %244 {offsets = [16, 0], sizes = [16, 32], strides = [1, 1]} : vector<128x32xbf16> to vector<16x32xbf16>
    %c6_166 = arith.constant 6 : index
    %c0_167 = arith.constant 0 : index
    %c32_168 = arith.constant 32 : index
    %250 = vector.load %arg9[%c6_166, %c0_167, %c32_168] : memref<8x16x256xbf16, #tpu.memory_space<vmem>>, vector<1x16x32xbf16>
    %251 = vector.shape_cast %250 : vector<1x16x32xbf16> to vector<16x32xbf16>
    %252 = vector.shape_cast %249 : vector<16x32xbf16> to vector<1x16x32xbf16>
    tpu.vector_store %arg9[%c6_166, %c0_167, %c32_168], %252 {strides = array<i32>} : memref<8x16x256xbf16, #tpu.memory_space<vmem>>, vector<1x16x32xbf16>,
    %253 = vector.extract_strided_slice %244 {offsets = [32, 0], sizes = [16, 32], strides = [1, 1]} : vector<128x32xbf16> to vector<16x32xbf16>
    %c6_169 = arith.constant 6 : index
    %c0_170 = arith.constant 0 : index
    %c64_171 = arith.constant 64 : index
    %254 = vector.load %arg9[%c6_169, %c0_170, %c64_171] : memref<8x16x256xbf16, #tpu.memory_space<vmem>>, vector<1x16x32xbf16>
    %255 = vector.shape_cast %254 : vector<1x16x32xbf16> to vector<16x32xbf16>
    %256 = vector.shape_cast %253 : vector<16x32xbf16> to vector<1x16x32xbf16>
    tpu.vector_store %arg9[%c6_169, %c0_170, %c64_171], %256 {strides = array<i32>} : memref<8x16x256xbf16, #tpu.memory_space<vmem>>, vector<1x16x32xbf16>,
    %257 = vector.extract_strided_slice %244 {offsets = [48, 0], sizes = [16, 32], strides = [1, 1]} : vector<128x32xbf16> to vector<16x32xbf16>
    %c6_172 = arith.constant 6 : index
    %c0_173 = arith.constant 0 : index
    %c96_174 = arith.constant 96 : index
    %258 = vector.load %arg9[%c6_172, %c0_173, %c96_174] : memref<8x16x256xbf16, #tpu.memory_space<vmem>>, vector<1x16x32xbf16>
    %259 = vector.shape_cast %258 : vector<1x16x32xbf16> to vector<16x32xbf16>
    %260 = vector.shape_cast %257 : vector<16x32xbf16> to vector<1x16x32xbf16>
    tpu.vector_store %arg9[%c6_172, %c0_173, %c96_174], %260 {strides = array<i32>} : memref<8x16x256xbf16, #tpu.memory_space<vmem>>, vector<1x16x32xbf16>,
    %261 = vector.extract_strided_slice %244 {offsets = [64, 0], sizes = [16, 32], strides = [1, 1]} : vector<128x32xbf16> to vector<16x32xbf16>
    %c6_175 = arith.constant 6 : index
    %c0_176 = arith.constant 0 : index
    %c128_177 = arith.constant 128 : index
    %262 = vector.load %arg9[%c6_175, %c0_176, %c128_177] : memref<8x16x256xbf16, #tpu.memory_space<vmem>>, vector<1x16x32xbf16>
    %263 = vector.shape_cast %262 : vector<1x16x32xbf16> to vector<16x32xbf16>
    %264 = vector.shape_cast %261 : vector<16x32xbf16> to vector<1x16x32xbf16>
    tpu.vector_store %arg9[%c6_175, %c0_176, %c128_177], %264 {strides = array<i32>} : memref<8x16x256xbf16, #tpu.memory_space<vmem>>, vector<1x16x32xbf16>,
    %265 = vector.extract_strided_slice %244 {offsets = [80, 0], sizes = [16, 32], strides = [1, 1]} : vector<128x32xbf16> to vector<16x32xbf16>
    %c6_178 = arith.constant 6 : index
    %c0_179 = arith.constant 0 : index
    %c160_180 = arith.constant 160 : index
    %266 = vector.load %arg9[%c6_178, %c0_179, %c160_180] : memref<8x16x256xbf16, #tpu.memory_space<vmem>>, vector<1x16x32xbf16>
    %267 = vector.shape_cast %266 : vector<1x16x32xbf16> to vector<16x32xbf16>
    %268 = vector.shape_cast %265 : vector<16x32xbf16> to vector<1x16x32xbf16>
    tpu.vector_store %arg9[%c6_178, %c0_179, %c160_180], %268 {strides = array<i32>} : memref<8x16x256xbf16, #tpu.memory_space<vmem>>, vector<1x16x32xbf16>,
    %269 = vector.extract_strided_slice %244 {offsets = [96, 0], sizes = [16, 32], strides = [1, 1]} : vector<128x32xbf16> to vector<16x32xbf16>
    %c6_181 = arith.constant 6 : index
    %c0_182 = arith.constant 0 : index
    %c192_183 = arith.constant 192 : index
    %270 = vector.load %arg9[%c6_181, %c0_182, %c192_183] : memref<8x16x256xbf16, #tpu.memory_space<vmem>>, vector<1x16x32xbf16>
    %271 = vector.shape_cast %270 : vector<1x16x32xbf16> to vector<16x32xbf16>
    %272 = vector.shape_cast %269 : vector<16x32xbf16> to vector<1x16x32xbf16>
    tpu.vector_store %arg9[%c6_181, %c0_182, %c192_183], %272 {strides = array<i32>} : memref<8x16x256xbf16, #tpu.memory_space<vmem>>, vector<1x16x32xbf16>,
    %273 = vector.extract_strided_slice %244 {offsets = [112, 0], sizes = [16, 32], strides = [1, 1]} : vector<128x32xbf16> to vector<16x32xbf16>
    %c6_184 = arith.constant 6 : index
    %c0_185 = arith.constant 0 : index
    %c224_186 = arith.constant 224 : index
    %274 = vector.load %arg9[%c6_184, %c0_185, %c224_186] : memref<8x16x256xbf16, #tpu.memory_space<vmem>>, vector<1x16x32xbf16>
    %275 = vector.shape_cast %274 : vector<1x16x32xbf16> to vector<16x32xbf16>
    %276 = vector.shape_cast %273 : vector<16x32xbf16> to vector<1x16x32xbf16>
    tpu.vector_store %arg9[%c6_184, %c0_185, %c224_186], %276 {strides = array<i32>} : memref<8x16x256xbf16, #tpu.memory_space<vmem>>, vector<1x16x32xbf16>,
    %c56 = arith.constant 56 : index
    %c0_187 = arith.constant 0 : index
    %c0_188 = arith.constant 0 : index
    %277 = vector.load %arg1[%c56, %c0_187, %c0_188] : memref<64x16x256xbf16, #tpu.memory_space<vmem>>, vector<8x16x256xbf16>
    %278 = vector.shape_cast %277 : vector<8x16x256xbf16> to vector<128x256xbf16>
    %cst_189 = arith.constant dense<0.000000e+00> : vector<128x32xf32>
    %279 = tpu.matmul %278, %0, %cst_189 {dimension_numbers = #tpu.dot_dimension_numbers<[1], [0], [0], [1], [0, 0, 1, 1], [], []>} : vector<128x256xbf16>, vector<256x32xbf16>, vector<128x32xf32> -> vector<128x32xf32>
    %280 = arith.addf %279, %3 : vector<128x32xf32>
    %cst_190 = arith.constant 0.000000e+00 : f32
    %281 = vector.broadcast %cst_190 : f32 to vector<128x32xf32>
    %282 = arith.maximumf %280, %281 : vector<128x32xf32>
    %283 = arith.truncf %282 : vector<128x32xf32> to vector<128x32xbf16>
    %284 = vector.extract_strided_slice %283 {offsets = [0, 0], sizes = [16, 32], strides = [1, 1]} : vector<128x32xbf16> to vector<16x32xbf16>
    %c7 = arith.constant 7 : index
    %c0_191 = arith.constant 0 : index
    %c0_192 = arith.constant 0 : index
    %285 = vector.load %arg9[%c7, %c0_191, %c0_192] : memref<8x16x256xbf16, #tpu.memory_space<vmem>>, vector<1x16x32xbf16>
    %286 = vector.shape_cast %285 : vector<1x16x32xbf16> to vector<16x32xbf16>
    %287 = vector.shape_cast %284 : vector<16x32xbf16> to vector<1x16x32xbf16>
    tpu.vector_store %arg9[%c7, %c0_191, %c0_192], %287 {strides = array<i32>} : memref<8x16x256xbf16, #tpu.memory_space<vmem>>, vector<1x16x32xbf16>,
    %288 = vector.extract_strided_slice %283 {offsets = [16, 0], sizes = [16, 32], strides = [1, 1]} : vector<128x32xbf16> to vector<16x32xbf16>
    %c7_193 = arith.constant 7 : index
    %c0_194 = arith.constant 0 : index
    %c32_195 = arith.constant 32 : index
    %289 = vector.load %arg9[%c7_193, %c0_194, %c32_195] : memref<8x16x256xbf16, #tpu.memory_space<vmem>>, vector<1x16x32xbf16>
    %290 = vector.shape_cast %289 : vector<1x16x32xbf16> to vector<16x32xbf16>
    %291 = vector.shape_cast %288 : vector<16x32xbf16> to vector<1x16x32xbf16>
    tpu.vector_store %arg9[%c7_193, %c0_194, %c32_195], %291 {strides = array<i32>} : memref<8x16x256xbf16, #tpu.memory_space<vmem>>, vector<1x16x32xbf16>,
    %292 = vector.extract_strided_slice %283 {offsets = [32, 0], sizes = [16, 32], strides = [1, 1]} : vector<128x32xbf16> to vector<16x32xbf16>
    %c7_196 = arith.constant 7 : index
    %c0_197 = arith.constant 0 : index
    %c64_198 = arith.constant 64 : index
    %293 = vector.load %arg9[%c7_196, %c0_197, %c64_198] : memref<8x16x256xbf16, #tpu.memory_space<vmem>>, vector<1x16x32xbf16>
    %294 = vector.shape_cast %293 : vector<1x16x32xbf16> to vector<16x32xbf16>
    %295 = vector.shape_cast %292 : vector<16x32xbf16> to vector<1x16x32xbf16>
    tpu.vector_store %arg9[%c7_196, %c0_197, %c64_198], %295 {strides = array<i32>} : memref<8x16x256xbf16, #tpu.memory_space<vmem>>, vector<1x16x32xbf16>,
    %296 = vector.extract_strided_slice %283 {offsets = [48, 0], sizes = [16, 32], strides = [1, 1]} : vector<128x32xbf16> to vector<16x32xbf16>
    %c7_199 = arith.constant 7 : index
    %c0_200 = arith.constant 0 : index
    %c96_201 = arith.constant 96 : index
    %297 = vector.load %arg9[%c7_199, %c0_200, %c96_201] : memref<8x16x256xbf16, #tpu.memory_space<vmem>>, vector<1x16x32xbf16>
    %298 = vector.shape_cast %297 : vector<1x16x32xbf16> to vector<16x32xbf16>
    %299 = vector.shape_cast %296 : vector<16x32xbf16> to vector<1x16x32xbf16>
    tpu.vector_store %arg9[%c7_199, %c0_200, %c96_201], %299 {strides = array<i32>} : memref<8x16x256xbf16, #tpu.memory_space<vmem>>, vector<1x16x32xbf16>,
    %300 = vector.extract_strided_slice %283 {offsets = [64, 0], sizes = [16, 32], strides = [1, 1]} : vector<128x32xbf16> to vector<16x32xbf16>
    %c7_202 = arith.constant 7 : index
    %c0_203 = arith.constant 0 : index
    %c128_204 = arith.constant 128 : index
    %301 = vector.load %arg9[%c7_202, %c0_203, %c128_204] : memref<8x16x256xbf16, #tpu.memory_space<vmem>>, vector<1x16x32xbf16>
    %302 = vector.shape_cast %301 : vector<1x16x32xbf16> to vector<16x32xbf16>
    %303 = vector.shape_cast %300 : vector<16x32xbf16> to vector<1x16x32xbf16>
    tpu.vector_store %arg9[%c7_202, %c0_203, %c128_204], %303 {strides = array<i32>} : memref<8x16x256xbf16, #tpu.memory_space<vmem>>, vector<1x16x32xbf16>,
    %304 = vector.extract_strided_slice %283 {offsets = [80, 0], sizes = [16, 32], strides = [1, 1]} : vector<128x32xbf16> to vector<16x32xbf16>
    %c7_205 = arith.constant 7 : index
    %c0_206 = arith.constant 0 : index
    %c160_207 = arith.constant 160 : index
    %305 = vector.load %arg9[%c7_205, %c0_206, %c160_207] : memref<8x16x256xbf16, #tpu.memory_space<vmem>>, vector<1x16x32xbf16>
    %306 = vector.shape_cast %305 : vector<1x16x32xbf16> to vector<16x32xbf16>
    %307 = vector.shape_cast %304 : vector<16x32xbf16> to vector<1x16x32xbf16>
    tpu.vector_store %arg9[%c7_205, %c0_206, %c160_207], %307 {strides = array<i32>} : memref<8x16x256xbf16, #tpu.memory_space<vmem>>, vector<1x16x32xbf16>,
    %308 = vector.extract_strided_slice %283 {offsets = [96, 0], sizes = [16, 32], strides = [1, 1]} : vector<128x32xbf16> to vector<16x32xbf16>
    %c7_208 = arith.constant 7 : index
    %c0_209 = arith.constant 0 : index
    %c192_210 = arith.constant 192 : index
    %309 = vector.load %arg9[%c7_208, %c0_209, %c192_210] : memref<8x16x256xbf16, #tpu.memory_space<vmem>>, vector<1x16x32xbf16>
    %310 = vector.shape_cast %309 : vector<1x16x32xbf16> to vector<16x32xbf16>
    %311 = vector.shape_cast %308 : vector<16x32xbf16> to vector<1x16x32xbf16>
    tpu.vector_store %arg9[%c7_208, %c0_209, %c192_210], %311 {strides = array<i32>} : memref<8x16x256xbf16, #tpu.memory_space<vmem>>, vector<1x16x32xbf16>,
    %312 = vector.extract_strided_slice %283 {offsets = [112, 0], sizes = [16, 32], strides = [1, 1]} : vector<128x32xbf16> to vector<16x32xbf16>
    %c7_211 = arith.constant 7 : index
    %c0_212 = arith.constant 0 : index
    %c224_213 = arith.constant 224 : index
    %313 = vector.load %arg9[%c7_211, %c0_212, %c224_213] : memref<8x16x256xbf16, #tpu.memory_space<vmem>>, vector<1x16x32xbf16>
    %314 = vector.shape_cast %313 : vector<1x16x32xbf16> to vector<16x32xbf16>
    %315 = vector.shape_cast %312 : vector<16x32xbf16> to vector<1x16x32xbf16>
    tpu.vector_store %arg9[%c7_211, %c0_212, %c224_213], %315 {strides = array<i32>} : memref<8x16x256xbf16, #tpu.memory_space<vmem>>, vector<1x16x32xbf16>,
    %c0_214 = arith.constant 0 : index
    %c0_215 = arith.constant 0 : index
    %316 = vector.load %arg4[%c0_214, %c0_215] : memref<512x64xbf16, #tpu.memory_space<vmem>>, vector<128x64xbf16>
    %c128_216 = arith.constant 128 : index
    %c0_217 = arith.constant 0 : index
    %317 = vector.load %arg4[%c128_216, %c0_217] : memref<512x64xbf16, #tpu.memory_space<vmem>>, vector<128x64xbf16>
    %c256 = arith.constant 256 : index
    %c0_218 = arith.constant 0 : index
    %318 = vector.load %arg4[%c256, %c0_218] : memref<512x64xbf16, #tpu.memory_space<vmem>>, vector<128x64xbf16>
    %c384 = arith.constant 384 : index
    %c0_219 = arith.constant 0 : index
    %319 = vector.load %arg4[%c384, %c0_219] : memref<512x64xbf16, #tpu.memory_space<vmem>>, vector<128x64xbf16>
    %c0_220 = arith.constant 0 : index
    %c0_221 = arith.constant 0 : index
    %320 = vector.load %arg5[%c0_220, %c0_221] : memref<1x64xf32, #tpu.memory_space<vmem>>, vector<1x64xf32>
    %321 = vector.shape_cast %320 : vector<1x64xf32> to vector<1x64xf32>
    %322 = vector.broadcast %321 : vector<1x64xf32> to vector<16x64xf32>
    %c0_222 = arith.constant 0 : index
    %c0_223 = arith.constant 0 : index
    %c0_224 = arith.constant 0 : index
    %323 = vector.load %arg9[%c0_222, %c0_223, %c0_224] : memref<8x16x256xbf16, #tpu.memory_space<vmem>>, vector<1x16x128xbf16>
    %324 = vector.shape_cast %323 : vector<1x16x128xbf16> to vector<16x128xbf16>
    %cst_225 = arith.constant dense<0.000000e+00> : vector<16x64xf32>
    %325 = tpu.matmul %324, %316, %cst_225 {dimension_numbers = #tpu.dot_dimension_numbers<[1], [0], [0], [1], [0, 0, 1, 1], [], []>} : vector<16x128xbf16>, vector<128x64xbf16>, vector<16x64xf32> -> vector<16x64xf32>
    %c1_226 = arith.constant 1 : index
    %c0_227 = arith.constant 0 : index
    %c0_228 = arith.constant 0 : index
    %326 = vector.load %arg9[%c1_226, %c0_227, %c0_228] : memref<8x16x256xbf16, #tpu.memory_space<vmem>>, vector<1x16x128xbf16>
    %327 = vector.shape_cast %326 : vector<1x16x128xbf16> to vector<16x128xbf16>
    %cst_229 = arith.constant dense<0.000000e+00> : vector<16x64xf32>
    %328 = tpu.matmul %327, %317, %cst_229 {dimension_numbers = #tpu.dot_dimension_numbers<[1], [0], [0], [1], [0, 0, 1, 1], [], []>} : vector<16x128xbf16>, vector<128x64xbf16>, vector<16x64xf32> -> vector<16x64xf32>
    %329 = arith.addf %325, %328 : vector<16x64xf32>
    %c2_230 = arith.constant 2 : index
    %c0_231 = arith.constant 0 : index
    %c0_232 = arith.constant 0 : index
    %330 = vector.load %arg9[%c2_230, %c0_231, %c0_232] : memref<8x16x256xbf16, #tpu.memory_space<vmem>>, vector<1x16x128xbf16>
    %331 = vector.shape_cast %330 : vector<1x16x128xbf16> to vector<16x128xbf16>
    %cst_233 = arith.constant dense<0.000000e+00> : vector<16x64xf32>
    %332 = tpu.matmul %331, %318, %cst_233 {dimension_numbers = #tpu.dot_dimension_numbers<[1], [0], [0], [1], [0, 0, 1, 1], [], []>} : vector<16x128xbf16>, vector<128x64xbf16>, vector<16x64xf32> -> vector<16x64xf32>
    %333 = arith.addf %329, %332 : vector<16x64xf32>
    %c3_234 = arith.constant 3 : index
    %c0_235 = arith.constant 0 : index
    %c0_236 = arith.constant 0 : index
    %334 = vector.load %arg9[%c3_234, %c0_235, %c0_236] : memref<8x16x256xbf16, #tpu.memory_space<vmem>>, vector<1x16x128xbf16>
    %335 = vector.shape_cast %334 : vector<1x16x128xbf16> to vector<16x128xbf16>
    %cst_237 = arith.constant dense<0.000000e+00> : vector<16x64xf32>
    %336 = tpu.matmul %335, %319, %cst_237 {dimension_numbers = #tpu.dot_dimension_numbers<[1], [0], [0], [1], [0, 0, 1, 1], [], []>} : vector<16x128xbf16>, vector<128x64xbf16>, vector<16x64xf32> -> vector<16x64xf32>
    %337 = arith.addf %333, %336 : vector<16x64xf32>
    %338 = arith.addf %337, %322 : vector<16x64xf32>
    %cst_238 = arith.constant 0.000000e+00 : f32
    %339 = vector.broadcast %cst_238 : f32 to vector<16x64xf32>
    %340 = arith.maximumf %338, %339 : vector<16x64xf32>
    %341 = arith.truncf %340 : vector<16x64xf32> to vector<16x64xbf16>
    %c0_239 = arith.constant 0 : index
    %c0_240 = arith.constant 0 : index
    %c0_241 = arith.constant 0 : index
    %342 = vector.load %arg10[%c0_239, %c0_240, %c0_241] : memref<3x16x192xbf16, #tpu.memory_space<vmem>>, vector<1x16x64xbf16>
    %343 = vector.shape_cast %342 : vector<1x16x64xbf16> to vector<16x64xbf16>
    %344 = vector.shape_cast %341 : vector<16x64xbf16> to vector<1x16x64xbf16>
    tpu.vector_store %arg10[%c0_239, %c0_240, %c0_241], %344 {strides = array<i32>} : memref<3x16x192xbf16, #tpu.memory_space<vmem>>, vector<1x16x64xbf16>,
    %c0_242 = arith.constant 0 : index
    %c0_243 = arith.constant 0 : index
    %c64_244 = arith.constant 64 : index
    %345 = vector.load %arg9[%c0_242, %c0_243, %c64_244] : memref<8x16x256xbf16, #tpu.memory_space<vmem>>, vector<1x16x128xbf16>
    %346 = vector.shape_cast %345 : vector<1x16x128xbf16> to vector<16x128xbf16>
    %cst_245 = arith.constant dense<0.000000e+00> : vector<16x64xf32>
    %347 = tpu.matmul %346, %316, %cst_245 {dimension_numbers = #tpu.dot_dimension_numbers<[1], [0], [0], [1], [0, 0, 1, 1], [], []>} : vector<16x128xbf16>, vector<128x64xbf16>, vector<16x64xf32> -> vector<16x64xf32>
    %c1_246 = arith.constant 1 : index
    %c0_247 = arith.constant 0 : index
    %c64_248 = arith.constant 64 : index
    %348 = vector.load %arg9[%c1_246, %c0_247, %c64_248] : memref<8x16x256xbf16, #tpu.memory_space<vmem>>, vector<1x16x128xbf16>
    %349 = vector.shape_cast %348 : vector<1x16x128xbf16> to vector<16x128xbf16>
    %cst_249 = arith.constant dense<0.000000e+00> : vector<16x64xf32>
    %350 = tpu.matmul %349, %317, %cst_249 {dimension_numbers = #tpu.dot_dimension_numbers<[1], [0], [0], [1], [0, 0, 1, 1], [], []>} : vector<16x128xbf16>, vector<128x64xbf16>, vector<16x64xf32> -> vector<16x64xf32>
    %351 = arith.addf %347, %350 : vector<16x64xf32>
    %c2_250 = arith.constant 2 : index
    %c0_251 = arith.constant 0 : index
    %c64_252 = arith.constant 64 : index
    %352 = vector.load %arg9[%c2_250, %c0_251, %c64_252] : memref<8x16x256xbf16, #tpu.memory_space<vmem>>, vector<1x16x128xbf16>
    %353 = vector.shape_cast %352 : vector<1x16x128xbf16> to vector<16x128xbf16>
    %cst_253 = arith.constant dense<0.000000e+00> : vector<16x64xf32>
    %354 = tpu.matmul %353, %318, %cst_253 {dimension_numbers = #tpu.dot_dimension_numbers<[1], [0], [0], [1], [0, 0, 1, 1], [], []>} : vector<16x128xbf16>, vector<128x64xbf16>, vector<16x64xf32> -> vector<16x64xf32>
    %355 = arith.addf %351, %354 : vector<16x64xf32>
    %c3_254 = arith.constant 3 : index
    %c0_255 = arith.constant 0 : index
    %c64_256 = arith.constant 64 : index
    %356 = vector.load %arg9[%c3_254, %c0_255, %c64_256] : memref<8x16x256xbf16, #tpu.memory_space<vmem>>, vector<1x16x128xbf16>
    %357 = vector.shape_cast %356 : vector<1x16x128xbf16> to vector<16x128xbf16>
    %cst_257 = arith.constant dense<0.000000e+00> : vector<16x64xf32>
    %358 = tpu.matmul %357, %319, %cst_257 {dimension_numbers = #tpu.dot_dimension_numbers<[1], [0], [0], [1], [0, 0, 1, 1], [], []>} : vector<16x128xbf16>, vector<128x64xbf16>, vector<16x64xf32> -> vector<16x64xf32>
    %359 = arith.addf %355, %358 : vector<16x64xf32>
    %360 = arith.addf %359, %322 : vector<16x64xf32>
    %cst_258 = arith.constant 0.000000e+00 : f32
    %361 = vector.broadcast %cst_258 : f32 to vector<16x64xf32>
    %362 = arith.maximumf %360, %361 : vector<16x64xf32>
    %363 = arith.truncf %362 : vector<16x64xf32> to vector<16x64xbf16>
    %c0_259 = arith.constant 0 : index
    %c0_260 = arith.constant 0 : index
    %c64_261 = arith.constant 64 : index
    %364 = vector.load %arg10[%c0_259, %c0_260, %c64_261] : memref<3x16x192xbf16, #tpu.memory_space<vmem>>, vector<1x16x64xbf16>
    %365 = vector.shape_cast %364 : vector<1x16x64xbf16> to vector<16x64xbf16>
    %366 = vector.shape_cast %363 : vector<16x64xbf16> to vector<1x16x64xbf16>
    tpu.vector_store %arg10[%c0_259, %c0_260, %c64_261], %366 {strides = array<i32>} : memref<3x16x192xbf16, #tpu.memory_space<vmem>>, vector<1x16x64xbf16>,
    %c0_262 = arith.constant 0 : index
    %c0_263 = arith.constant 0 : index
    %c128_264 = arith.constant 128 : index
    %367 = vector.load %arg9[%c0_262, %c0_263, %c128_264] : memref<8x16x256xbf16, #tpu.memory_space<vmem>>, vector<1x16x128xbf16>
    %368 = vector.shape_cast %367 : vector<1x16x128xbf16> to vector<16x128xbf16>
    %cst_265 = arith.constant dense<0.000000e+00> : vector<16x64xf32>
    %369 = tpu.matmul %368, %316, %cst_265 {dimension_numbers = #tpu.dot_dimension_numbers<[1], [0], [0], [1], [0, 0, 1, 1], [], []>} : vector<16x128xbf16>, vector<128x64xbf16>, vector<16x64xf32> -> vector<16x64xf32>
    %c1_266 = arith.constant 1 : index
    %c0_267 = arith.constant 0 : index
    %c128_268 = arith.constant 128 : index
    %370 = vector.load %arg9[%c1_266, %c0_267, %c128_268] : memref<8x16x256xbf16, #tpu.memory_space<vmem>>, vector<1x16x128xbf16>
    %371 = vector.shape_cast %370 : vector<1x16x128xbf16> to vector<16x128xbf16>
    %cst_269 = arith.constant dense<0.000000e+00> : vector<16x64xf32>
    %372 = tpu.matmul %371, %317, %cst_269 {dimension_numbers = #tpu.dot_dimension_numbers<[1], [0], [0], [1], [0, 0, 1, 1], [], []>} : vector<16x128xbf16>, vector<128x64xbf16>, vector<16x64xf32> -> vector<16x64xf32>
    %373 = arith.addf %369, %372 : vector<16x64xf32>
    %c2_270 = arith.constant 2 : index
    %c0_271 = arith.constant 0 : index
    %c128_272 = arith.constant 128 : index
    %374 = vector.load %arg9[%c2_270, %c0_271, %c128_272] : memref<8x16x256xbf16, #tpu.memory_space<vmem>>, vector<1x16x128xbf16>
    %375 = vector.shape_cast %374 : vector<1x16x128xbf16> to vector<16x128xbf16>
    %cst_273 = arith.constant dense<0.000000e+00> : vector<16x64xf32>
    %376 = tpu.matmul %375, %318, %cst_273 {dimension_numbers = #tpu.dot_dimension_numbers<[1], [0], [0], [1], [0, 0, 1, 1], [], []>} : vector<16x128xbf16>, vector<128x64xbf16>, vector<16x64xf32> -> vector<16x64xf32>
    %377 = arith.addf %373, %376 : vector<16x64xf32>
    %c3_274 = arith.constant 3 : index
    %c0_275 = arith.constant 0 : index
    %c128_276 = arith.constant 128 : index
    %378 = vector.load %arg9[%c3_274, %c0_275, %c128_276] : memref<8x16x256xbf16, #tpu.memory_space<vmem>>, vector<1x16x128xbf16>
    %379 = vector.shape_cast %378 : vector<1x16x128xbf16> to vector<16x128xbf16>
    %cst_277 = arith.constant dense<0.000000e+00> : vector<16x64xf32>
    %380 = tpu.matmul %379, %319, %cst_277 {dimension_numbers = #tpu.dot_dimension_numbers<[1], [0], [0], [1], [0, 0, 1, 1], [], []>} : vector<16x128xbf16>, vector<128x64xbf16>, vector<16x64xf32> -> vector<16x64xf32>
    %381 = arith.addf %377, %380 : vector<16x64xf32>
    %382 = arith.addf %381, %322 : vector<16x64xf32>
    %cst_278 = arith.constant 0.000000e+00 : f32
    %383 = vector.broadcast %cst_278 : f32 to vector<16x64xf32>
    %384 = arith.maximumf %382, %383 : vector<16x64xf32>
    %385 = arith.truncf %384 : vector<16x64xf32> to vector<16x64xbf16>
    %c0_279 = arith.constant 0 : index
    %c0_280 = arith.constant 0 : index
    %c128_281 = arith.constant 128 : index
    %386 = vector.load %arg10[%c0_279, %c0_280, %c128_281] : memref<3x16x192xbf16, #tpu.memory_space<vmem>>, vector<1x16x64xbf16>
    %387 = vector.shape_cast %386 : vector<1x16x64xbf16> to vector<16x64xbf16>
    %388 = vector.shape_cast %385 : vector<16x64xbf16> to vector<1x16x64xbf16>
    tpu.vector_store %arg10[%c0_279, %c0_280, %c128_281], %388 {strides = array<i32>} : memref<3x16x192xbf16, #tpu.memory_space<vmem>>, vector<1x16x64xbf16>,
    %c2_282 = arith.constant 2 : index
    %c0_283 = arith.constant 0 : index
    %c0_284 = arith.constant 0 : index
    %389 = vector.load %arg9[%c2_282, %c0_283, %c0_284] : memref<8x16x256xbf16, #tpu.memory_space<vmem>>, vector<1x16x128xbf16>
    %390 = vector.shape_cast %389 : vector<1x16x128xbf16> to vector<16x128xbf16>
    %cst_285 = arith.constant dense<0.000000e+00> : vector<16x64xf32>
    %391 = tpu.matmul %390, %316, %cst_285 {dimension_numbers = #tpu.dot_dimension_numbers<[1], [0], [0], [1], [0, 0, 1, 1], [], []>} : vector<16x128xbf16>, vector<128x64xbf16>, vector<16x64xf32> -> vector<16x64xf32>
    %c3_286 = arith.constant 3 : index
    %c0_287 = arith.constant 0 : index
    %c0_288 = arith.constant 0 : index
    %392 = vector.load %arg9[%c3_286, %c0_287, %c0_288] : memref<8x16x256xbf16, #tpu.memory_space<vmem>>, vector<1x16x128xbf16>
    %393 = vector.shape_cast %392 : vector<1x16x128xbf16> to vector<16x128xbf16>
    %cst_289 = arith.constant dense<0.000000e+00> : vector<16x64xf32>
    %394 = tpu.matmul %393, %317, %cst_289 {dimension_numbers = #tpu.dot_dimension_numbers<[1], [0], [0], [1], [0, 0, 1, 1], [], []>} : vector<16x128xbf16>, vector<128x64xbf16>, vector<16x64xf32> -> vector<16x64xf32>
    %395 = arith.addf %391, %394 : vector<16x64xf32>
    %c4_290 = arith.constant 4 : index
    %c0_291 = arith.constant 0 : index
    %c0_292 = arith.constant 0 : index
    %396 = vector.load %arg9[%c4_290, %c0_291, %c0_292] : memref<8x16x256xbf16, #tpu.memory_space<vmem>>, vector<1x16x128xbf16>
    %397 = vector.shape_cast %396 : vector<1x16x128xbf16> to vector<16x128xbf16>
    %cst_293 = arith.constant dense<0.000000e+00> : vector<16x64xf32>
    %398 = tpu.matmul %397, %318, %cst_293 {dimension_numbers = #tpu.dot_dimension_numbers<[1], [0], [0], [1], [0, 0, 1, 1], [], []>} : vector<16x128xbf16>, vector<128x64xbf16>, vector<16x64xf32> -> vector<16x64xf32>
    %399 = arith.addf %395, %398 : vector<16x64xf32>
    %c5_294 = arith.constant 5 : index
    %c0_295 = arith.constant 0 : index
    %c0_296 = arith.constant 0 : index
    %400 = vector.load %arg9[%c5_294, %c0_295, %c0_296] : memref<8x16x256xbf16, #tpu.memory_space<vmem>>, vector<1x16x128xbf16>
    %401 = vector.shape_cast %400 : vector<1x16x128xbf16> to vector<16x128xbf16>
    %cst_297 = arith.constant dense<0.000000e+00> : vector<16x64xf32>
    %402 = tpu.matmul %401, %319, %cst_297 {dimension_numbers = #tpu.dot_dimension_numbers<[1], [0], [0], [1], [0, 0, 1, 1], [], []>} : vector<16x128xbf16>, vector<128x64xbf16>, vector<16x64xf32> -> vector<16x64xf32>
    %403 = arith.addf %399, %402 : vector<16x64xf32>
    %404 = arith.addf %403, %322 : vector<16x64xf32>
    %cst_298 = arith.constant 0.000000e+00 : f32
    %405 = vector.broadcast %cst_298 : f32 to vector<16x64xf32>
    %406 = arith.maximumf %404, %405 : vector<16x64xf32>
    %407 = arith.truncf %406 : vector<16x64xf32> to vector<16x64xbf16>
    %c1_299 = arith.constant 1 : index
    %c0_300 = arith.constant 0 : index
    %c0_301 = arith.constant 0 : index
    %408 = vector.load %arg10[%c1_299, %c0_300, %c0_301] : memref<3x16x192xbf16, #tpu.memory_space<vmem>>, vector<1x16x64xbf16>
    %409 = vector.shape_cast %408 : vector<1x16x64xbf16> to vector<16x64xbf16>
    %410 = vector.shape_cast %407 : vector<16x64xbf16> to vector<1x16x64xbf16>
    tpu.vector_store %arg10[%c1_299, %c0_300, %c0_301], %410 {strides = array<i32>} : memref<3x16x192xbf16, #tpu.memory_space<vmem>>, vector<1x16x64xbf16>,
    %c2_302 = arith.constant 2 : index
    %c0_303 = arith.constant 0 : index
    %c64_304 = arith.constant 64 : index
    %411 = vector.load %arg9[%c2_302, %c0_303, %c64_304] : memref<8x16x256xbf16, #tpu.memory_space<vmem>>, vector<1x16x128xbf16>
    %412 = vector.shape_cast %411 : vector<1x16x128xbf16> to vector<16x128xbf16>
    %cst_305 = arith.constant dense<0.000000e+00> : vector<16x64xf32>
    %413 = tpu.matmul %412, %316, %cst_305 {dimension_numbers = #tpu.dot_dimension_numbers<[1], [0], [0], [1], [0, 0, 1, 1], [], []>} : vector<16x128xbf16>, vector<128x64xbf16>, vector<16x64xf32> -> vector<16x64xf32>
    %c3_306 = arith.constant 3 : index
    %c0_307 = arith.constant 0 : index
    %c64_308 = arith.constant 64 : index
    %414 = vector.load %arg9[%c3_306, %c0_307, %c64_308] : memref<8x16x256xbf16, #tpu.memory_space<vmem>>, vector<1x16x128xbf16>
    %415 = vector.shape_cast %414 : vector<1x16x128xbf16> to vector<16x128xbf16>
    %cst_309 = arith.constant dense<0.000000e+00> : vector<16x64xf32>
    %416 = tpu.matmul %415, %317, %cst_309 {dimension_numbers = #tpu.dot_dimension_numbers<[1], [0], [0], [1], [0, 0, 1, 1], [], []>} : vector<16x128xbf16>, vector<128x64xbf16>, vector<16x64xf32> -> vector<16x64xf32>
    %417 = arith.addf %413, %416 : vector<16x64xf32>
    %c4_310 = arith.constant 4 : index
    %c0_311 = arith.constant 0 : index
    %c64_312 = arith.constant 64 : index
    %418 = vector.load %arg9[%c4_310, %c0_311, %c64_312] : memref<8x16x256xbf16, #tpu.memory_space<vmem>>, vector<1x16x128xbf16>
    %419 = vector.shape_cast %418 : vector<1x16x128xbf16> to vector<16x128xbf16>
    %cst_313 = arith.constant dense<0.000000e+00> : vector<16x64xf32>
    %420 = tpu.matmul %419, %318, %cst_313 {dimension_numbers = #tpu.dot_dimension_numbers<[1], [0], [0], [1], [0, 0, 1, 1], [], []>} : vector<16x128xbf16>, vector<128x64xbf16>, vector<16x64xf32> -> vector<16x64xf32>
    %421 = arith.addf %417, %420 : vector<16x64xf32>
    %c5_314 = arith.constant 5 : index
    %c0_315 = arith.constant 0 : index
    %c64_316 = arith.constant 64 : index
    %422 = vector.load %arg9[%c5_314, %c0_315, %c64_316] : memref<8x16x256xbf16, #tpu.memory_space<vmem>>, vector<1x16x128xbf16>
    %423 = vector.shape_cast %422 : vector<1x16x128xbf16> to vector<16x128xbf16>
    %cst_317 = arith.constant dense<0.000000e+00> : vector<16x64xf32>
    %424 = tpu.matmul %423, %319, %cst_317 {dimension_numbers = #tpu.dot_dimension_numbers<[1], [0], [0], [1], [0, 0, 1, 1], [], []>} : vector<16x128xbf16>, vector<128x64xbf16>, vector<16x64xf32> -> vector<16x64xf32>
    %425 = arith.addf %421, %424 : vector<16x64xf32>
    %426 = arith.addf %425, %322 : vector<16x64xf32>
    %cst_318 = arith.constant 0.000000e+00 : f32
    %427 = vector.broadcast %cst_318 : f32 to vector<16x64xf32>
    %428 = arith.maximumf %426, %427 : vector<16x64xf32>
    %429 = arith.truncf %428 : vector<16x64xf32> to vector<16x64xbf16>
    %c1_319 = arith.constant 1 : index
    %c0_320 = arith.constant 0 : index
    %c64_321 = arith.constant 64 : index
    %430 = vector.load %arg10[%c1_319, %c0_320, %c64_321] : memref<3x16x192xbf16, #tpu.memory_space<vmem>>, vector<1x16x64xbf16>
    %431 = vector.shape_cast %430 : vector<1x16x64xbf16> to vector<16x64xbf16>
    %432 = vector.shape_cast %429 : vector<16x64xbf16> to vector<1x16x64xbf16>
    tpu.vector_store %arg10[%c1_319, %c0_320, %c64_321], %432 {strides = array<i32>} : memref<3x16x192xbf16, #tpu.memory_space<vmem>>, vector<1x16x64xbf16>,
    %c2_322 = arith.constant 2 : index
    %c0_323 = arith.constant 0 : index
    %c128_324 = arith.constant 128 : index
    %433 = vector.load %arg9[%c2_322, %c0_323, %c128_324] : memref<8x16x256xbf16, #tpu.memory_space<vmem>>, vector<1x16x128xbf16>
    %434 = vector.shape_cast %433 : vector<1x16x128xbf16> to vector<16x128xbf16>
    %cst_325 = arith.constant dense<0.000000e+00> : vector<16x64xf32>
    %435 = tpu.matmul %434, %316, %cst_325 {dimension_numbers = #tpu.dot_dimension_numbers<[1], [0], [0], [1], [0, 0, 1, 1], [], []>} : vector<16x128xbf16>, vector<128x64xbf16>, vector<16x64xf32> -> vector<16x64xf32>
    %c3_326 = arith.constant 3 : index
    %c0_327 = arith.constant 0 : index
    %c128_328 = arith.constant 128 : index
    %436 = vector.load %arg9[%c3_326, %c0_327, %c128_328] : memref<8x16x256xbf16, #tpu.memory_space<vmem>>, vector<1x16x128xbf16>
    %437 = vector.shape_cast %436 : vector<1x16x128xbf16> to vector<16x128xbf16>
    %cst_329 = arith.constant dense<0.000000e+00> : vector<16x64xf32>
    %438 = tpu.matmul %437, %317, %cst_329 {dimension_numbers = #tpu.dot_dimension_numbers<[1], [0], [0], [1], [0, 0, 1, 1], [], []>} : vector<16x128xbf16>, vector<128x64xbf16>, vector<16x64xf32> -> vector<16x64xf32>
    %439 = arith.addf %435, %438 : vector<16x64xf32>
    %c4_330 = arith.constant 4 : index
    %c0_331 = arith.constant 0 : index
    %c128_332 = arith.constant 128 : index
    %440 = vector.load %arg9[%c4_330, %c0_331, %c128_332] : memref<8x16x256xbf16, #tpu.memory_space<vmem>>, vector<1x16x128xbf16>
    %441 = vector.shape_cast %440 : vector<1x16x128xbf16> to vector<16x128xbf16>
    %cst_333 = arith.constant dense<0.000000e+00> : vector<16x64xf32>
    %442 = tpu.matmul %441, %318, %cst_333 {dimension_numbers = #tpu.dot_dimension_numbers<[1], [0], [0], [1], [0, 0, 1, 1], [], []>} : vector<16x128xbf16>, vector<128x64xbf16>, vector<16x64xf32> -> vector<16x64xf32>
    %443 = arith.addf %439, %442 : vector<16x64xf32>
    %c5_334 = arith.constant 5 : index
    %c0_335 = arith.constant 0 : index
    %c128_336 = arith.constant 128 : index
    %444 = vector.load %arg9[%c5_334, %c0_335, %c128_336] : memref<8x16x256xbf16, #tpu.memory_space<vmem>>, vector<1x16x128xbf16>
    %445 = vector.shape_cast %444 : vector<1x16x128xbf16> to vector<16x128xbf16>
    %cst_337 = arith.constant dense<0.000000e+00> : vector<16x64xf32>
    %446 = tpu.matmul %445, %319, %cst_337 {dimension_numbers = #tpu.dot_dimension_numbers<[1], [0], [0], [1], [0, 0, 1, 1], [], []>} : vector<16x128xbf16>, vector<128x64xbf16>, vector<16x64xf32> -> vector<16x64xf32>
    %447 = arith.addf %443, %446 : vector<16x64xf32>
    %448 = arith.addf %447, %322 : vector<16x64xf32>
    %cst_338 = arith.constant 0.000000e+00 : f32
    %449 = vector.broadcast %cst_338 : f32 to vector<16x64xf32>
    %450 = arith.maximumf %448, %449 : vector<16x64xf32>
    %451 = arith.truncf %450 : vector<16x64xf32> to vector<16x64xbf16>
    %c1_339 = arith.constant 1 : index
    %c0_340 = arith.constant 0 : index
    %c128_341 = arith.constant 128 : index
    %452 = vector.load %arg10[%c1_339, %c0_340, %c128_341] : memref<3x16x192xbf16, #tpu.memory_space<vmem>>, vector<1x16x64xbf16>
    %453 = vector.shape_cast %452 : vector<1x16x64xbf16> to vector<16x64xbf16>
    %454 = vector.shape_cast %451 : vector<16x64xbf16> to vector<1x16x64xbf16>
    tpu.vector_store %arg10[%c1_339, %c0_340, %c128_341], %454 {strides = array<i32>} : memref<3x16x192xbf16, #tpu.memory_space<vmem>>, vector<1x16x64xbf16>,
    %c4_342 = arith.constant 4 : index
    %c0_343 = arith.constant 0 : index
    %c0_344 = arith.constant 0 : index
    %455 = vector.load %arg9[%c4_342, %c0_343, %c0_344] : memref<8x16x256xbf16, #tpu.memory_space<vmem>>, vector<1x16x128xbf16>
    %456 = vector.shape_cast %455 : vector<1x16x128xbf16> to vector<16x128xbf16>
    %cst_345 = arith.constant dense<0.000000e+00> : vector<16x64xf32>
    %457 = tpu.matmul %456, %316, %cst_345 {dimension_numbers = #tpu.dot_dimension_numbers<[1], [0], [0], [1], [0, 0, 1, 1], [], []>} : vector<16x128xbf16>, vector<128x64xbf16>, vector<16x64xf32> -> vector<16x64xf32>
    %c5_346 = arith.constant 5 : index
    %c0_347 = arith.constant 0 : index
    %c0_348 = arith.constant 0 : index
    %458 = vector.load %arg9[%c5_346, %c0_347, %c0_348] : memref<8x16x256xbf16, #tpu.memory_space<vmem>>, vector<1x16x128xbf16>
    %459 = vector.shape_cast %458 : vector<1x16x128xbf16> to vector<16x128xbf16>
    %cst_349 = arith.constant dense<0.000000e+00> : vector<16x64xf32>
    %460 = tpu.matmul %459, %317, %cst_349 {dimension_numbers = #tpu.dot_dimension_numbers<[1], [0], [0], [1], [0, 0, 1, 1], [], []>} : vector<16x128xbf16>, vector<128x64xbf16>, vector<16x64xf32> -> vector<16x64xf32>
    %461 = arith.addf %457, %460 : vector<16x64xf32>
    %c6_350 = arith.constant 6 : index
    %c0_351 = arith.constant 0 : index
    %c0_352 = arith.constant 0 : index
    %462 = vector.load %arg9[%c6_350, %c0_351, %c0_352] : memref<8x16x256xbf16, #tpu.memory_space<vmem>>, vector<1x16x128xbf16>
    %463 = vector.shape_cast %462 : vector<1x16x128xbf16> to vector<16x128xbf16>
    %cst_353 = arith.constant dense<0.000000e+00> : vector<16x64xf32>
    %464 = tpu.matmul %463, %318, %cst_353 {dimension_numbers = #tpu.dot_dimension_numbers<[1], [0], [0], [1], [0, 0, 1, 1], [], []>} : vector<16x128xbf16>, vector<128x64xbf16>, vector<16x64xf32> -> vector<16x64xf32>
    %465 = arith.addf %461, %464 : vector<16x64xf32>
    %c7_354 = arith.constant 7 : index
    %c0_355 = arith.constant 0 : index
    %c0_356 = arith.constant 0 : index
    %466 = vector.load %arg9[%c7_354, %c0_355, %c0_356] : memref<8x16x256xbf16, #tpu.memory_space<vmem>>, vector<1x16x128xbf16>
    %467 = vector.shape_cast %466 : vector<1x16x128xbf16> to vector<16x128xbf16>
    %cst_357 = arith.constant dense<0.000000e+00> : vector<16x64xf32>
    %468 = tpu.matmul %467, %319, %cst_357 {dimension_numbers = #tpu.dot_dimension_numbers<[1], [0], [0], [1], [0, 0, 1, 1], [], []>} : vector<16x128xbf16>, vector<128x64xbf16>, vector<16x64xf32> -> vector<16x64xf32>
    %469 = arith.addf %465, %468 : vector<16x64xf32>
    %470 = arith.addf %469, %322 : vector<16x64xf32>
    %cst_358 = arith.constant 0.000000e+00 : f32
    %471 = vector.broadcast %cst_358 : f32 to vector<16x64xf32>
    %472 = arith.maximumf %470, %471 : vector<16x64xf32>
    %473 = arith.truncf %472 : vector<16x64xf32> to vector<16x64xbf16>
    %c2_359 = arith.constant 2 : index
    %c0_360 = arith.constant 0 : index
    %c0_361 = arith.constant 0 : index
    %474 = vector.load %arg10[%c2_359, %c0_360, %c0_361] : memref<3x16x192xbf16, #tpu.memory_space<vmem>>, vector<1x16x64xbf16>
    %475 = vector.shape_cast %474 : vector<1x16x64xbf16> to vector<16x64xbf16>
    %476 = vector.shape_cast %473 : vector<16x64xbf16> to vector<1x16x64xbf16>
    tpu.vector_store %arg10[%c2_359, %c0_360, %c0_361], %476 {strides = array<i32>} : memref<3x16x192xbf16, #tpu.memory_space<vmem>>, vector<1x16x64xbf16>,
    %c4_362 = arith.constant 4 : index
    %c0_363 = arith.constant 0 : index
    %c64_364 = arith.constant 64 : index
    %477 = vector.load %arg9[%c4_362, %c0_363, %c64_364] : memref<8x16x256xbf16, #tpu.memory_space<vmem>>, vector<1x16x128xbf16>
    %478 = vector.shape_cast %477 : vector<1x16x128xbf16> to vector<16x128xbf16>
    %cst_365 = arith.constant dense<0.000000e+00> : vector<16x64xf32>
    %479 = tpu.matmul %478, %316, %cst_365 {dimension_numbers = #tpu.dot_dimension_numbers<[1], [0], [0], [1], [0, 0, 1, 1], [], []>} : vector<16x128xbf16>, vector<128x64xbf16>, vector<16x64xf32> -> vector<16x64xf32>
    %c5_366 = arith.constant 5 : index
    %c0_367 = arith.constant 0 : index
    %c64_368 = arith.constant 64 : index
    %480 = vector.load %arg9[%c5_366, %c0_367, %c64_368] : memref<8x16x256xbf16, #tpu.memory_space<vmem>>, vector<1x16x128xbf16>
    %481 = vector.shape_cast %480 : vector<1x16x128xbf16> to vector<16x128xbf16>
    %cst_369 = arith.constant dense<0.000000e+00> : vector<16x64xf32>
    %482 = tpu.matmul %481, %317, %cst_369 {dimension_numbers = #tpu.dot_dimension_numbers<[1], [0], [0], [1], [0, 0, 1, 1], [], []>} : vector<16x128xbf16>, vector<128x64xbf16>, vector<16x64xf32> -> vector<16x64xf32>
    %483 = arith.addf %479, %482 : vector<16x64xf32>
    %c6_370 = arith.constant 6 : index
    %c0_371 = arith.constant 0 : index
    %c64_372 = arith.constant 64 : index
    %484 = vector.load %arg9[%c6_370, %c0_371, %c64_372] : memref<8x16x256xbf16, #tpu.memory_space<vmem>>, vector<1x16x128xbf16>
    %485 = vector.shape_cast %484 : vector<1x16x128xbf16> to vector<16x128xbf16>
    %cst_373 = arith.constant dense<0.000000e+00> : vector<16x64xf32>
    %486 = tpu.matmul %485, %318, %cst_373 {dimension_numbers = #tpu.dot_dimension_numbers<[1], [0], [0], [1], [0, 0, 1, 1], [], []>} : vector<16x128xbf16>, vector<128x64xbf16>, vector<16x64xf32> -> vector<16x64xf32>
    %487 = arith.addf %483, %486 : vector<16x64xf32>
    %c7_374 = arith.constant 7 : index
    %c0_375 = arith.constant 0 : index
    %c64_376 = arith.constant 64 : index
    %488 = vector.load %arg9[%c7_374, %c0_375, %c64_376] : memref<8x16x256xbf16, #tpu.memory_space<vmem>>, vector<1x16x128xbf16>
    %489 = vector.shape_cast %488 : vector<1x16x128xbf16> to vector<16x128xbf16>
    %cst_377 = arith.constant dense<0.000000e+00> : vector<16x64xf32>
    %490 = tpu.matmul %489, %319, %cst_377 {dimension_numbers = #tpu.dot_dimension_numbers<[1], [0], [0], [1], [0, 0, 1, 1], [], []>} : vector<16x128xbf16>, vector<128x64xbf16>, vector<16x64xf32> -> vector<16x64xf32>
    %491 = arith.addf %487, %490 : vector<16x64xf32>
    %492 = arith.addf %491, %322 : vector<16x64xf32>
    %cst_378 = arith.constant 0.000000e+00 : f32
    %493 = vector.broadcast %cst_378 : f32 to vector<16x64xf32>
    %494 = arith.maximumf %492, %493 : vector<16x64xf32>
    %495 = arith.truncf %494 : vector<16x64xf32> to vector<16x64xbf16>
    %c2_379 = arith.constant 2 : index
    %c0_380 = arith.constant 0 : index
    %c64_381 = arith.constant 64 : index
    %496 = vector.load %arg10[%c2_379, %c0_380, %c64_381] : memref<3x16x192xbf16, #tpu.memory_space<vmem>>, vector<1x16x64xbf16>
    %497 = vector.shape_cast %496 : vector<1x16x64xbf16> to vector<16x64xbf16>
    %498 = vector.shape_cast %495 : vector<16x64xbf16> to vector<1x16x64xbf16>
    tpu.vector_store %arg10[%c2_379, %c0_380, %c64_381], %498 {strides = array<i32>} : memref<3x16x192xbf16, #tpu.memory_space<vmem>>, vector<1x16x64xbf16>,
    %c4_382 = arith.constant 4 : index
    %c0_383 = arith.constant 0 : index
    %c128_384 = arith.constant 128 : index
    %499 = vector.load %arg9[%c4_382, %c0_383, %c128_384] : memref<8x16x256xbf16, #tpu.memory_space<vmem>>, vector<1x16x128xbf16>
    %500 = vector.shape_cast %499 : vector<1x16x128xbf16> to vector<16x128xbf16>
    %cst_385 = arith.constant dense<0.000000e+00> : vector<16x64xf32>
    %501 = tpu.matmul %500, %316, %cst_385 {dimension_numbers = #tpu.dot_dimension_numbers<[1], [0], [0], [1], [0, 0, 1, 1], [], []>} : vector<16x128xbf16>, vector<128x64xbf16>, vector<16x64xf32> -> vector<16x64xf32>
    %c5_386 = arith.constant 5 : index
    %c0_387 = arith.constant 0 : index
    %c128_388 = arith.constant 128 : index
    %502 = vector.load %arg9[%c5_386, %c0_387, %c128_388] : memref<8x16x256xbf16, #tpu.memory_space<vmem>>, vector<1x16x128xbf16>
    %503 = vector.shape_cast %502 : vector<1x16x128xbf16> to vector<16x128xbf16>
    %cst_389 = arith.constant dense<0.000000e+00> : vector<16x64xf32>
    %504 = tpu.matmul %503, %317, %cst_389 {dimension_numbers = #tpu.dot_dimension_numbers<[1], [0], [0], [1], [0, 0, 1, 1], [], []>} : vector<16x128xbf16>, vector<128x64xbf16>, vector<16x64xf32> -> vector<16x64xf32>
    %505 = arith.addf %501, %504 : vector<16x64xf32>
    %c6_390 = arith.constant 6 : index
    %c0_391 = arith.constant 0 : index
    %c128_392 = arith.constant 128 : index
    %506 = vector.load %arg9[%c6_390, %c0_391, %c128_392] : memref<8x16x256xbf16, #tpu.memory_space<vmem>>, vector<1x16x128xbf16>
    %507 = vector.shape_cast %506 : vector<1x16x128xbf16> to vector<16x128xbf16>
    %cst_393 = arith.constant dense<0.000000e+00> : vector<16x64xf32>
    %508 = tpu.matmul %507, %318, %cst_393 {dimension_numbers = #tpu.dot_dimension_numbers<[1], [0], [0], [1], [0, 0, 1, 1], [], []>} : vector<16x128xbf16>, vector<128x64xbf16>, vector<16x64xf32> -> vector<16x64xf32>
    %509 = arith.addf %505, %508 : vector<16x64xf32>
    %c7_394 = arith.constant 7 : index
    %c0_395 = arith.constant 0 : index
    %c128_396 = arith.constant 128 : index
    %510 = vector.load %arg9[%c7_394, %c0_395, %c128_396] : memref<8x16x256xbf16, #tpu.memory_space<vmem>>, vector<1x16x128xbf16>
    %511 = vector.shape_cast %510 : vector<1x16x128xbf16> to vector<16x128xbf16>
    %cst_397 = arith.constant dense<0.000000e+00> : vector<16x64xf32>
    %512 = tpu.matmul %511, %319, %cst_397 {dimension_numbers = #tpu.dot_dimension_numbers<[1], [0], [0], [1], [0, 0, 1, 1], [], []>} : vector<16x128xbf16>, vector<128x64xbf16>, vector<16x64xf32> -> vector<16x64xf32>
    %513 = arith.addf %509, %512 : vector<16x64xf32>
    %514 = arith.addf %513, %322 : vector<16x64xf32>
    %cst_398 = arith.constant 0.000000e+00 : f32
    %515 = vector.broadcast %cst_398 : f32 to vector<16x64xf32>
    %516 = arith.maximumf %514, %515 : vector<16x64xf32>
    %517 = arith.truncf %516 : vector<16x64xf32> to vector<16x64xbf16>
    %c2_399 = arith.constant 2 : index
    %c0_400 = arith.constant 0 : index
    %c128_401 = arith.constant 128 : index
    %518 = vector.load %arg10[%c2_399, %c0_400, %c128_401] : memref<3x16x192xbf16, #tpu.memory_space<vmem>>, vector<1x16x64xbf16>
    %519 = vector.shape_cast %518 : vector<1x16x64xbf16> to vector<16x64xbf16>
    %520 = vector.shape_cast %517 : vector<16x64xbf16> to vector<1x16x64xbf16>
    tpu.vector_store %arg10[%c2_399, %c0_400, %c128_401], %520 {strides = array<i32>} : memref<3x16x192xbf16, #tpu.memory_space<vmem>>, vector<1x16x64xbf16>,
    %c0_402 = arith.constant 0 : index
    %c0_403 = arith.constant 0 : index
    %521 = vector.load %arg6[%c0_402, %c0_403] : memref<576x64xbf16, #tpu.memory_space<vmem>>, vector<192x64xbf16>
    %c192_404 = arith.constant 192 : index
    %c0_405 = arith.constant 0 : index
    %522 = vector.load %arg6[%c192_404, %c0_405] : memref<576x64xbf16, #tpu.memory_space<vmem>>, vector<192x64xbf16>
    %c384_406 = arith.constant 384 : index
    %c0_407 = arith.constant 0 : index
    %523 = vector.load %arg6[%c384_406, %c0_407] : memref<576x64xbf16, #tpu.memory_space<vmem>>, vector<192x64xbf16>
    %c0_408 = arith.constant 0 : index
    %c0_409 = arith.constant 0 : index
    %524 = vector.load %arg7[%c0_408, %c0_409] : memref<1x64xf32, #tpu.memory_space<vmem>>, vector<1x64xf32>
    %525 = vector.shape_cast %524 : vector<1x64xf32> to vector<1x64xf32>
    %526 = vector.broadcast %525 : vector<1x64xf32> to vector<16x64xf32>
    %c0_410 = arith.constant 0 : index
    %c0_411 = arith.constant 0 : index
    %c0_412 = arith.constant 0 : index
    %527 = vector.load %arg10[%c0_410, %c0_411, %c0_412] : memref<3x16x192xbf16, #tpu.memory_space<vmem>>, vector<1x16x192xbf16>
    %528 = vector.shape_cast %527 : vector<1x16x192xbf16> to vector<16x192xbf16>
    %cst_413 = arith.constant dense<0.000000e+00> : vector<16x64xf32>
    %529 = tpu.matmul %528, %521, %cst_413 {dimension_numbers = #tpu.dot_dimension_numbers<[1], [0], [0], [1], [0, 0, 1, 1], [], []>} : vector<16x192xbf16>, vector<192x64xbf16>, vector<16x64xf32> -> vector<16x64xf32>
    %c1_414 = arith.constant 1 : index
    %c0_415 = arith.constant 0 : index
    %c0_416 = arith.constant 0 : index
    %530 = vector.load %arg10[%c1_414, %c0_415, %c0_416] : memref<3x16x192xbf16, #tpu.memory_space<vmem>>, vector<1x16x192xbf16>
    %531 = vector.shape_cast %530 : vector<1x16x192xbf16> to vector<16x192xbf16>
    %cst_417 = arith.constant dense<0.000000e+00> : vector<16x64xf32>
    %532 = tpu.matmul %531, %522, %cst_417 {dimension_numbers = #tpu.dot_dimension_numbers<[1], [0], [0], [1], [0, 0, 1, 1], [], []>} : vector<16x192xbf16>, vector<192x64xbf16>, vector<16x64xf32> -> vector<16x64xf32>
    %533 = arith.addf %529, %532 : vector<16x64xf32>
    %c2_418 = arith.constant 2 : index
    %c0_419 = arith.constant 0 : index
    %c0_420 = arith.constant 0 : index
    %534 = vector.load %arg10[%c2_418, %c0_419, %c0_420] : memref<3x16x192xbf16, #tpu.memory_space<vmem>>, vector<1x16x192xbf16>
    %535 = vector.shape_cast %534 : vector<1x16x192xbf16> to vector<16x192xbf16>
    %cst_421 = arith.constant dense<0.000000e+00> : vector<16x64xf32>
    %536 = tpu.matmul %535, %523, %cst_421 {dimension_numbers = #tpu.dot_dimension_numbers<[1], [0], [0], [1], [0, 0, 1, 1], [], []>} : vector<16x192xbf16>, vector<192x64xbf16>, vector<16x64xf32> -> vector<16x64xf32>
    %537 = arith.addf %533, %536 : vector<16x64xf32>
    %538 = arith.addf %537, %526 : vector<16x64xf32>
    %cst_422 = arith.constant 0.000000e+00 : f32
    %539 = vector.broadcast %cst_422 : f32 to vector<16x64xf32>
    %540 = arith.maximumf %538, %539 : vector<16x64xf32>
    %c0_423 = arith.constant 0 : index
    %c0_424 = arith.constant 0 : index
    %541 = vector.load %arg8[%c0_423, %c0_424] : memref<16x64xf32, #tpu.memory_space<vmem>>, vector<16x64xf32>
    tpu.vector_store %arg8[%c0_423, %c0_424], %540 {strides = array<i32>} : memref<16x64xf32, #tpu.memory_space<vmem>>, vector<16x64xf32>,
    return
  }
  func.func @transform_0(%arg0: i32) -> (i32, i32, i32) {
    %c0_i32 = arith.constant 0 : i32
    %c0_i32_0 = arith.constant 0 : i32
    %c0_i32_1 = arith.constant 0 : i32
    return %c0_i32, %arg0, %c0_i32_0 : i32, i32, i32
  }
  func.func @transform_1(%arg0: i32) -> (i32, i32) {
    %c0_i32 = arith.constant 0 : i32
    %c0_i32_0 = arith.constant 0 : i32
    %c0_i32_1 = arith.constant 0 : i32
    return %c0_i32, %c0_i32_0 : i32, i32
  }
  func.func @transform_2(%arg0: i32) -> (i32, i32) {
    %c0_i32 = arith.constant 0 : i32
    %c0_i32_0 = arith.constant 0 : i32
    %c0_i32_1 = arith.constant 0 : i32
    return %c0_i32, %c0_i32_0 : i32, i32
  }
  func.func @transform_3(%arg0: i32) -> (i32, i32) {
    %c0_i32 = arith.constant 0 : i32
    %c0_i32_0 = arith.constant 0 : i32
    %c0_i32_1 = arith.constant 0 : i32
    return %c0_i32, %c0_i32_0 : i32, i32
  }
  func.func @transform_4(%arg0: i32) -> (i32, i32) {
    %c0_i32 = arith.constant 0 : i32
    %c0_i32_0 = arith.constant 0 : i32
    %c0_i32_1 = arith.constant 0 : i32
    return %c0_i32, %c0_i32_0 : i32, i32
  }
  func.func @transform_5(%arg0: i32) -> (i32, i32) {
    %c0_i32 = arith.constant 0 : i32
    %c0_i32_0 = arith.constant 0 : i32
    %c0_i32_1 = arith.constant 0 : i32
    return %c0_i32, %c0_i32_0 : i32, i32
  }
  func.func @transform_6(%arg0: i32) -> (i32, i32) {
    %c0_i32 = arith.constant 0 : i32
    %c0_i32_0 = arith.constant 0 : i32
    %c0_i32_1 = arith.constant 0 : i32
    return %c0_i32, %c0_i32_0 : i32, i32
  }
  func.func @transform_7(%arg0: i32) -> (i32, i32) {
    %c0_i32 = arith.constant 0 : i32
    %c0_i32_0 = arith.constant 0 : i32
    return %arg0, %c0_i32 : i32, i32
  }
}

</mosaic_0001>

<llo_original>
// kernel: dqn_base_forward.1
$region0: #{dqn_base_forward.1}
  #allocation0 [shape = 'u32[]', space=smem, size = 0x4, offset = 0x4, fixed_abs, tag = 'smem constant byte address 0x4 - core index']
  #allocation1 [shape = 'u32[144,128]{1,0:T(1,128)}', space=vmem, size = 0x12000, scoped, tag = 'internal scratch']
  #allocation2 [shape = 'bf16[8,16,256]{2,1,0:T(16,128)(2,1)}', space=vmem, size = 0x10000, scoped, tag = 'scratch operand']
  #allocation3 [shape = 'bf16[3,16,192]{2,1,0:T(16,128)(2,1)}', space=vmem, size = 0x6000, scoped, tag = 'scratch operand']
  %s0 = inlined_call_operand.vmem [shape: bf16[64,16,256], index: 0, kind: input, shape index: {}]
  %s1 = inlined_call_operand.vmem [shape: bf16[256,32], index: 1, kind: input, shape index: {}]
  %s2 = inlined_call_operand.vmem [shape: f32[1,32], index: 2, kind: input, shape index: {}]
  %s3 = inlined_call_operand.vmem [shape: bf16[512,64], index: 3, kind: input, shape index: {}]
  %s4 = inlined_call_operand.vmem [shape: f32[1,64], index: 4, kind: input, shape index: {}, may-alias: {4,6}]
  %s5 = inlined_call_operand.vmem [shape: bf16[576,64], index: 5, kind: input, shape index: {}]
  %s6 = inlined_call_operand.vmem [shape: f32[1,64], index: 6, kind: input, shape index: {}, may-alias: {4,6}]
  %s7 = inlined_call_operand.vmem [shape: f32[16,64], index: 7, kind: output, shape index: {}]
  %s8 = sld [smem:[#allocation0]]
  $region38: #{dqn_base_forward.1} parent=0
    _
  %s10 = ssub.s32 1, %s8
  %s11 = scalar_select 0, %s10, %s8
  // Predicated region
  $region2: #{dqn_base_forward.1} parent=0 // pred_check
    _
  $region3: #{dqn_base_forward.1} parent=0 // pred_check_branch
    %13 = sbr.rel (0) target = $region5
  $region4: #{dqn_base_forward.1} parent=0 // pred_region
    _
  $region5: #{dqn_base_forward.1} parent=0 // pred_fallthru
    _
  // Predicated region
  $region6: #{dqn_base_forward.1} parent=0 // pred_check
    _
  $region7: #{dqn_base_forward.1} parent=0 // pred_check_branch
    %15 = sbr.rel (0) target = $region9
  $region8: #{dqn_base_forward.1} parent=0 // pred_region
    _
  $region9: #{dqn_base_forward.1} parent=0 // pred_fallthru
    _
  // Predicated region
  $region10: #{dqn_base_forward.1} parent=0 // pred_check
    _
  $region11: #{dqn_base_forward.1} parent=0 // pred_check_branch
    %17 = sbr.rel (0) target = $region13
  $region12: #{dqn_base_forward.1} parent=0 // pred_region
    _
  $region13: #{dqn_base_forward.1} parent=0 // pred_fallthru
    _
  // Predicated region
  $region14: #{dqn_base_forward.1} parent=0 // pred_check
    _
  $region15: #{dqn_base_forward.1} parent=0 // pred_check_branch
    %19 = sbr.rel (0) target = $region17
  $region16: #{dqn_base_forward.1} parent=0 // pred_region
    _
  $region17: #{dqn_base_forward.1} parent=0 // pred_fallthru
    _
  // Predicated region
  $region18: #{dqn_base_forward.1} parent=0 // pred_check
    _
  $region19: #{dqn_base_forward.1} parent=0 // pred_check_branch
    %21 = sbr.rel (0) target = $region21
  $region20: #{dqn_base_forward.1} parent=0 // pred_region
    _
  $region21: #{dqn_base_forward.1} parent=0 // pred_fallthru
    _
  // Predicated region
  $region22: #{dqn_base_forward.1} parent=0 // pred_check
    _
  $region23: #{dqn_base_forward.1} parent=0 // pred_check_branch
    %23 = sbr.rel (0) target = $region25
  $region24: #{dqn_base_forward.1} parent=0 // pred_region
    _
  $region25: #{dqn_base_forward.1} parent=0 // pred_fallthru
    _
  // Predicated region
  $region26: #{dqn_base_forward.1} parent=0 // pred_check
    _
  $region27: #{dqn_base_forward.1} parent=0 // pred_check_branch
    %25 = sbr.rel (0) target = $region29
  $region28: #{dqn_base_forward.1} parent=0 // pred_region
    _
  $region29: #{dqn_base_forward.1} parent=0 // pred_fallthru
    _
  %v27 = vld [vmem:[%s1] sm:$0xf]
  %v28 = vld [vmem:[%s1 + $0x4] sm:$0xf]
  %v29 = vld [vmem:[%s1 + $0x8] sm:$0xf]
  %v30 = vld [vmem:[%s1 + $0xc] sm:$0xf]
  %v31 = vld [vmem:[%s1 + $0x10] sm:$0xf]
  %v32 = vld [vmem:[%s1 + $0x14] sm:$0xf]
  %v33 = vld [vmem:[%s1 + $0x18] sm:$0xf]
  %v34 = vld [vmem:[%s1 + $0x1c] sm:$0xf]
  %v35 = vld [vmem:[%s1 + $0x20] sm:$0xf]
  %v36 = vld [vmem:[%s1 + $0x24] sm:$0xf]
  %v37 = vld [vmem:[%s1 + $0x28] sm:$0xf]
  %v38 = vld [vmem:[%s1 + $0x2c] sm:$0xf]
  %v39 = vld [vmem:[%s1 + $0x30] sm:$0xf]
  %v40 = vld [vmem:[%s1 + $0x34] sm:$0xf]
  %v41 = vld [vmem:[%s1 + $0x38] sm:$0xf]
  %v42 = vld [vmem:[%s1 + $0x3c] sm:$0xf]
  %v43 = vld [vmem:[%s1 + $0x40] sm:$0xf]
  %v44 = vld [vmem:[%s1 + $0x44] sm:$0xf]
  %v45 = vld [vmem:[%s1 + $0x48] sm:$0xf]
  %v46 = vld [vmem:[%s1 + $0x4c] sm:$0xf]
  %v47 = vld [vmem:[%s1 + $0x50] sm:$0xf]
  %v48 = vld [vmem:[%s1 + $0x54] sm:$0xf]
  %v49 = vld [vmem:[%s1 + $0x58] sm:$0xf]
  %v50 = vld [vmem:[%s1 + $0x5c] sm:$0xf]
  %v51 = vld [vmem:[%s1 + $0x60] sm:$0xf]
  %v52 = vld [vmem:[%s1 + $0x64] sm:$0xf]
  %v53 = vld [vmem:[%s1 + $0x68] sm:$0xf]
  %v54 = vld [vmem:[%s1 + $0x6c] sm:$0xf]
  %v55 = vld [vmem:[%s1 + $0x70] sm:$0xf]
  %v56 = vld [vmem:[%s1 + $0x74] sm:$0xf]
  %v57 = vld [vmem:[%s1 + $0x78] sm:$0xf]
  %v58 = vld [vmem:[%s1 + $0x7c] sm:$0xf]
  %v59 = vld [vmem:[%s2] sm:$0x1]
  %v61 = vlaneseq
  %v62 = vshrl.u32 %v61, 7
  %v63 = vsub.s32 0, %v62
  %v64 = vrot.slane %v59, %v63
  %v66 = vld [vmem:[%s0] sm:$0xff]
  %v67 = vld [vmem:[%s0 + $0x8] sm:$0xff]
  %v68 = vld [vmem:[%s0 + $0x10] sm:$0xff]
  %v69 = vld [vmem:[%s0 + $0x18] sm:$0xff]
  %v70 = vld [vmem:[%s0 + $0x20] sm:$0xff]
  %v71 = vld [vmem:[%s0 + $0x28] sm:$0xff]
  %v72 = vld [vmem:[%s0 + $0x30] sm:$0xff]
  %v73 = vld [vmem:[%s0 + $0x38] sm:$0xff]
  %v74 = vld [vmem:[%s0 + $0x40] sm:$0xff]
  %v75 = vld [vmem:[%s0 + $0x48] sm:$0xff]
  %v76 = vld [vmem:[%s0 + $0x50] sm:$0xff]
  %v77 = vld [vmem:[%s0 + $0x58] sm:$0xff]
  %v78 = vld [vmem:[%s0 + $0x60] sm:$0xff]
  %v79 = vld [vmem:[%s0 + $0x68] sm:$0xff]
  %v80 = vld [vmem:[%s0 + $0x70] sm:$0xff]
  %v81 = vld [vmem:[%s0 + $0x78] sm:$0xff]
  %v98 = vunpack.c.l.b16 %v66
  %v99 = vunpack.c.h.b16 %v66
  %v100 = vunpack.c.l.b16 %v67
  %v101 = vunpack.c.h.b16 %v67
  %v102 = vunpack.c.l.b16 %v68
  %v103 = vunpack.c.h.b16 %v68
  %v104 = vunpack.c.l.b16 %v69
  %v105 = vunpack.c.h.b16 %v69
  %v106 = vunpack.c.l.b16 %v70
  %v107 = vunpack.c.h.b16 %v70
  %v108 = vunpack.c.l.b16 %v71
  %v109 = vunpack.c.h.b16 %v71
  %v110 = vunpack.c.l.b16 %v72
  %v111 = vunpack.c.h.b16 %v72
  %v112 = vunpack.c.l.b16 %v73
  %v113 = vunpack.c.h.b16 %v73
  %v114 = vunpack.c.l.b16 %v74
  %v115 = vunpack.c.h.b16 %v74
  %v116 = vunpack.c.l.b16 %v75
  %v117 = vunpack.c.h.b16 %v75
  %v118 = vunpack.c.l.b16 %v76
  %v119 = vunpack.c.h.b16 %v76
  %v120 = vunpack.c.l.b16 %v77
  %v121 = vunpack.c.h.b16 %v77
  %v122 = vunpack.c.l.b16 %v78
  %v123 = vunpack.c.h.b16 %v78
  %v124 = vunpack.c.l.b16 %v79
  %v125 = vunpack.c.h.b16 %v79
  %v126 = vunpack.c.l.b16 %v80
  %v127 = vunpack.c.h.b16 %v80
  %v128 = vunpack.c.l.b16 %v81
  %v129 = vunpack.c.h.b16 %v81
  %v130 = vpack.c.b16 %v100, %v98
  %v131 = vpack.c.b16 %v101, %v99
  %v132 = vpack.c.b16 %v104, %v102
  %v133 = vpack.c.b16 %v105, %v103
  %v134 = vpack.c.b16 %v108, %v106
  %v135 = vpack.c.b16 %v109, %v107
  %v136 = vpack.c.b16 %v112, %v110
  %v137 = vpack.c.b16 %v113, %v111
  %v138 = vpack.c.b16 %v116, %v114
  %v139 = vpack.c.b16 %v117, %v115
  %v140 = vpack.c.b16 %v120, %v118
  %v141 = vpack.c.b16 %v121, %v119
  %v142 = vpack.c.b16 %v124, %v122
  %v143 = vpack.c.b16 %v125, %v123
  %v144 = vpack.c.b16 %v128, %v126
  %v145 = vpack.c.b16 %v129, %v127
  %v194 = vunpack.c.l.b16 %v27
  %v195 = vunpack.c.l.b16 %v28
  %v196 = vunpack.c.l.b16 %v29
  %v197 = vunpack.c.l.b16 %v30
  %v198 = vunpack.c.l.b16 %v31
  %v199 = vunpack.c.l.b16 %v32
  %v200 = vunpack.c.l.b16 %v33
  %v201 = vunpack.c.l.b16 %v34
  %v202 = vunpack.c.l.b16 %v35
  %v203 = vunpack.c.l.b16 %v36
  %v204 = vunpack.c.l.b16 %v37
  %v205 = vunpack.c.l.b16 %v38
  %v206 = vunpack.c.l.b16 %v39
  %v207 = vunpack.c.l.b16 %v40
  %v208 = vunpack.c.l.b16 %v41
  %v209 = vunpack.c.l.b16 %v42
  %v210 = vunpack.c.l.b16 %v43
  %v211 = vunpack.c.l.b16 %v44
  %v212 = vunpack.c.l.b16 %v45
  %v213 = vunpack.c.l.b16 %v46
  %v214 = vunpack.c.l.b16 %v47
  %v215 = vunpack.c.l.b16 %v48
  %v216 = vunpack.c.l.b16 %v49
  %v217 = vunpack.c.l.b16 %v50
  %v218 = vunpack.c.l.b16 %v51
  %v219 = vunpack.c.l.b16 %v52
  %v220 = vunpack.c.l.b16 %v53
  %v221 = vunpack.c.l.b16 %v54
  %v222 = vunpack.c.l.b16 %v55
  %v223 = vunpack.c.l.b16 %v56
  %v224 = vunpack.c.l.b16 %v57
  %v225 = vunpack.c.l.b16 %v58
  %v226 = vpack.c.b16 %v195, %v194
  %v227 = vpack.c.b16 %v197, %v196
  %v228 = vpack.c.b16 %v199, %v198
  %v229 = vpack.c.b16 %v201, %v200
  %v230 = vpack.c.b16 %v203, %v202
  %v231 = vpack.c.b16 %v205, %v204
  %v232 = vpack.c.b16 %v207, %v206
  %v233 = vpack.c.b16 %v209, %v208
  %v234 = vpack.c.b16 %v211, %v210
  %v235 = vpack.c.b16 %v213, %v212
  %v236 = vpack.c.b16 %v215, %v214
  %v237 = vpack.c.b16 %v217, %v216
  %v238 = vpack.c.b16 %v219, %v218
  %v239 = vpack.c.b16 %v221, %v220
  %v240 = vpack.c.b16 %v223, %v222
  %v241 = vpack.c.b16 %v225, %v224
  %258 = vmatprep.subr.bf16.mxu0 0
  %259 = vmatpush1.bf16.msra.mxu0 %v226
  %260 = vmatprep.subr.bf16.mxu0 0
  %261 = vmatpush1.bf16.msra.mxu0 %v227
  %262 = vmatprep.subr.bf16.mxu0 0
  %263 = vmatpush1.bf16.msra.mxu0 %v228
  %264 = vmatprep.subr.bf16.mxu0 0
  %265 = vmatpush1.bf16.msra.mxu0 %v229
  %266 = vmatprep.subr.bf16.mxu0 0
  %267 = vmatpush1.bf16.msra.mxu0 %v230
  %268 = vmatprep.subr.bf16.mxu0 0
  %269 = vmatpush1.bf16.msra.mxu0 %v231
  %270 = vmatprep.subr.bf16.mxu0 0
  %271 = vmatpush1.bf16.msra.mxu0 %v232
  %272 = vmatprep.subr.bf16.mxu0 0
  %273 = vmatpush1.bf16.msra.mxu0 %v233
  %274 = vmatprep.subr.bf16.mxu0 0
  %275 = vmatpush1.bf16.msra.mxu0 %v234
  %276 = vmatprep.subr.bf16.mxu0 0
  %277 = vmatpush1.bf16.msra.mxu0 %v235
  %278 = vmatprep.subr.bf16.mxu0 0
  %279 = vmatpush1.bf16.msra.mxu0 %v236
  %280 = vmatprep.subr.bf16.mxu0 0
  %281 = vmatpush1.bf16.msra.mxu0 %v237
  %282 = vmatprep.subr.bf16.mxu0 0
  %283 = vmatpush1.bf16.msra.mxu0 %v238
  %284 = vmatprep.subr.bf16.mxu0 0
  %285 = vmatpush1.bf16.msra.mxu0 %v239
  %286 = vmatprep.subr.bf16.mxu0 0
  %287 = vmatpush1.bf16.msra.mxu0 %v240
  %288 = vmatprep.subr.bf16.mxu0 0
  %289 = vmatpush1.bf16.msra.mxu0 %v241
  %290 = vmatprep.mubr.bf16.mxu0 %v131
  %291 = vmatmul.mubr.bf16.gmra.mrb[0].mxu0 %v130
  %v292 = vpop.f32.mrb[0].mxu0
  %v293 = vadd.f32 %v64, %v292
  %v294 = vpop.f32.mrb[0].mxu0
  %v295 = vpop.f32.mrb[0].mxu0
  %v296 = vadd.f32 %v64, %v295
  %v297 = vpop.f32.mrb[0].mxu0
  %298 = vmatprep.mubr.bf16.mxu0 %v133
  %299 = vmatmul.mubr.bf16.gmra.mrb[0].mxu0 %v132
  %v300 = vpop.f32.mrb[0].mxu0
  %v301 = vadd.f32 %v64, %v300
  %v302 = vpop.f32.mrb[0].mxu0
  %v303 = vpop.f32.mrb[0].mxu0
  %v304 = vadd.f32 %v64, %v303
  %v305 = vpop.f32.mrb[0].mxu0
  %306 = vmatprep.mubr.bf16.mxu0 %v135
  %307 = vmatmul.mubr.bf16.gmra.mrb[0].mxu0 %v134
  %v308 = vpop.f32.mrb[0].mxu0
  %v309 = vadd.f32 %v64, %v308
  %v310 = vpop.f32.mrb[0].mxu0
  %v311 = vpop.f32.mrb[0].mxu0
  %v312 = vadd.f32 %v64, %v311
  %v313 = vpop.f32.mrb[0].mxu0
  %314 = vmatprep.mubr.bf16.mxu0 %v137
  %315 = vmatmul.mubr.bf16.gmra.mrb[0].mxu0 %v136
  %v316 = vpop.f32.mrb[0].mxu0
  %v317 = vadd.f32 %v64, %v316
  %v318 = vpop.f32.mrb[0].mxu0
  %v319 = vpop.f32.mrb[0].mxu0
  %v320 = vadd.f32 %v64, %v319
  %v321 = vpop.f32.mrb[0].mxu0
  %322 = vmatprep.mubr.bf16.mxu0 %v139
  %323 = vmatmul.mubr.bf16.gmra.mrb[0].mxu0 %v138
  %v324 = vpop.f32.mrb[0].mxu0
  %v325 = vadd.f32 %v64, %v324
  %v326 = vpop.f32.mrb[0].mxu0
  %v327 = vpop.f32.mrb[0].mxu0
  %v328 = vadd.f32 %v64, %v327
  %v329 = vpop.f32.mrb[0].mxu0
  %330 = vmatprep.mubr.bf16.mxu0 %v141
  %331 = vmatmul.mubr.bf16.gmra.mrb[0].mxu0 %v140
  %v332 = vpop.f32.mrb[0].mxu0
  %v333 = vadd.f32 %v64, %v332
  %v334 = vpop.f32.mrb[0].mxu0
  %v335 = vpop.f32.mrb[0].mxu0
  %v336 = vadd.f32 %v64, %v335
  %v337 = vpop.f32.mrb[0].mxu0
  %338 = vmatprep.mubr.bf16.mxu0 %v143
  %339 = vmatmul.mubr.bf16.gmra.mrb[0].mxu0 %v142
  %v340 = vpop.f32.mrb[0].mxu0
  %v341 = vadd.f32 %v64, %v340
  %v342 = vpop.f32.mrb[0].mxu0
  %v343 = vpop.f32.mrb[0].mxu0
  %v344 = vadd.f32 %v64, %v343
  %v345 = vpop.f32.mrb[0].mxu0
  %346 = vmatprep.mubr.bf16.mxu0 %v145
  %347 = vmatmul.mubr.bf16.gmra.mrb[0].mxu0 %v144
  %v348 = vpop.f32.mrb[0].mxu0
  %v349 = vadd.f32 %v64, %v348
  %v350 = vpop.f32.mrb[0].mxu0
  %v351 = vpop.f32.mrb[0].mxu0
  %v352 = vadd.f32 %v64, %v351
  %v353 = vpop.f32.mrb[0].mxu0
  %354 = vdwg.mxu0
  %v355 = vmax.f32 %v293, 0.0
  %v356 = vmax.f32 %v296, 0.0
  %v357 = vmax.f32 %v301, 0.0
  %v358 = vmax.f32 %v304, 0.0
  %v359 = vmax.f32 %v309, 0.0
  %v360 = vmax.f32 %v312, 0.0
  %v361 = vmax.f32 %v317, 0.0
  %v362 = vmax.f32 %v320, 0.0
  %v363 = vmax.f32 %v325, 0.0
  %v364 = vmax.f32 %v328, 0.0
  %v365 = vmax.f32 %v333, 0.0
  %v366 = vmax.f32 %v336, 0.0
  %v367 = vmax.f32 %v341, 0.0
  %v368 = vmax.f32 %v344, 0.0
  %v369 = vmax.f32 %v349, 0.0
  %v370 = vmax.f32 %v352, 0.0
  %v371 = vpack.c.bf16 %v356, %v355
  %v372 = vpack.c.bf16 %v358, %v357
  %v373 = vpack.c.bf16 %v360, %v359
  %v374 = vpack.c.bf16 %v362, %v361
  %v375 = vpack.c.bf16 %v364, %v363
  %v376 = vpack.c.bf16 %v366, %v365
  %v377 = vpack.c.bf16 %v368, %v367
  %v378 = vpack.c.bf16 %v370, %v369
  %vm379 = vcmask 261120
  %380 = vst.msk [vmem:[#allocation2] sm:$0xff] %vm379, %v371
  %382 = vrot.lane.b32.xlu0 %v372, 32
  %v383 = vpop.permute.xlu0 %382
  %vm385 = vcmask 523520
  %386 = vst.msk [vmem:[#allocation2] sm:$0xff] %vm385, %v383
  %388 = vrot.lane.b32.xlu0 %v373, 64
  %v389 = vpop.permute.xlu0 %388
  %vm391 = vcmask 785920
  %392 = vst.msk [vmem:[#allocation2] sm:$0xff] %vm391, %v389
  %394 = vrot.lane.b32.xlu0 %v374, 96
  %v395 = vpop.permute.xlu0 %394
  %vm397 = vcmask 1048320
  %398 = vst.msk [vmem:[#allocation2] sm:$0xff] %vm397, %v395
  %399 = vst.msk [vmem:[#allocation2 + $0x8] sm:$0xff] %vm379, %v375
  %401 = vrot.lane.b32.xlu0 %v376, 32
  %v402 = vpop.permute.xlu0 %401
  %404 = vst.msk [vmem:[#allocation2 + $0x8] sm:$0xff] %vm385, %v402
  %406 = vrot.lane.b32.xlu0 %v377, 64
  %v407 = vpop.permute.xlu0 %406
  %409 = vst.msk [vmem:[#allocation2 + $0x8] sm:$0xff] %vm391, %v407
  %411 = vrot.lane.b32.xlu0 %v378, 96
  %v412 = vpop.permute.xlu0 %411
  %414 = vst.msk [vmem:[#allocation2 + $0x8] sm:$0xff] %vm397, %v412
  %s415 = scalar_lea.vmem %s0, 128
  %v416 = vld [vmem:[%s415] sm:$0xff]
  %v417 = vld [vmem:[%s415 + $0x8] sm:$0xff]
  %v418 = vld [vmem:[%s415 + $0x10] sm:$0xff]
  %v419 = vld [vmem:[%s415 + $0x18] sm:$0xff]
  %v420 = vld [vmem:[%s415 + $0x20] sm:$0xff]
  %v421 = vld [vmem:[%s415 + $0x28] sm:$0xff]
  %v422 = vld [vmem:[%s415 + $0x30] sm:$0xff]
  %v423 = vld [vmem:[%s415 + $0x38] sm:$0xff]
  %v424 = vld [vmem:[%s415 + $0x40] sm:$0xff]
  %v425 = vld [vmem:[%s415 + $0x48] sm:$0xff]
  %v426 = vld [vmem:[%s415 + $0x50] sm:$0xff]
  %v427 = vld [vmem:[%s415 + $0x58] sm:$0xff]
  %v428 = vld [vmem:[%s415 + $0x60] sm:$0xff]
  %v429 = vld [vmem:[%s415 + $0x68] sm:$0xff]
  %v430 = vld [vmem:[%s415 + $0x70] sm:$0xff]
  %v431 = vld [vmem:[%s415 + $0x78] sm:$0xff]
  %v448 = vunpack.c.l.b16 %v416
  %v449 = vunpack.c.h.b16 %v416
  %v450 = vunpack.c.l.b16 %v417
  %v451 = vunpack.c.h.b16 %v417
  %v452 = vunpack.c.l.b16 %v418
  %v453 = vunpack.c.h.b16 %v418
  %v454 = vunpack.c.l.b16 %v419
  %v455 = vunpack.c.h.b16 %v419
  %v456 = vunpack.c.l.b16 %v420
  %v457 = vunpack.c.h.b16 %v420
  %v458 = vunpack.c.l.b16 %v421
  %v459 = vunpack.c.h.b16 %v421
  %v460 = vunpack.c.l.b16 %v422
  %v461 = vunpack.c.h.b16 %v422
  %v462 = vunpack.c.l.b16 %v423
  %v463 = vunpack.c.h.b16 %v423
  %v464 = vunpack.c.l.b16 %v424
  %v465 = vunpack.c.h.b16 %v424
  %v466 = vunpack.c.l.b16 %v425
  %v467 = vunpack.c.h.b16 %v425
  %v468 = vunpack.c.l.b16 %v426
  %v469 = vunpack.c.h.b16 %v426
  %v470 = vunpack.c.l.b16 %v427
  %v471 = vunpack.c.h.b16 %v427
  %v472 = vunpack.c.l.b16 %v428
  %v473 = vunpack.c.h.b16 %v428
  %v474 = vunpack.c.l.b16 %v429
  %v475 = vunpack.c.h.b16 %v429
  %v476 = vunpack.c.l.b16 %v430
  %v477 = vunpack.c.h.b16 %v430
  %v478 = vunpack.c.l.b16 %v431
  %v479 = vunpack.c.h.b16 %v431
  %v480 = vpack.c.b16 %v450, %v448
  %v481 = vpack.c.b16 %v451, %v449
  %v482 = vpack.c.b16 %v454, %v452
  %v483 = vpack.c.b16 %v455, %v453
  %v484 = vpack.c.b16 %v458, %v456
  %v485 = vpack.c.b16 %v459, %v457
  %v486 = vpack.c.b16 %v462, %v460
  %v487 = vpack.c.b16 %v463, %v461
  %v488 = vpack.c.b16 %v466, %v464
  %v489 = vpack.c.b16 %v467, %v465
  %v490 = vpack.c.b16 %v470, %v468
  %v491 = vpack.c.b16 %v471, %v469
  %v492 = vpack.c.b16 %v474, %v472
  %v493 = vpack.c.b16 %v475, %v473
  %v494 = vpack.c.b16 %v478, %v476
  %v495 = vpack.c.b16 %v479, %v477
  %512 = vmatprep.subr.bf16.mxu0 0
  %513 = vmatpush1.bf16.msra.mxu0 %v226
  %514 = vmatprep.subr.bf16.mxu0 0
  %515 = vmatpush1.bf16.msra.mxu0 %v227
  %516 = vmatprep.subr.bf16.mxu0 0
  %517 = vmatpush1.bf16.msra.mxu0 %v228
  %518 = vmatprep.subr.bf16.mxu0 0
  %519 = vmatpush1.bf16.msra.mxu0 %v229
  %520 = vmatprep.subr.bf16.mxu0 0
  %521 = vmatpush1.bf16.msra.mxu0 %v230
  %522 = vmatprep.subr.bf16.mxu0 0
  %523 = vmatpush1.bf16.msra.mxu0 %v231
  %524 = vmatprep.subr.bf16.mxu0 0
  %525 = vmatpush1.bf16.msra.mxu0 %v232
  %526 = vmatprep.subr.bf16.mxu0 0
  %527 = vmatpush1.bf16.msra.mxu0 %v233
  %528 = vmatprep.subr.bf16.mxu0 0
  %529 = vmatpush1.bf16.msra.mxu0 %v234
  %530 = vmatprep.subr.bf16.mxu0 0
  %531 = vmatpush1.bf16.msra.mxu0 %v235
  %532 = vmatprep.subr.bf16.mxu0 0
  %533 = vmatpush1.bf16.msra.mxu0 %v236
  %534 = vmatprep.subr.bf16.mxu0 0
  %535 = vmatpush1.bf16.msra.mxu0 %v237
  %536 = vmatprep.subr.bf16.mxu0 0
  %537 = vmatpush1.bf16.msra.mxu0 %v238
  %538 = vmatprep.subr.bf16.mxu0 0
  %539 = vmatpush1.bf16.msra.mxu0 %v239
  %540 = vmatprep.subr.bf16.mxu0 0
  %541 = vmatpush1.bf16.msra.mxu0 %v240
  %542 = vmatprep.subr.bf16.mxu0 0
  %543 = vmatpush1.bf16.msra.mxu0 %v241
  %544 = vmatprep.mubr.bf16.mxu0 %v481
  %545 = vmatmul.mubr.bf16.gmra.mrb[0].mxu0 %v480
  %v546 = vpop.f32.mrb[0].mxu0
  %v547 = vadd.f32 %v64, %v546
  %v548 = vpop.f32.mrb[0].mxu0
  %v549 = vpop.f32.mrb[0].mxu0
  %v550 = vadd.f32 %v64, %v549
  %v551 = vpop.f32.mrb[0].mxu0
  %552 = vmatprep.mubr.bf16.mxu0 %v483
  %553 = vmatmul.mubr.bf16.gmra.mrb[0].mxu0 %v482
  %v554 = vpop.f32.mrb[0].mxu0
  %v555 = vadd.f32 %v64, %v554
  %v556 = vpop.f32.mrb[0].mxu0
  %v557 = vpop.f32.mrb[0].mxu0
  %v558 = vadd.f32 %v64, %v557
  %v559 = vpop.f32.mrb[0].mxu0
  %560 = vmatprep.mubr.bf16.mxu0 %v485
  %561 = vmatmul.mubr.bf16.gmra.mrb[0].mxu0 %v484
  %v562 = vpop.f32.mrb[0].mxu0
  %v563 = vadd.f32 %v64, %v562
  %v564 = vpop.f32.mrb[0].mxu0
  %v565 = vpop.f32.mrb[0].mxu0
  %v566 = vadd.f32 %v64, %v565
  %v567 = vpop.f32.mrb[0].mxu0
  %568 = vmatprep.mubr.bf16.mxu0 %v487
  %569 = vmatmul.mubr.bf16.gmra.mrb[0].mxu0 %v486
  %v570 = vpop.f32.mrb[0].mxu0
  %v571 = vadd.f32 %v64, %v570
  %v572 = vpop.f32.mrb[0].mxu0
  %v573 = vpop.f32.mrb[0].mxu0
  %v574 = vadd.f32 %v64, %v573
  %v575 = vpop.f32.mrb[0].mxu0
  %576 = vmatprep.mubr.bf16.mxu0 %v489
  %577 = vmatmul.mubr.bf16.gmra.mrb[0].mxu0 %v488
  %v578 = vpop.f32.mrb[0].mxu0
  %v579 = vadd.f32 %v64, %v578
  %v580 = vpop.f32.mrb[0].mxu0
  %v581 = vpop.f32.mrb[0].mxu0
  %v582 = vadd.f32 %v64, %v581
  %v583 = vpop.f32.mrb[0].mxu0
  %584 = vmatprep.mubr.bf16.mxu0 %v491
  %585 = vmatmul.mubr.bf16.gmra.mrb[0].mxu0 %v490
  %v586 = vpop.f32.mrb[0].mxu0
  %v587 = vadd.f32 %v64, %v586
  %v588 = vpop.f32.mrb[0].mxu0
  %v589 = vpop.f32.mrb[0].mxu0
  %v590 = vadd.f32 %v64, %v589
  %v591 = vpop.f32.mrb[0].mxu0
  %592 = vmatprep.mubr.bf16.mxu0 %v493
  %593 = vmatmul.mubr.bf16.gmra.mrb[0].mxu0 %v492
  %v594 = vpop.f32.mrb[0].mxu0
  %v595 = vadd.f32 %v64, %v594
  %v596 = vpop.f32.mrb[0].mxu0
  %v597 = vpop.f32.mrb[0].mxu0
  %v598 = vadd.f32 %v64, %v597
  %v599 = vpop.f32.mrb[0].mxu0
  %600 = vmatprep.mubr.bf16.mxu0 %v495
  %601 = vmatmul.mubr.bf16.gmra.mrb[0].mxu0 %v494
  %v602 = vpop.f32.mrb[0].mxu0
  %v603 = vadd.f32 %v64, %v602
  %v604 = vpop.f32.mrb[0].mxu0
  %v605 = vpop.f32.mrb[0].mxu0
  %v606 = vadd.f32 %v64, %v605
  %v607 = vpop.f32.mrb[0].mxu0
  %608 = vdwg.mxu0
  %v609 = vmax.f32 %v547, 0.0
  %v610 = vmax.f32 %v550, 0.0
  %v611 = vmax.f32 %v555, 0.0
  %v612 = vmax.f32 %v558, 0.0
  %v613 = vmax.f32 %v563, 0.0
  %v614 = vmax.f32 %v566, 0.0
  %v615 = vmax.f32 %v571, 0.0
  %v616 = vmax.f32 %v574, 0.0
  %v617 = vmax.f32 %v579, 0.0
  %v618 = vmax.f32 %v582, 0.0
  %v619 = vmax.f32 %v587, 0.0
  %v620 = vmax.f32 %v590, 0.0
  %v621 = vmax.f32 %v595, 0.0
  %v622 = vmax.f32 %v598, 0.0
  %v623 = vmax.f32 %v603, 0.0
  %v624 = vmax.f32 %v606, 0.0
  %v625 = vpack.c.bf16 %v610, %v609
  %v626 = vpack.c.bf16 %v612, %v611
  %v627 = vpack.c.bf16 %v614, %v613
  %v628 = vpack.c.bf16 %v616, %v615
  %v629 = vpack.c.bf16 %v618, %v617
  %v630 = vpack.c.bf16 %v620, %v619
  %v631 = vpack.c.bf16 %v622, %v621
  %v632 = vpack.c.bf16 %v624, %v623
  %s633 = scalar_lea.vmem [#allocation2], 16
  %634 = vst.msk [vmem:[%s633] sm:$0xff] %vm379, %v625
  %636 = vrot.lane.b32.xlu0 %v626, 32
  %v637 = vpop.permute.xlu0 %636
  %639 = vst.msk [vmem:[%s633] sm:$0xff] %vm385, %v637
  %641 = vrot.lane.b32.xlu0 %v627, 64
  %v642 = vpop.permute.xlu0 %641
  %644 = vst.msk [vmem:[%s633] sm:$0xff] %vm391, %v642
  %646 = vrot.lane.b32.xlu0 %v628, 96
  %v647 = vpop.permute.xlu0 %646
  %649 = vst.msk [vmem:[%s633] sm:$0xff] %vm397, %v647
  %650 = vst.msk [vmem:[%s633 + $0x8] sm:$0xff] %vm379, %v629
  %652 = vrot.lane.b32.xlu0 %v630, 32
  %v653 = vpop.permute.xlu0 %652
  %655 = vst.msk [vmem:[%s633 + $0x8] sm:$0xff] %vm385, %v653
  %657 = vrot.lane.b32.xlu0 %v631, 64
  %v658 = vpop.permute.xlu0 %657
  %660 = vst.msk [vmem:[%s633 + $0x8] sm:$0xff] %vm391, %v658
  %662 = vrot.lane.b32.xlu0 %v632, 96
  %v663 = vpop.permute.xlu0 %662
  %665 = vst.msk [vmem:[%s633 + $0x8] sm:$0xff] %vm397, %v663
  %s666 = scalar_lea.vmem %s0, 256
  %v667 = vld [vmem:[%s666] sm:$0xff]
  %v668 = vld [vmem:[%s666 + $0x8] sm:$0xff]
  %v669 = vld [vmem:[%s666 + $0x10] sm:$0xff]
  %v670 = vld [vmem:[%s666 + $0x18] sm:$0xff]
  %v671 = vld [vmem:[%s666 + $0x20] sm:$0xff]
  %v672 = vld [vmem:[%s666 + $0x28] sm:$0xff]
  %v673 = vld [vmem:[%s666 + $0x30] sm:$0xff]
  %v674 = vld [vmem:[%s666 + $0x38] sm:$0xff]
  %v675 = vld [vmem:[%s666 + $0x40] sm:$0xff]
  %v676 = vld [vmem:[%s666 + $0x48] sm:$0xff]
  %v677 = vld [vmem:[%s666 + $0x50] sm:$0xff]
  %v678 = vld [vmem:[%s666 + $0x58] sm:$0xff]
  %v679 = vld [vmem:[%s666 + $0x60] sm:$0xff]
  %v680 = vld [vmem:[%s666 + $0x68] sm:$0xff]
  %v681 = vld [vmem:[%s666 + $0x70] sm:$0xff]
  %v682 = vld [vmem:[%s666 + $0x78] sm:$0xff]
  %v699 = vunpack.c.l.b16 %v667
  %v700 = vunpack.c.h.b16 %v667
  %v701 = vunpack.c.l.b16 %v668
  %v702 = vunpack.c.h.b16 %v668
  %v703 = vunpack.c.l.b16 %v669
  %v704 = vunpack.c.h.b16 %v669
  %v705 = vunpack.c.l.b16 %v670
  %v706 = vunpack.c.h.b16 %v670
  %v707 = vunpack.c.l.b16 %v671
  %v708 = vunpack.c.h.b16 %v671
  %v709 = vunpack.c.l.b16 %v672
  %v710 = vunpack.c.h.b16 %v672
  %v711 = vunpack.c.l.b16 %v673
  %v712 = vunpack.c.h.b16 %v673
  %v713 = vunpack.c.l.b16 %v674
  %v714 = vunpack.c.h.b16 %v674
  %v715 = vunpack.c.l.b16 %v675
  %v716 = vunpack.c.h.b16 %v675
  %v717 = vunpack.c.l.b16 %v676
  %v718 = vunpack.c.h.b16 %v676
  %v719 = vunpack.c.l.b16 %v677
  %v720 = vunpack.c.h.b16 %v677
  %v721 = vunpack.c.l.b16 %v678
  %v722 = vunpack.c.h.b16 %v678
  %v723 = vunpack.c.l.b16 %v679
  %v724 = vunpack.c.h.b16 %v679
  %v725 = vunpack.c.l.b16 %v680
  %v726 = vunpack.c.h.b16 %v680
  %v727 = vunpack.c.l.b16 %v681
  %v728 = vunpack.c.h.b16 %v681
  %v729 = vunpack.c.l.b16 %v682
  %v730 = vunpack.c.h.b16 %v682
  %v731 = vpack.c.b16 %v701, %v699
  %v732 = vpack.c.b16 %v702, %v700
  %v733 = vpack.c.b16 %v705, %v703
  %v734 = vpack.c.b16 %v706, %v704
  %v735 = vpack.c.b16 %v709, %v707
  %v736 = vpack.c.b16 %v710, %v708
  %v737 = vpack.c.b16 %v713, %v711
  %v738 = vpack.c.b16 %v714, %v712
  %v739 = vpack.c.b16 %v717, %v715
  %v740 = vpack.c.b16 %v718, %v716
  %v741 = vpack.c.b16 %v721, %v719
  %v742 = vpack.c.b16 %v722, %v720
  %v743 = vpack.c.b16 %v725, %v723
  %v744 = vpack.c.b16 %v726, %v724
  %v745 = vpack.c.b16 %v729, %v727
  %v746 = vpack.c.b16 %v730, %v728
  %763 = vmatprep.subr.bf16.mxu0 0
  %764 = vmatpush1.bf16.msra.mxu0 %v226
  %765 = vmatprep.subr.bf16.mxu0 0
  %766 = vmatpush1.bf16.msra.mxu0 %v227
  %767 = vmatprep.subr.bf16.mxu0 0
  %768 = vmatpush1.bf16.msra.mxu0 %v228
  %769 = vmatprep.subr.bf16.mxu0 0
  %770 = vmatpush1.bf16.msra.mxu0 %v229
  %771 = vmatprep.subr.bf16.mxu0 0
  %772 = vmatpush1.bf16.msra.mxu0 %v230
  %773 = vmatprep.subr.bf16.mxu0 0
  %774 = vmatpush1.bf16.msra.mxu0 %v231
  %775 = vmatprep.subr.bf16.mxu0 0
  %776 = vmatpush1.bf16.msra.mxu0 %v232
  %777 = vmatprep.subr.bf16.mxu0 0
  %778 = vmatpush1.bf16.msra.mxu0 %v233
  %779 = vmatprep.subr.bf16.mxu0 0
  %780 = vmatpush1.bf16.msra.mxu0 %v234
  %781 = vmatprep.subr.bf16.mxu0 0
  %782 = vmatpush1.bf16.msra.mxu0 %v235
  %783 = vmatprep.subr.bf16.mxu0 0
  %784 = vmatpush1.bf16.msra.mxu0 %v236
  %785 = vmatprep.subr.bf16.mxu0 0
  %786 = vmatpush1.bf16.msra.mxu0 %v237
  %787 = vmatprep.subr.bf16.mxu0 0
  %788 = vmatpush1.bf16.msra.mxu0 %v238
  %789 = vmatprep.subr.bf16.mxu0 0
  %790 = vmatpush1.bf16.msra.mxu0 %v239
  %791 = vmatprep.subr.bf16.mxu0 0
  %792 = vmatpush1.bf16.msra.mxu0 %v240
  %793 = vmatprep.subr.bf16.mxu0 0
  %794 = vmatpush1.bf16.msra.mxu0 %v241
  %795 = vmatprep.mubr.bf16.mxu0 %v732
  %796 = vmatmul.mubr.bf16.gmra.mrb[0].mxu0 %v731
  %v797 = vpop.f32.mrb[0].mxu0
  %v798 = vadd.f32 %v64, %v797
  %v799 = vpop.f32.mrb[0].mxu0
  %v800 = vpop.f32.mrb[0].mxu0
  %v801 = vadd.f32 %v64, %v800
  %v802 = vpop.f32.mrb[0].mxu0
  %803 = vmatprep.mubr.bf16.mxu0 %v734
  %804 = vmatmul.mubr.bf16.gmra.mrb[0].mxu0 %v733
  %v805 = vpop.f32.mrb[0].mxu0
  %v806 = vadd.f32 %v64, %v805
  %v807 = vpop.f32.mrb[0].mxu0
  %v808 = vpop.f32.mrb[0].mxu0
  %v809 = vadd.f32 %v64, %v808
  %v810 = vpop.f32.mrb[0].mxu0
  %811 = vmatprep.mubr.bf16.mxu0 %v736
  %812 = vmatmul.mubr.bf16.gmra.mrb[0].mxu0 %v735
  %v813 = vpop.f32.mrb[0].mxu0
  %v814 = vadd.f32 %v64, %v813
  %v815 = vpop.f32.mrb[0].mxu0
  %v816 = vpop.f32.mrb[0].mxu0
  %v817 = vadd.f32 %v64, %v816
  %v818 = vpop.f32.mrb[0].mxu0
  %819 = vmatprep.mubr.bf16.mxu0 %v738
  %820 = vmatmul.mubr.bf16.gmra.mrb[0].mxu0 %v737
  %v821 = vpop.f32.mrb[0].mxu0
  %v822 = vadd.f32 %v64, %v821
  %v823 = vpop.f32.mrb[0].mxu0
  %v824 = vpop.f32.mrb[0].mxu0
  %v825 = vadd.f32 %v64, %v824
  %v826 = vpop.f32.mrb[0].mxu0
  %827 = vmatprep.mubr.bf16.mxu0 %v740
  %828 = vmatmul.mubr.bf16.gmra.mrb[0].mxu0 %v739
  %v829 = vpop.f32.mrb[0].mxu0
  %v830 = vadd.f32 %v64, %v829
  %v831 = vpop.f32.mrb[0].mxu0
  %v832 = vpop.f32.mrb[0].mxu0
  %v833 = vadd.f32 %v64, %v832
  %v834 = vpop.f32.mrb[0].mxu0
  %835 = vmatprep.mubr.bf16.mxu0 %v742
  %836 = vmatmul.mubr.bf16.gmra.mrb[0].mxu0 %v741
  %v837 = vpop.f32.mrb[0].mxu0
  %v838 = vadd.f32 %v64, %v837
  %v839 = vpop.f32.mrb[0].mxu0
  %v840 = vpop.f32.mrb[0].mxu0
  %v841 = vadd.f32 %v64, %v840
  %v842 = vpop.f32.mrb[0].mxu0
  %843 = vmatprep.mubr.bf16.mxu0 %v744
  %844 = vmatmul.mubr.bf16.gmra.mrb[0].mxu0 %v743
  %v845 = vpop.f32.mrb[0].mxu0
  %v846 = vadd.f32 %v64, %v845
  %v847 = vpop.f32.mrb[0].mxu0
  %v848 = vpop.f32.mrb[0].mxu0
  %v849 = vadd.f32 %v64, %v848
  %v850 = vpop.f32.mrb[0].mxu0
  %851 = vmatprep.mubr.bf16.mxu0 %v746
  %852 = vmatmul.mubr.bf16.gmra.mrb[0].mxu0 %v745
  %v853 = vpop.f32.mrb[0].mxu0
  %v854 = vadd.f32 %v64, %v853
  %v855 = vpop.f32.mrb[0].mxu0
  %v856 = vpop.f32.mrb[0].mxu0
  %v857 = vadd.f32 %v64, %v856
  %v858 = vpop.f32.mrb[0].mxu0
  %859 = vdwg.mxu0
  %v860 = vmax.f32 %v798, 0.0
  %v861 = vmax.f32 %v801, 0.0
  %v862 = vmax.f32 %v806, 0.0
  %v863 = vmax.f32 %v809, 0.0
  %v864 = vmax.f32 %v814, 0.0
  %v865 = vmax.f32 %v817, 0.0
  %v866 = vmax.f32 %v822, 0.0
  %v867 = vmax.f32 %v825, 0.0
  %v868 = vmax.f32 %v830, 0.0
  %v869 = vmax.f32 %v833, 0.0
  %v870 = vmax.f32 %v838, 0.0
  %v871 = vmax.f32 %v841, 0.0
  %v872 = vmax.f32 %v846, 0.0
  %v873 = vmax.f32 %v849, 0.0
  %v874 = vmax.f32 %v854, 0.0
  %v875 = vmax.f32 %v857, 0.0
  %v876 = vpack.c.bf16 %v861, %v860
  %v877 = vpack.c.bf16 %v863, %v862
  %v878 = vpack.c.bf16 %v865, %v864
  %v879 = vpack.c.bf16 %v867, %v866
  %v880 = vpack.c.bf16 %v869, %v868
  %v881 = vpack.c.bf16 %v871, %v870
  %v882 = vpack.c.bf16 %v873, %v872
  %v883 = vpack.c.bf16 %v875, %v874
  %s884 = scalar_lea.vmem [#allocation2], 32
  %885 = vst.msk [vmem:[%s884] sm:$0xff] %vm379, %v876
  %887 = vrot.lane.b32.xlu0 %v877, 32
  %v888 = vpop.permute.xlu0 %887
  %890 = vst.msk [vmem:[%s884] sm:$0xff] %vm385, %v888
  %892 = vrot.lane.b32.xlu0 %v878, 64
  %v893 = vpop.permute.xlu0 %892
  %895 = vst.msk [vmem:[%s884] sm:$0xff] %vm391, %v893
  %897 = vrot.lane.b32.xlu0 %v879, 96
  %v898 = vpop.permute.xlu0 %897
  %900 = vst.msk [vmem:[%s884] sm:$0xff] %vm397, %v898
  %901 = vst.msk [vmem:[%s884 + $0x8] sm:$0xff] %vm379, %v880
  %903 = vrot.lane.b32.xlu0 %v881, 32
  %v904 = vpop.permute.xlu0 %903
  %906 = vst.msk [vmem:[%s884 + $0x8] sm:$0xff] %vm385, %v904
  %908 = vrot.lane.b32.xlu0 %v882, 64
  %v909 = vpop.permute.xlu0 %908
  %911 = vst.msk [vmem:[%s884 + $0x8] sm:$0xff] %vm391, %v909
  %913 = vrot.lane.b32.xlu0 %v883, 96
  %v914 = vpop.permute.xlu0 %913
  %916 = vst.msk [vmem:[%s884 + $0x8] sm:$0xff] %vm397, %v914
  %s917 = scalar_lea.vmem %s0, 384
  %v918 = vld [vmem:[%s917] sm:$0xff]
  %v919 = vld [vmem:[%s917 + $0x8] sm:$0xff]
  %v920 = vld [vmem:[%s917 + $0x10] sm:$0xff]
  %v921 = vld [vmem:[%s917 + $0x18] sm:$0xff]
  %v922 = vld [vmem:[%s917 + $0x20] sm:$0xff]
  %v923 = vld [vmem:[%s917 + $0x28] sm:$0xff]
  %v924 = vld [vmem:[%s917 + $0x30] sm:$0xff]
  %v925 = vld [vmem:[%s917 + $0x38] sm:$0xff]
  %v926 = vld [vmem:[%s917 + $0x40] sm:$0xff]
  %v927 = vld [vmem:[%s917 + $0x48] sm:$0xff]
  %v928 = vld [vmem:[%s917 + $0x50] sm:$0xff]
  %v929 = vld [vmem:[%s917 + $0x58] sm:$0xff]
  %v930 = vld [vmem:[%s917 + $0x60] sm:$0xff]
  %v931 = vld [vmem:[%s917 + $0x68] sm:$0xff]
  %v932 = vld [vmem:[%s917 + $0x70] sm:$0xff]
  %v933 = vld [vmem:[%s917 + $0x78] sm:$0xff]
  %v950 = vunpack.c.l.b16 %v918
  %v951 = vunpack.c.h.b16 %v918
  %v952 = vunpack.c.l.b16 %v919
  %v953 = vunpack.c.h.b16 %v919
  %v954 = vunpack.c.l.b16 %v920
  %v955 = vunpack.c.h.b16 %v920
  %v956 = vunpack.c.l.b16 %v921
  %v957 = vunpack.c.h.b16 %v921
  %v958 = vunpack.c.l.b16 %v922
  %v959 = vunpack.c.h.b16 %v922
  %v960 = vunpack.c.l.b16 %v923
  %v961 = vunpack.c.h.b16 %v923
  %v962 = vunpack.c.l.b16 %v924
  %v963 = vunpack.c.h.b16 %v924
  %v964 = vunpack.c.l.b16 %v925
  %v965 = vunpack.c.h.b16 %v925
  %v966 = vunpack.c.l.b16 %v926
  %v967 = vunpack.c.h.b16 %v926
  %v968 = vunpack.c.l.b16 %v927
  %v969 = vunpack.c.h.b16 %v927
  %v970 = vunpack.c.l.b16 %v928
  %v971 = vunpack.c.h.b16 %v928
  %v972 = vunpack.c.l.b16 %v929
  %v973 = vunpack.c.h.b16 %v929
  %v974 = vunpack.c.l.b16 %v930
  %v975 = vunpack.c.h.b16 %v930
  %v976 = vunpack.c.l.b16 %v931
  %v977 = vunpack.c.h.b16 %v931
  %v978 = vunpack.c.l.b16 %v932
  %v979 = vunpack.c.h.b16 %v932
  %v980 = vunpack.c.l.b16 %v933
  %v981 = vunpack.c.h.b16 %v933
  %v982 = vpack.c.b16 %v952, %v950
  %v983 = vpack.c.b16 %v953, %v951
  %v984 = vpack.c.b16 %v956, %v954
  %v985 = vpack.c.b16 %v957, %v955
  %v986 = vpack.c.b16 %v960, %v958
  %v987 = vpack.c.b16 %v961, %v959
  %v988 = vpack.c.b16 %v964, %v962
  %v989 = vpack.c.b16 %v965, %v963
  %v990 = vpack.c.b16 %v968, %v966
  %v991 = vpack.c.b16 %v969, %v967
  %v992 = vpack.c.b16 %v972, %v970
  %v993 = vpack.c.b16 %v973, %v971
  %v994 = vpack.c.b16 %v976, %v974
  %v995 = vpack.c.b16 %v977, %v975
  %v996 = vpack.c.b16 %v980, %v978
  %v997 = vpack.c.b16 %v981, %v979
  %1014 = vmatprep.subr.bf16.mxu0 0
  %1015 = vmatpush1.bf16.msra.mxu0 %v226
  %1016 = vmatprep.subr.bf16.mxu0 0
  %1017 = vmatpush1.bf16.msra.mxu0 %v227
  %1018 = vmatprep.subr.bf16.mxu0 0
  %1019 = vmatpush1.bf16.msra.mxu0 %v228
  %1020 = vmatprep.subr.bf16.mxu0 0
  %1021 = vmatpush1.bf16.msra.mxu0 %v229
  %1022 = vmatprep.subr.bf16.mxu0 0
  %1023 = vmatpush1.bf16.msra.mxu0 %v230
  %1024 = vmatprep.subr.bf16.mxu0 0
  %1025 = vmatpush1.bf16.msra.mxu0 %v231
  %1026 = vmatprep.subr.bf16.mxu0 0
  %1027 = vmatpush1.bf16.msra.mxu0 %v232
  %1028 = vmatprep.subr.bf16.mxu0 0
  %1029 = vmatpush1.bf16.msra.mxu0 %v233
  %1030 = vmatprep.subr.bf16.mxu0 0
  %1031 = vmatpush1.bf16.msra.mxu0 %v234
  %1032 = vmatprep.subr.bf16.mxu0 0
  %1033 = vmatpush1.bf16.msra.mxu0 %v235
  %1034 = vmatprep.subr.bf16.mxu0 0
  %1035 = vmatpush1.bf16.msra.mxu0 %v236
  %1036 = vmatprep.subr.bf16.mxu0 0
  %1037 = vmatpush1.bf16.msra.mxu0 %v237
  %1038 = vmatprep.subr.bf16.mxu0 0
  %1039 = vmatpush1.bf16.msra.mxu0 %v238
  %1040 = vmatprep.subr.bf16.mxu0 0
  %1041 = vmatpush1.bf16.msra.mxu0 %v239
  %1042 = vmatprep.subr.bf16.mxu0 0
  %1043 = vmatpush1.bf16.msra.mxu0 %v240
  %1044 = vmatprep.subr.bf16.mxu0 0
  %1045 = vmatpush1.bf16.msra.mxu0 %v241
  %1046 = vmatprep.mubr.bf16.mxu0 %v983
  %1047 = vmatmul.mubr.bf16.gmra.mrb[0].mxu0 %v982
  %v1048 = vpop.f32.mrb[0].mxu0
  %v1049 = vadd.f32 %v64, %v1048
  %v1050 = vpop.f32.mrb[0].mxu0
  %v1051 = vpop.f32.mrb[0].mxu0
  %v1052 = vadd.f32 %v64, %v1051
  %v1053 = vpop.f32.mrb[0].mxu0
  %1054 = vmatprep.mubr.bf16.mxu0 %v985
  %1055 = vmatmul.mubr.bf16.gmra.mrb[0].mxu0 %v984
  %v1056 = vpop.f32.mrb[0].mxu0
  %v1057 = vadd.f32 %v64, %v1056
  %v1058 = vpop.f32.mrb[0].mxu0
  %v1059 = vpop.f32.mrb[0].mxu0
  %v1060 = vadd.f32 %v64, %v1059
  %v1061 = vpop.f32.mrb[0].mxu0
  %1062 = vmatprep.mubr.bf16.mxu0 %v987
  %1063 = vmatmul.mubr.bf16.gmra.mrb[0].mxu0 %v986
  %v1064 = vpop.f32.mrb[0].mxu0
  %v1065 = vadd.f32 %v64, %v1064
  %v1066 = vpop.f32.mrb[0].mxu0
  %v1067 = vpop.f32.mrb[0].mxu0
  %v1068 = vadd.f32 %v64, %v1067
  %v1069 = vpop.f32.mrb[0].mxu0
  %1070 = vmatprep.mubr.bf16.mxu0 %v989
  %1071 = vmatmul.mubr.bf16.gmra.mrb[0].mxu0 %v988
  %v1072 = vpop.f32.mrb[0].mxu0
  %v1073 = vadd.f32 %v64, %v1072
  %v1074 = vpop.f32.mrb[0].mxu0
  %v1075 = vpop.f32.mrb[0].mxu0
  %v1076 = vadd.f32 %v64, %v1075
  %v1077 = vpop.f32.mrb[0].mxu0
  %1078 = vmatprep.mubr.bf16.mxu0 %v991
  %1079 = vmatmul.mubr.bf16.gmra.mrb[0].mxu0 %v990
  %v1080 = vpop.f32.mrb[0].mxu0
  %v1081 = vadd.f32 %v64, %v1080
  %v1082 = vpop.f32.mrb[0].mxu0
  %v1083 = vpop.f32.mrb[0].mxu0
  %v1084 = vadd.f32 %v64, %v1083
  %v1085 = vpop.f32.mrb[0].mxu0
  %1086 = vmatprep.mubr.bf16.mxu0 %v993
  %1087 = vmatmul.mubr.bf16.gmra.mrb[0].mxu0 %v992
  %v1088 = vpop.f32.mrb[0].mxu0
  %v1089 = vadd.f32 %v64, %v1088
  %v1090 = vpop.f32.mrb[0].mxu0
  %v1091 = vpop.f32.mrb[0].mxu0
  %v1092 = vadd.f32 %v64, %v1091
  %v1093 = vpop.f32.mrb[0].mxu0
  %1094 = vmatprep.mubr.bf16.mxu0 %v995
  %1095 = vmatmul.mubr.bf16.gmra.mrb[0].mxu0 %v994
  %v1096 = vpop.f32.mrb[0].mxu0
  %v1097 = vadd.f32 %v64, %v1096
  %v1098 = vpop.f32.mrb[0].mxu0
  %v1099 = vpop.f32.mrb[0].mxu0
  %v1100 = vadd.f32 %v64, %v1099
  %v1101 = vpop.f32.mrb[0].mxu0
  %1102 = vmatprep.mubr.bf16.mxu0 %v997
  %1103 = vmatmul.mubr.bf16.gmra.mrb[0].mxu0 %v996
  %v1104 = vpop.f32.mrb[0].mxu0
  %v1105 = vadd.f32 %v64, %v1104
  %v1106 = vpop.f32.mrb[0].mxu0
  %v1107 = vpop.f32.mrb[0].mxu0
  %v1108 = vadd.f32 %v64, %v1107
  %v1109 = vpop.f32.mrb[0].mxu0
  %1110 = vdwg.mxu0
  %v1111 = vmax.f32 %v1049, 0.0
  %v1112 = vmax.f32 %v1052, 0.0
  %v1113 = vmax.f32 %v1057, 0.0
  %v1114 = vmax.f32 %v1060, 0.0
  %v1115 = vmax.f32 %v1065, 0.0
  %v1116 = vmax.f32 %v1068, 0.0
  %v1117 = vmax.f32 %v1073, 0.0
  %v1118 = vmax.f32 %v1076, 0.0
  %v1119 = vmax.f32 %v1081, 0.0
  %v1120 = vmax.f32 %v1084, 0.0
  %v1121 = vmax.f32 %v1089, 0.0
  %v1122 = vmax.f32 %v1092, 0.0
  %v1123 = vmax.f32 %v1097, 0.0
  %v1124 = vmax.f32 %v1100, 0.0
  %v1125 = vmax.f32 %v1105, 0.0
  %v1126 = vmax.f32 %v1108, 0.0
  %v1127 = vpack.c.bf16 %v1112, %v1111
  %v1128 = vpack.c.bf16 %v1114, %v1113
  %v1129 = vpack.c.bf16 %v1116, %v1115
  %v1130 = vpack.c.bf16 %v1118, %v1117
  %v1131 = vpack.c.bf16 %v1120, %v1119
  %v1132 = vpack.c.bf16 %v1122, %v1121
  %v1133 = vpack.c.bf16 %v1124, %v1123
  %v1134 = vpack.c.bf16 %v1126, %v1125
  %s1135 = scalar_lea.vmem [#allocation2], 48
  %1136 = vst.msk [vmem:[%s1135] sm:$0xff] %vm379, %v1127
  %1138 = vrot.lane.b32.xlu0 %v1128, 32
  %v1139 = vpop.permute.xlu0 %1138
  %1141 = vst.msk [vmem:[%s1135] sm:$0xff] %vm385, %v1139
  %1143 = vrot.lane.b32.xlu0 %v1129, 64
  %v1144 = vpop.permute.xlu0 %1143
  %1146 = vst.msk [vmem:[%s1135] sm:$0xff] %vm391, %v1144
  %1148 = vrot.lane.b32.xlu0 %v1130, 96
  %v1149 = vpop.permute.xlu0 %1148
  %1151 = vst.msk [vmem:[%s1135] sm:$0xff] %vm397, %v1149
  %1152 = vst.msk [vmem:[%s1135 + $0x8] sm:$0xff] %vm379, %v1131
  %1154 = vrot.lane.b32.xlu0 %v1132, 32
  %v1155 = vpop.permute.xlu0 %1154
  %1157 = vst.msk [vmem:[%s1135 + $0x8] sm:$0xff] %vm385, %v1155
  %1159 = vrot.lane.b32.xlu0 %v1133, 64
  %v1160 = vpop.permute.xlu0 %1159
  %1162 = vst.msk [vmem:[%s1135 + $0x8] sm:$0xff] %vm391, %v1160
  %1164 = vrot.lane.b32.xlu0 %v1134, 96
  %v1165 = vpop.permute.xlu0 %1164
  %1167 = vst.msk [vmem:[%s1135 + $0x8] sm:$0xff] %vm397, %v1165
  %s1168 = scalar_lea.vmem %s0, 512
  %v1169 = vld [vmem:[%s1168] sm:$0xff]
  %v1170 = vld [vmem:[%s1168 + $0x8] sm:$0xff]
  %v1171 = vld [vmem:[%s1168 + $0x10] sm:$0xff]
  %v1172 = vld [vmem:[%s1168 + $0x18] sm:$0xff]
  %v1173 = vld [vmem:[%s1168 + $0x20] sm:$0xff]
  %v1174 = vld [vmem:[%s1168 + $0x28] sm:$0xff]
  %v1175 = vld [vmem:[%s1168 + $0x30] sm:$0xff]
  %v1176 = vld [vmem:[%s1168 + $0x38] sm:$0xff]
  %v1177 = vld [vmem:[%s1168 + $0x40] sm:$0xff]
  %v1178 = vld [vmem:[%s1168 + $0x48] sm:$0xff]
  %v1179 = vld [vmem:[%s1168 + $0x50] sm:$0xff]
  %v1180 = vld [vmem:[%s1168 + $0x58] sm:$0xff]
  %v1181 = vld [vmem:[%s1168 + $0x60] sm:$0xff]
  %v1182 = vld [vmem:[%s1168 + $0x68] sm:$0xff]
  %v1183 = vld [vmem:[%s1168 + $0x70] sm:$0xff]
  %v1184 = vld [vmem:[%s1168 + $0x78] sm:$0xff]
  %v1201 = vunpack.c.l.b16 %v1169
  %v1202 = vunpack.c.h.b16 %v1169
  %v1203 = vunpack.c.l.b16 %v1170
  %v1204 = vunpack.c.h.b16 %v1170
  %v1205 = vunpack.c.l.b16 %v1171
  %v1206 = vunpack.c.h.b16 %v1171
  %v1207 = vunpack.c.l.b16 %v1172
  %v1208 = vunpack.c.h.b16 %v1172
  %v1209 = vunpack.c.l.b16 %v1173
  %v1210 = vunpack.c.h.b16 %v1173
  %v1211 = vunpack.c.l.b16 %v1174
  %v1212 = vunpack.c.h.b16 %v1174
  %v1213 = vunpack.c.l.b16 %v1175
  %v1214 = vunpack.c.h.b16 %v1175
  %v1215 = vunpack.c.l.b16 %v1176
  %v1216 = vunpack.c.h.b16 %v1176
  %v1217 = vunpack.c.l.b16 %v1177
  %v1218 = vunpack.c.h.b16 %v1177
  %v1219 = vunpack.c.l.b16 %v1178
  %v1220 = vunpack.c.h.b16 %v1178
  %v1221 = vunpack.c.l.b16 %v1179
  %v1222 = vunpack.c.h.b16 %v1179
  %v1223 = vunpack.c.l.b16 %v1180
  %v1224 = vunpack.c.h.b16 %v1180
  %v1225 = vunpack.c.l.b16 %v1181
  %v1226 = vunpack.c.h.b16 %v1181
  %v1227 = vunpack.c.l.b16 %v1182
  %v1228 = vunpack.c.h.b16 %v1182
  %v1229 = vunpack.c.l.b16 %v1183
  %v1230 = vunpack.c.h.b16 %v1183
  %v1231 = vunpack.c.l.b16 %v1184
  %v1232 = vunpack.c.h.b16 %v1184
  %v1233 = vpack.c.b16 %v1203, %v1201
  %v1234 = vpack.c.b16 %v1204, %v1202
  %v1235 = vpack.c.b16 %v1207, %v1205
  %v1236 = vpack.c.b16 %v1208, %v1206
  %v1237 = vpack.c.b16 %v1211, %v1209
  %v1238 = vpack.c.b16 %v1212, %v1210
  %v1239 = vpack.c.b16 %v1215, %v1213
  %v1240 = vpack.c.b16 %v1216, %v1214
  %v1241 = vpack.c.b16 %v1219, %v1217
  %v1242 = vpack.c.b16 %v1220, %v1218
  %v1243 = vpack.c.b16 %v1223, %v1221
  %v1244 = vpack.c.b16 %v1224, %v1222
  %v1245 = vpack.c.b16 %v1227, %v1225
  %v1246 = vpack.c.b16 %v1228, %v1226
  %v1247 = vpack.c.b16 %v1231, %v1229
  %v1248 = vpack.c.b16 %v1232, %v1230
  %1265 = vmatprep.subr.bf16.mxu0 0
  %1266 = vmatpush1.bf16.msra.mxu0 %v226
  %1267 = vmatprep.subr.bf16.mxu0 0
  %1268 = vmatpush1.bf16.msra.mxu0 %v227
  %1269 = vmatprep.subr.bf16.mxu0 0
  %1270 = vmatpush1.bf16.msra.mxu0 %v228
  %1271 = vmatprep.subr.bf16.mxu0 0
  %1272 = vmatpush1.bf16.msra.mxu0 %v229
  %1273 = vmatprep.subr.bf16.mxu0 0
  %1274 = vmatpush1.bf16.msra.mxu0 %v230
  %1275 = vmatprep.subr.bf16.mxu0 0
  %1276 = vmatpush1.bf16.msra.mxu0 %v231
  %1277 = vmatprep.subr.bf16.mxu0 0
  %1278 = vmatpush1.bf16.msra.mxu0 %v232
  %1279 = vmatprep.subr.bf16.mxu0 0
  %1280 = vmatpush1.bf16.msra.mxu0 %v233
  %1281 = vmatprep.subr.bf16.mxu0 0
  %1282 = vmatpush1.bf16.msra.mxu0 %v234
  %1283 = vmatprep.subr.bf16.mxu0 0
  %1284 = vmatpush1.bf16.msra.mxu0 %v235
  %1285 = vmatprep.subr.bf16.mxu0 0
  %1286 = vmatpush1.bf16.msra.mxu0 %v236
  %1287 = vmatprep.subr.bf16.mxu0 0
  %1288 = vmatpush1.bf16.msra.mxu0 %v237
  %1289 = vmatprep.subr.bf16.mxu0 0
  %1290 = vmatpush1.bf16.msra.mxu0 %v238
  %1291 = vmatprep.subr.bf16.mxu0 0
  %1292 = vmatpush1.bf16.msra.mxu0 %v239
  %1293 = vmatprep.subr.bf16.mxu0 0
  %1294 = vmatpush1.bf16.msra.mxu0 %v240
  %1295 = vmatprep.subr.bf16.mxu0 0
  %1296 = vmatpush1.bf16.msra.mxu0 %v241
  %1297 = vmatprep.mubr.bf16.mxu0 %v1234
  %1298 = vmatmul.mubr.bf16.gmra.mrb[0].mxu0 %v1233
  %v1299 = vpop.f32.mrb[0].mxu0
  %v1300 = vadd.f32 %v64, %v1299
  %v1301 = vpop.f32.mrb[0].mxu0
  %v1302 = vpop.f32.mrb[0].mxu0
  %v1303 = vadd.f32 %v64, %v1302
  %v1304 = vpop.f32.mrb[0].mxu0
  %1305 = vmatprep.mubr.bf16.mxu0 %v1236
  %1306 = vmatmul.mubr.bf16.gmra.mrb[0].mxu0 %v1235
  %v1307 = vpop.f32.mrb[0].mxu0
  %v1308 = vadd.f32 %v64, %v1307
  %v1309 = vpop.f32.mrb[0].mxu0
  %v1310 = vpop.f32.mrb[0].mxu0
  %v1311 = vadd.f32 %v64, %v1310
  %v1312 = vpop.f32.mrb[0].mxu0
  %1313 = vmatprep.mubr.bf16.mxu0 %v1238
  %1314 = vmatmul.mubr.bf16.gmra.mrb[0].mxu0 %v1237
  %v1315 = vpop.f32.mrb[0].mxu0
  %v1316 = vadd.f32 %v64, %v1315
  %v1317 = vpop.f32.mrb[0].mxu0
  %v1318 = vpop.f32.mrb[0].mxu0
  %v1319 = vadd.f32 %v64, %v1318
  %v1320 = vpop.f32.mrb[0].mxu0
  %1321 = vmatprep.mubr.bf16.mxu0 %v1240
  %1322 = vmatmul.mubr.bf16.gmra.mrb[0].mxu0 %v1239
  %v1323 = vpop.f32.mrb[0].mxu0
  %v1324 = vadd.f32 %v64, %v1323
  %v1325 = vpop.f32.mrb[0].mxu0
  %v1326 = vpop.f32.mrb[0].mxu0
  %v1327 = vadd.f32 %v64, %v1326
  %v1328 = vpop.f32.mrb[0].mxu0
  %1329 = vmatprep.mubr.bf16.mxu0 %v1242
  %1330 = vmatmul.mubr.bf16.gmra.mrb[0].mxu0 %v1241
  %v1331 = vpop.f32.mrb[0].mxu0
  %v1332 = vadd.f32 %v64, %v1331
  %v1333 = vpop.f32.mrb[0].mxu0
  %v1334 = vpop.f32.mrb[0].mxu0
  %v1335 = vadd.f32 %v64, %v1334
  %v1336 = vpop.f32.mrb[0].mxu0
  %1337 = vmatprep.mubr.bf16.mxu0 %v1244
  %1338 = vmatmul.mubr.bf16.gmra.mrb[0].mxu0 %v1243
  %v1339 = vpop.f32.mrb[0].mxu0
  %v1340 = vadd.f32 %v64, %v1339
  %v1341 = vpop.f32.mrb[0].mxu0
  %v1342 = vpop.f32.mrb[0].mxu0
  %v1343 = vadd.f32 %v64, %v1342
  %v1344 = vpop.f32.mrb[0].mxu0
  %1345 = vmatprep.mubr.bf16.mxu0 %v1246
  %1346 = vmatmul.mubr.bf16.gmra.mrb[0].mxu0 %v1245
  %v1347 = vpop.f32.mrb[0].mxu0
  %v1348 = vadd.f32 %v64, %v1347
  %v1349 = vpop.f32.mrb[0].mxu0
  %v1350 = vpop.f32.mrb[0].mxu0
  %v1351 = vadd.f32 %v64, %v1350
  %v1352 = vpop.f32.mrb[0].mxu0
  %1353 = vmatprep.mubr.bf16.mxu0 %v1248
  %1354 = vmatmul.mubr.bf16.gmra.mrb[0].mxu0 %v1247
  %v1355 = vpop.f32.mrb[0].mxu0
  %v1356 = vadd.f32 %v64, %v1355
  %v1357 = vpop.f32.mrb[0].mxu0
  %v1358 = vpop.f32.mrb[0].mxu0
  %v1359 = vadd.f32 %v64, %v1358
  %v1360 = vpop.f32.mrb[0].mxu0
  %1361 = vdwg.mxu0
  %v1362 = vmax.f32 %v1300, 0.0
  %v1363 = vmax.f32 %v1303, 0.0
  %v1364 = vmax.f32 %v1308, 0.0
  %v1365 = vmax.f32 %v1311, 0.0
  %v1366 = vmax.f32 %v1316, 0.0
  %v1367 = vmax.f32 %v1319, 0.0
  %v1368 = vmax.f32 %v1324, 0.0
  %v1369 = vmax.f32 %v1327, 0.0
  %v1370 = vmax.f32 %v1332, 0.0
  %v1371 = vmax.f32 %v1335, 0.0
  %v1372 = vmax.f32 %v1340, 0.0
  %v1373 = vmax.f32 %v1343, 0.0
  %v1374 = vmax.f32 %v1348, 0.0
  %v1375 = vmax.f32 %v1351, 0.0
  %v1376 = vmax.f32 %v1356, 0.0
  %v1377 = vmax.f32 %v1359, 0.0
  %v1378 = vpack.c.bf16 %v1363, %v1362
  %v1379 = vpack.c.bf16 %v1365, %v1364
  %v1380 = vpack.c.bf16 %v1367, %v1366
  %v1381 = vpack.c.bf16 %v1369, %v1368
  %v1382 = vpack.c.bf16 %v1371, %v1370
  %v1383 = vpack.c.bf16 %v1373, %v1372
  %v1384 = vpack.c.bf16 %v1375, %v1374
  %v1385 = vpack.c.bf16 %v1377, %v1376
  %s1386 = scalar_lea.vmem [#allocation2], 64
  %1387 = vst.msk [vmem:[%s1386] sm:$0xff] %vm379, %v1378
  %1389 = vrot.lane.b32.xlu0 %v1379, 32
  %v1390 = vpop.permute.xlu0 %1389
  %1392 = vst.msk [vmem:[%s1386] sm:$0xff] %vm385, %v1390
  %1394 = vrot.lane.b32.xlu0 %v1380, 64
  %v1395 = vpop.permute.xlu0 %1394
  %1397 = vst.msk [vmem:[%s1386] sm:$0xff] %vm391, %v1395
  %1399 = vrot.lane.b32.xlu0 %v1381, 96
  %v1400 = vpop.permute.xlu0 %1399
  %1402 = vst.msk [vmem:[%s1386] sm:$0xff] %vm397, %v1400
  %1403 = vst.msk [vmem:[%s1386 + $0x8] sm:$0xff] %vm379, %v1382
  %1405 = vrot.lane.b32.xlu0 %v1383, 32
  %v1406 = vpop.permute.xlu0 %1405
  %1408 = vst.msk [vmem:[%s1386 + $0x8] sm:$0xff] %vm385, %v1406
  %1410 = vrot.lane.b32.xlu0 %v1384, 64
  %v1411 = vpop.permute.xlu0 %1410
  %1413 = vst.msk [vmem:[%s1386 + $0x8] sm:$0xff] %vm391, %v1411
  %1415 = vrot.lane.b32.xlu0 %v1385, 96
  %v1416 = vpop.permute.xlu0 %1415
  %1418 = vst.msk [vmem:[%s1386 + $0x8] sm:$0xff] %vm397, %v1416
  %s1419 = scalar_lea.vmem %s0, 640
  %v1420 = vld [vmem:[%s1419] sm:$0xff]
  %v1421 = vld [vmem:[%s1419 + $0x8] sm:$0xff]
  %v1422 = vld [vmem:[%s1419 + $0x10] sm:$0xff]
  %v1423 = vld [vmem:[%s1419 + $0x18] sm:$0xff]
  %v1424 = vld [vmem:[%s1419 + $0x20] sm:$0xff]
  %v1425 = vld [vmem:[%s1419 + $0x28] sm:$0xff]
  %v1426 = vld [vmem:[%s1419 + $0x30] sm:$0xff]
  %v1427 = vld [vmem:[%s1419 + $0x38] sm:$0xff]
  %v1428 = vld [vmem:[%s1419 + $0x40] sm:$0xff]
  %v1429 = vld [vmem:[%s1419 + $0x48] sm:$0xff]
  %v1430 = vld [vmem:[%s1419 + $0x50] sm:$0xff]
  %v1431 = vld [vmem:[%s1419 + $0x58] sm:$0xff]
  %v1432 = vld [vmem:[%s1419 + $0x60] sm:$0xff]
  %v1433 = vld [vmem:[%s1419 + $0x68] sm:$0xff]
  %v1434 = vld [vmem:[%s1419 + $0x70] sm:$0xff]
  %v1435 = vld [vmem:[%s1419 + $0x78] sm:$0xff]
  %v1452 = vunpack.c.l.b16 %v1420
  %v1453 = vunpack.c.h.b16 %v1420
  %v1454 = vunpack.c.l.b16 %v1421
  %v1455 = vunpack.c.h.b16 %v1421
  %v1456 = vunpack.c.l.b16 %v1422
  %v1457 = vunpack.c.h.b16 %v1422
  %v1458 = vunpack.c.l.b16 %v1423
  %v1459 = vunpack.c.h.b16 %v1423
  %v1460 = vunpack.c.l.b16 %v1424
  %v1461 = vunpack.c.h.b16 %v1424
  %v1462 = vunpack.c.l.b16 %v1425
  %v1463 = vunpack.c.h.b16 %v1425
  %v1464 = vunpack.c.l.b16 %v1426
  %v1465 = vunpack.c.h.b16 %v1426
  %v1466 = vunpack.c.l.b16 %v1427
  %v1467 = vunpack.c.h.b16 %v1427
  %v1468 = vunpack.c.l.b16 %v1428
  %v1469 = vunpack.c.h.b16 %v1428
  %v1470 = vunpack.c.l.b16 %v1429
  %v1471 = vunpack.c.h.b16 %v1429
  %v1472 = vunpack.c.l.b16 %v1430
  %v1473 = vunpack.c.h.b16 %v1430
  %v1474 = vunpack.c.l.b16 %v1431
  %v1475 = vunpack.c.h.b16 %v1431
  %v1476 = vunpack.c.l.b16 %v1432
  %v1477 = vunpack.c.h.b16 %v1432
  %v1478 = vunpack.c.l.b16 %v1433
  %v1479 = vunpack.c.h.b16 %v1433
  %v1480 = vunpack.c.l.b16 %v1434
  %v1481 = vunpack.c.h.b16 %v1434
  %v1482 = vunpack.c.l.b16 %v1435
  %v1483 = vunpack.c.h.b16 %v1435
  %v1484 = vpack.c.b16 %v1454, %v1452
  %v1485 = vpack.c.b16 %v1455, %v1453
  %v1486 = vpack.c.b16 %v1458, %v1456
  %v1487 = vpack.c.b16 %v1459, %v1457
  %v1488 = vpack.c.b16 %v1462, %v1460
  %v1489 = vpack.c.b16 %v1463, %v1461
  %v1490 = vpack.c.b16 %v1466, %v1464
  %v1491 = vpack.c.b16 %v1467, %v1465
  %v1492 = vpack.c.b16 %v1470, %v1468
  %v1493 = vpack.c.b16 %v1471, %v1469
  %v1494 = vpack.c.b16 %v1474, %v1472
  %v1495 = vpack.c.b16 %v1475, %v1473
  %v1496 = vpack.c.b16 %v1478, %v1476
  %v1497 = vpack.c.b16 %v1479, %v1477
  %v1498 = vpack.c.b16 %v1482, %v1480
  %v1499 = vpack.c.b16 %v1483, %v1481
  %1516 = vmatprep.subr.bf16.mxu0 0
  %1517 = vmatpush1.bf16.msra.mxu0 %v226
  %1518 = vmatprep.subr.bf16.mxu0 0
  %1519 = vmatpush1.bf16.msra.mxu0 %v227
  %1520 = vmatprep.subr.bf16.mxu0 0
  %1521 = vmatpush1.bf16.msra.mxu0 %v228
  %1522 = vmatprep.subr.bf16.mxu0 0
  %1523 = vmatpush1.bf16.msra.mxu0 %v229
  %1524 = vmatprep.subr.bf16.mxu0 0
  %1525 = vmatpush1.bf16.msra.mxu0 %v230
  %1526 = vmatprep.subr.bf16.mxu0 0
  %1527 = vmatpush1.bf16.msra.mxu0 %v231
  %1528 = vmatprep.subr.bf16.mxu0 0
  %1529 = vmatpush1.bf16.msra.mxu0 %v232
  %1530 = vmatprep.subr.bf16.mxu0 0
  %1531 = vmatpush1.bf16.msra.mxu0 %v233
  %1532 = vmatprep.subr.bf16.mxu0 0
  %1533 = vmatpush1.bf16.msra.mxu0 %v234
  %1534 = vmatprep.subr.bf16.mxu0 0
  %1535 = vmatpush1.bf16.msra.mxu0 %v235
  %1536 = vmatprep.subr.bf16.mxu0 0
  %1537 = vmatpush1.bf16.msra.mxu0 %v236
  %1538 = vmatprep.subr.bf16.mxu0 0
  %1539 = vmatpush1.bf16.msra.mxu0 %v237
  %1540 = vmatprep.subr.bf16.mxu0 0
  %1541 = vmatpush1.bf16.msra.mxu0 %v238
  %1542 = vmatprep.subr.bf16.mxu0 0
  %1543 = vmatpush1.bf16.msra.mxu0 %v239
  %1544 = vmatprep.subr.bf16.mxu0 0
  %1545 = vmatpush1.bf16.msra.mxu0 %v240
  %1546 = vmatprep.subr.bf16.mxu0 0
  %1547 = vmatpush1.bf16.msra.mxu0 %v241
  %1548 = vmatprep.mubr.bf16.mxu0 %v1485
  %1549 = vmatmul.mubr.bf16.gmra.mrb[0].mxu0 %v1484
  %v1550 = vpop.f32.mrb[0].mxu0
  %v1551 = vadd.f32 %v64, %v1550
  %v1552 = vpop.f32.mrb[0].mxu0
  %v1553 = vpop.f32.mrb[0].mxu0
  %v1554 = vadd.f32 %v64, %v1553
  %v1555 = vpop.f32.mrb[0].mxu0
  %1556 = vmatprep.mubr.bf16.mxu0 %v1487
  %1557 = vmatmul.mubr.bf16.gmra.mrb[0].mxu0 %v1486
  %v1558 = vpop.f32.mrb[0].mxu0
  %v1559 = vadd.f32 %v64, %v1558
  %v1560 = vpop.f32.mrb[0].mxu0
  %v1561 = vpop.f32.mrb[0].mxu0
  %v1562 = vadd.f32 %v64, %v1561
  %v1563 = vpop.f32.mrb[0].mxu0
  %1564 = vmatprep.mubr.bf16.mxu0 %v1489
  %1565 = vmatmul.mubr.bf16.gmra.mrb[0].mxu0 %v1488
  %v1566 = vpop.f32.mrb[0].mxu0
  %v1567 = vadd.f32 %v64, %v1566
  %v1568 = vpop.f32.mrb[0].mxu0
  %v1569 = vpop.f32.mrb[0].mxu0
  %v1570 = vadd.f32 %v64, %v1569
  %v1571 = vpop.f32.mrb[0].mxu0
  %1572 = vmatprep.mubr.bf16.mxu0 %v1491
  %1573 = vmatmul.mubr.bf16.gmra.mrb[0].mxu0 %v1490
  %v1574 = vpop.f32.mrb[0].mxu0
  %v1575 = vadd.f32 %v64, %v1574
  %v1576 = vpop.f32.mrb[0].mxu0
  %v1577 = vpop.f32.mrb[0].mxu0
  %v1578 = vadd.f32 %v64, %v1577
  %v1579 = vpop.f32.mrb[0].mxu0
  %1580 = vmatprep.mubr.bf16.mxu0 %v1493
  %1581 = vmatmul.mubr.bf16.gmra.mrb[0].mxu0 %v1492
  %v1582 = vpop.f32.mrb[0].mxu0
  %v1583 = vadd.f32 %v64, %v1582
  %v1584 = vpop.f32.mrb[0].mxu0
  %v1585 = vpop.f32.mrb[0].mxu0
  %v1586 = vadd.f32 %v64, %v1585
  %v1587 = vpop.f32.mrb[0].mxu0
  %1588 = vmatprep.mubr.bf16.mxu0 %v1495
  %1589 = vmatmul.mubr.bf16.gmra.mrb[0].mxu0 %v1494
  %v1590 = vpop.f32.mrb[0].mxu0
  %v1591 = vadd.f32 %v64, %v1590
  %v1592 = vpop.f32.mrb[0].mxu0
  %v1593 = vpop.f32.mrb[0].mxu0
  %v1594 = vadd.f32 %v64, %v1593
  %v1595 = vpop.f32.mrb[0].mxu0
  %1596 = vmatprep.mubr.bf16.mxu0 %v1497
  %1597 = vmatmul.mubr.bf16.gmra.mrb[0].mxu0 %v1496
  %v1598 = vpop.f32.mrb[0].mxu0
  %v1599 = vadd.f32 %v64, %v1598
  %v1600 = vpop.f32.mrb[0].mxu0
  %v1601 = vpop.f32.mrb[0].mxu0
  %v1602 = vadd.f32 %v64, %v1601
  %v1603 = vpop.f32.mrb[0].mxu0
  %1604 = vmatprep.mubr.bf16.mxu0 %v1499
  %1605 = vmatmul.mubr.bf16.gmra.mrb[0].mxu0 %v1498
  %v1606 = vpop.f32.mrb[0].mxu0
  %v1607 = vadd.f32 %v64, %v1606
  %v1608 = vpop.f32.mrb[0].mxu0
  %v1609 = vpop.f32.mrb[0].mxu0
  %v1610 = vadd.f32 %v64, %v1609
  %v1611 = vpop.f32.mrb[0].mxu0
  %1612 = vdwg.mxu0
  %v1613 = vmax.f32 %v1551, 0.0
  %v1614 = vmax.f32 %v1554, 0.0
  %v1615 = vmax.f32 %v1559, 0.0
  %v1616 = vmax.f32 %v1562, 0.0
  %v1617 = vmax.f32 %v1567, 0.0
  %v1618 = vmax.f32 %v1570, 0.0
  %v1619 = vmax.f32 %v1575, 0.0
  %v1620 = vmax.f32 %v1578, 0.0
  %v1621 = vmax.f32 %v1583, 0.0
  %v1622 = vmax.f32 %v1586, 0.0
  %v1623 = vmax.f32 %v1591, 0.0
  %v1624 = vmax.f32 %v1594, 0.0
  %v1625 = vmax.f32 %v1599, 0.0
  %v1626 = vmax.f32 %v1602, 0.0
  %v1627 = vmax.f32 %v1607, 0.0
  %v1628 = vmax.f32 %v1610, 0.0
  %v1629 = vpack.c.bf16 %v1614, %v1613
  %v1630 = vpack.c.bf16 %v1616, %v1615
  %v1631 = vpack.c.bf16 %v1618, %v1617
  %v1632 = vpack.c.bf16 %v1620, %v1619
  %v1633 = vpack.c.bf16 %v1622, %v1621
  %v1634 = vpack.c.bf16 %v1624, %v1623
  %v1635 = vpack.c.bf16 %v1626, %v1625
  %v1636 = vpack.c.bf16 %v1628, %v1627
  %s1637 = scalar_lea.vmem [#allocation2], 80
  %1638 = vst.msk [vmem:[%s1637] sm:$0xff] %vm379, %v1629
  %1640 = vrot.lane.b32.xlu0 %v1630, 32
  %v1641 = vpop.permute.xlu0 %1640
  %1643 = vst.msk [vmem:[%s1637] sm:$0xff] %vm385, %v1641
  %1645 = vrot.lane.b32.xlu0 %v1631, 64
  %v1646 = vpop.permute.xlu0 %1645
  %1648 = vst.msk [vmem:[%s1637] sm:$0xff] %vm391, %v1646
  %1650 = vrot.lane.b32.xlu0 %v1632, 96
  %v1651 = vpop.permute.xlu0 %1650
  %1653 = vst.msk [vmem:[%s1637] sm:$0xff] %vm397, %v1651
  %1654 = vst.msk [vmem:[%s1637 + $0x8] sm:$0xff] %vm379, %v1633
  %1656 = vrot.lane.b32.xlu0 %v1634, 32
  %v1657 = vpop.permute.xlu0 %1656
  %1659 = vst.msk [vmem:[%s1637 + $0x8] sm:$0xff] %vm385, %v1657
  %1661 = vrot.lane.b32.xlu0 %v1635, 64
  %v1662 = vpop.permute.xlu0 %1661
  %1664 = vst.msk [vmem:[%s1637 + $0x8] sm:$0xff] %vm391, %v1662
  %1666 = vrot.lane.b32.xlu0 %v1636, 96
  %v1667 = vpop.permute.xlu0 %1666
  %1669 = vst.msk [vmem:[%s1637 + $0x8] sm:$0xff] %vm397, %v1667
  %s1670 = scalar_lea.vmem %s0, 768
  %v1671 = vld [vmem:[%s1670] sm:$0xff]
  %v1672 = vld [vmem:[%s1670 + $0x8] sm:$0xff]
  %v1673 = vld [vmem:[%s1670 + $0x10] sm:$0xff]
  %v1674 = vld [vmem:[%s1670 + $0x18] sm:$0xff]
  %v1675 = vld [vmem:[%s1670 + $0x20] sm:$0xff]
  %v1676 = vld [vmem:[%s1670 + $0x28] sm:$0xff]
  %v1677 = vld [vmem:[%s1670 + $0x30] sm:$0xff]
  %v1678 = vld [vmem:[%s1670 + $0x38] sm:$0xff]
  %v1679 = vld [vmem:[%s1670 + $0x40] sm:$0xff]
  %v1680 = vld [vmem:[%s1670 + $0x48] sm:$0xff]
  %v1681 = vld [vmem:[%s1670 + $0x50] sm:$0xff]
  %v1682 = vld [vmem:[%s1670 + $0x58] sm:$0xff]
  %v1683 = vld [vmem:[%s1670 + $0x60] sm:$0xff]
  %v1684 = vld [vmem:[%s1670 + $0x68] sm:$0xff]
  %v1685 = vld [vmem:[%s1670 + $0x70] sm:$0xff]
  %v1686 = vld [vmem:[%s1670 + $0x78] sm:$0xff]
  %v1703 = vunpack.c.l.b16 %v1671
  %v1704 = vunpack.c.h.b16 %v1671
  %v1705 = vunpack.c.l.b16 %v1672
  %v1706 = vunpack.c.h.b16 %v1672
  %v1707 = vunpack.c.l.b16 %v1673
  %v1708 = vunpack.c.h.b16 %v1673
  %v1709 = vunpack.c.l.b16 %v1674
  %v1710 = vunpack.c.h.b16 %v1674
  %v1711 = vunpack.c.l.b16 %v1675
  %v1712 = vunpack.c.h.b16 %v1675
  %v1713 = vunpack.c.l.b16 %v1676
  %v1714 = vunpack.c.h.b16 %v1676
  %v1715 = vunpack.c.l.b16 %v1677
  %v1716 = vunpack.c.h.b16 %v1677
  %v1717 = vunpack.c.l.b16 %v1678
  %v1718 = vunpack.c.h.b16 %v1678
  %v1719 = vunpack.c.l.b16 %v1679
  %v1720 = vunpack.c.h.b16 %v1679
  %v1721 = vunpack.c.l.b16 %v1680
  %v1722 = vunpack.c.h.b16 %v1680
  %v1723 = vunpack.c.l.b16 %v1681
  %v1724 = vunpack.c.h.b16 %v1681
  %v1725 = vunpack.c.l.b16 %v1682
  %v1726 = vunpack.c.h.b16 %v1682
  %v1727 = vunpack.c.l.b16 %v1683
  %v1728 = vunpack.c.h.b16 %v1683
  %v1729 = vunpack.c.l.b16 %v1684
  %v1730 = vunpack.c.h.b16 %v1684
  %v1731 = vunpack.c.l.b16 %v1685
  %v1732 = vunpack.c.h.b16 %v1685
  %v1733 = vunpack.c.l.b16 %v1686
  %v1734 = vunpack.c.h.b16 %v1686
  %v1735 = vpack.c.b16 %v1705, %v1703
  %v1736 = vpack.c.b16 %v1706, %v1704
  %v1737 = vpack.c.b16 %v1709, %v1707
  %v1738 = vpack.c.b16 %v1710, %v1708
  %v1739 = vpack.c.b16 %v1713, %v1711
  %v1740 = vpack.c.b16 %v1714, %v1712
  %v1741 = vpack.c.b16 %v1717, %v1715
  %v1742 = vpack.c.b16 %v1718, %v1716
  %v1743 = vpack.c.b16 %v1721, %v1719
  %v1744 = vpack.c.b16 %v1722, %v1720
  %v1745 = vpack.c.b16 %v1725, %v1723
  %v1746 = vpack.c.b16 %v1726, %v1724
  %v1747 = vpack.c.b16 %v1729, %v1727
  %v1748 = vpack.c.b16 %v1730, %v1728
  %v1749 = vpack.c.b16 %v1733, %v1731
  %v1750 = vpack.c.b16 %v1734, %v1732
  %1767 = vmatprep.subr.bf16.mxu0 0
  %1768 = vmatpush1.bf16.msra.mxu0 %v226
  %1769 = vmatprep.subr.bf16.mxu0 0
  %1770 = vmatpush1.bf16.msra.mxu0 %v227
  %1771 = vmatprep.subr.bf16.mxu0 0
  %1772 = vmatpush1.bf16.msra.mxu0 %v228
  %1773 = vmatprep.subr.bf16.mxu0 0
  %1774 = vmatpush1.bf16.msra.mxu0 %v229
  %1775 = vmatprep.subr.bf16.mxu0 0
  %1776 = vmatpush1.bf16.msra.mxu0 %v230
  %1777 = vmatprep.subr.bf16.mxu0 0
  %1778 = vmatpush1.bf16.msra.mxu0 %v231
  %1779 = vmatprep.subr.bf16.mxu0 0
  %1780 = vmatpush1.bf16.msra.mxu0 %v232
  %1781 = vmatprep.subr.bf16.mxu0 0
  %1782 = vmatpush1.bf16.msra.mxu0 %v233
  %1783 = vmatprep.subr.bf16.mxu0 0
  %1784 = vmatpush1.bf16.msra.mxu0 %v234
  %1785 = vmatprep.subr.bf16.mxu0 0
  %1786 = vmatpush1.bf16.msra.mxu0 %v235
  %1787 = vmatprep.subr.bf16.mxu0 0
  %1788 = vmatpush1.bf16.msra.mxu0 %v236
  %1789 = vmatprep.subr.bf16.mxu0 0
  %1790 = vmatpush1.bf16.msra.mxu0 %v237
  %1791 = vmatprep.subr.bf16.mxu0 0
  %1792 = vmatpush1.bf16.msra.mxu0 %v238
  %1793 = vmatprep.subr.bf16.mxu0 0
  %1794 = vmatpush1.bf16.msra.mxu0 %v239
  %1795 = vmatprep.subr.bf16.mxu0 0
  %1796 = vmatpush1.bf16.msra.mxu0 %v240
  %1797 = vmatprep.subr.bf16.mxu0 0
  %1798 = vmatpush1.bf16.msra.mxu0 %v241
  %1799 = vmatprep.mubr.bf16.mxu0 %v1736
  %1800 = vmatmul.mubr.bf16.gmra.mrb[0].mxu0 %v1735
  %v1801 = vpop.f32.mrb[0].mxu0
  %v1802 = vadd.f32 %v64, %v1801
  %v1803 = vpop.f32.mrb[0].mxu0
  %v1804 = vpop.f32.mrb[0].mxu0
  %v1805 = vadd.f32 %v64, %v1804
  %v1806 = vpop.f32.mrb[0].mxu0
  %1807 = vmatprep.mubr.bf16.mxu0 %v1738
  %1808 = vmatmul.mubr.bf16.gmra.mrb[0].mxu0 %v1737
  %v1809 = vpop.f32.mrb[0].mxu0
  %v1810 = vadd.f32 %v64, %v1809
  %v1811 = vpop.f32.mrb[0].mxu0
  %v1812 = vpop.f32.mrb[0].mxu0
  %v1813 = vadd.f32 %v64, %v1812
  %v1814 = vpop.f32.mrb[0].mxu0
  %1815 = vmatprep.mubr.bf16.mxu0 %v1740
  %1816 = vmatmul.mubr.bf16.gmra.mrb[0].mxu0 %v1739
  %v1817 = vpop.f32.mrb[0].mxu0
  %v1818 = vadd.f32 %v64, %v1817
  %v1819 = vpop.f32.mrb[0].mxu0
  %v1820 = vpop.f32.mrb[0].mxu0
  %v1821 = vadd.f32 %v64, %v1820
  %v1822 = vpop.f32.mrb[0].mxu0
  %1823 = vmatprep.mubr.bf16.mxu0 %v1742
  %1824 = vmatmul.mubr.bf16.gmra.mrb[0].mxu0 %v1741
  %v1825 = vpop.f32.mrb[0].mxu0
  %v1826 = vadd.f32 %v64, %v1825
  %v1827 = vpop.f32.mrb[0].mxu0
  %v1828 = vpop.f32.mrb[0].mxu0
  %v1829 = vadd.f32 %v64, %v1828
  %v1830 = vpop.f32.mrb[0].mxu0
  %1831 = vmatprep.mubr.bf16.mxu0 %v1744
  %1832 = vmatmul.mubr.bf16.gmra.mrb[0].mxu0 %v1743
  %v1833 = vpop.f32.mrb[0].mxu0
  %v1834 = vadd.f32 %v64, %v1833
  %v1835 = vpop.f32.mrb[0].mxu0
  %v1836 = vpop.f32.mrb[0].mxu0
  %v1837 = vadd.f32 %v64, %v1836
  %v1838 = vpop.f32.mrb[0].mxu0
  %1839 = vmatprep.mubr.bf16.mxu0 %v1746
  %1840 = vmatmul.mubr.bf16.gmra.mrb[0].mxu0 %v1745
  %v1841 = vpop.f32.mrb[0].mxu0
  %v1842 = vadd.f32 %v64, %v1841
  %v1843 = vpop.f32.mrb[0].mxu0
  %v1844 = vpop.f32.mrb[0].mxu0
  %v1845 = vadd.f32 %v64, %v1844
  %v1846 = vpop.f32.mrb[0].mxu0
  %1847 = vmatprep.mubr.bf16.mxu0 %v1748
  %1848 = vmatmul.mubr.bf16.gmra.mrb[0].mxu0 %v1747
  %v1849 = vpop.f32.mrb[0].mxu0
  %v1850 = vadd.f32 %v64, %v1849
  %v1851 = vpop.f32.mrb[0].mxu0
  %v1852 = vpop.f32.mrb[0].mxu0
  %v1853 = vadd.f32 %v64, %v1852
  %v1854 = vpop.f32.mrb[0].mxu0
  %1855 = vmatprep.mubr.bf16.mxu0 %v1750
  %1856 = vmatmul.mubr.bf16.gmra.mrb[0].mxu0 %v1749
  %v1857 = vpop.f32.mrb[0].mxu0
  %v1858 = vadd.f32 %v64, %v1857
  %v1859 = vpop.f32.mrb[0].mxu0
  %v1860 = vpop.f32.mrb[0].mxu0
  %v1861 = vadd.f32 %v64, %v1860
  %v1862 = vpop.f32.mrb[0].mxu0
  %1863 = vdwg.mxu0
  %v1864 = vmax.f32 %v1802, 0.0
  %v1865 = vmax.f32 %v1805, 0.0
  %v1866 = vmax.f32 %v1810, 0.0
  %v1867 = vmax.f32 %v1813, 0.0
  %v1868 = vmax.f32 %v1818, 0.0
  %v1869 = vmax.f32 %v1821, 0.0
  %v1870 = vmax.f32 %v1826, 0.0
  %v1871 = vmax.f32 %v1829, 0.0
  %v1872 = vmax.f32 %v1834, 0.0
  %v1873 = vmax.f32 %v1837, 0.0
  %v1874 = vmax.f32 %v1842, 0.0
  %v1875 = vmax.f32 %v1845, 0.0
  %v1876 = vmax.f32 %v1850, 0.0
  %v1877 = vmax.f32 %v1853, 0.0
  %v1878 = vmax.f32 %v1858, 0.0
  %v1879 = vmax.f32 %v1861, 0.0
  %v1880 = vpack.c.bf16 %v1865, %v1864
  %v1881 = vpack.c.bf16 %v1867, %v1866
  %v1882 = vpack.c.bf16 %v1869, %v1868
  %v1883 = vpack.c.bf16 %v1871, %v1870
  %v1884 = vpack.c.bf16 %v1873, %v1872
  %v1885 = vpack.c.bf16 %v1875, %v1874
  %v1886 = vpack.c.bf16 %v1877, %v1876
  %v1887 = vpack.c.bf16 %v1879, %v1878
  %s1888 = scalar_lea.vmem [#allocation2], 96
  %1889 = vst.msk [vmem:[%s1888] sm:$0xff] %vm379, %v1880
  %1891 = vrot.lane.b32.xlu0 %v1881, 32
  %v1892 = vpop.permute.xlu0 %1891
  %1894 = vst.msk [vmem:[%s1888] sm:$0xff] %vm385, %v1892
  %1896 = vrot.lane.b32.xlu0 %v1882, 64
  %v1897 = vpop.permute.xlu0 %1896
  %1899 = vst.msk [vmem:[%s1888] sm:$0xff] %vm391, %v1897
  %1901 = vrot.lane.b32.xlu0 %v1883, 96
  %v1902 = vpop.permute.xlu0 %1901
  %1904 = vst.msk [vmem:[%s1888] sm:$0xff] %vm397, %v1902
  %1905 = vst.msk [vmem:[%s1888 + $0x8] sm:$0xff] %vm379, %v1884
  %1907 = vrot.lane.b32.xlu0 %v1885, 32
  %v1908 = vpop.permute.xlu0 %1907
  %1910 = vst.msk [vmem:[%s1888 + $0x8] sm:$0xff] %vm385, %v1908
  %1912 = vrot.lane.b32.xlu0 %v1886, 64
  %v1913 = vpop.permute.xlu0 %1912
  %1915 = vst.msk [vmem:[%s1888 + $0x8] sm:$0xff] %vm391, %v1913
  %1917 = vrot.lane.b32.xlu0 %v1887, 96
  %v1918 = vpop.permute.xlu0 %1917
  %1920 = vst.msk [vmem:[%s1888 + $0x8] sm:$0xff] %vm397, %v1918
  %s1921 = scalar_lea.vmem %s0, 896
  %v1922 = vld [vmem:[%s1921] sm:$0xff]
  %v1923 = vld [vmem:[%s1921 + $0x8] sm:$0xff]
  %v1924 = vld [vmem:[%s1921 + $0x10] sm:$0xff]
  %v1925 = vld [vmem:[%s1921 + $0x18] sm:$0xff]
  %v1926 = vld [vmem:[%s1921 + $0x20] sm:$0xff]
  %v1927 = vld [vmem:[%s1921 + $0x28] sm:$0xff]
  %v1928 = vld [vmem:[%s1921 + $0x30] sm:$0xff]
  %v1929 = vld [vmem:[%s1921 + $0x38] sm:$0xff]
  %v1930 = vld [vmem:[%s1921 + $0x40] sm:$0xff]
  %v1931 = vld [vmem:[%s1921 + $0x48] sm:$0xff]
  %v1932 = vld [vmem:[%s1921 + $0x50] sm:$0xff]
  %v1933 = vld [vmem:[%s1921 + $0x58] sm:$0xff]
  %v1934 = vld [vmem:[%s1921 + $0x60] sm:$0xff]
  %v1935 = vld [vmem:[%s1921 + $0x68] sm:$0xff]
  %v1936 = vld [vmem:[%s1921 + $0x70] sm:$0xff]
  %v1937 = vld [vmem:[%s1921 + $0x78] sm:$0xff]
  %v1954 = vunpack.c.l.b16 %v1922
  %v1955 = vunpack.c.h.b16 %v1922
  %v1956 = vunpack.c.l.b16 %v1923
  %v1957 = vunpack.c.h.b16 %v1923
  %v1958 = vunpack.c.l.b16 %v1924
  %v1959 = vunpack.c.h.b16 %v1924
  %v1960 = vunpack.c.l.b16 %v1925
  %v1961 = vunpack.c.h.b16 %v1925
  %v1962 = vunpack.c.l.b16 %v1926
  %v1963 = vunpack.c.h.b16 %v1926
  %v1964 = vunpack.c.l.b16 %v1927
  %v1965 = vunpack.c.h.b16 %v1927
  %v1966 = vunpack.c.l.b16 %v1928
  %v1967 = vunpack.c.h.b16 %v1928
  %v1968 = vunpack.c.l.b16 %v1929
  %v1969 = vunpack.c.h.b16 %v1929
  %v1970 = vunpack.c.l.b16 %v1930
  %v1971 = vunpack.c.h.b16 %v1930
  %v1972 = vunpack.c.l.b16 %v1931
  %v1973 = vunpack.c.h.b16 %v1931
  %v1974 = vunpack.c.l.b16 %v1932
  %v1975 = vunpack.c.h.b16 %v1932
  %v1976 = vunpack.c.l.b16 %v1933
  %v1977 = vunpack.c.h.b16 %v1933
  %v1978 = vunpack.c.l.b16 %v1934
  %v1979 = vunpack.c.h.b16 %v1934
  %v1980 = vunpack.c.l.b16 %v1935
  %v1981 = vunpack.c.h.b16 %v1935
  %v1982 = vunpack.c.l.b16 %v1936
  %v1983 = vunpack.c.h.b16 %v1936
  %v1984 = vunpack.c.l.b16 %v1937
  %v1985 = vunpack.c.h.b16 %v1937
  %v1986 = vpack.c.b16 %v1956, %v1954
  %v1987 = vpack.c.b16 %v1957, %v1955
  %v1988 = vpack.c.b16 %v1960, %v1958
  %v1989 = vpack.c.b16 %v1961, %v1959
  %v1990 = vpack.c.b16 %v1964, %v1962
  %v1991 = vpack.c.b16 %v1965, %v1963
  %v1992 = vpack.c.b16 %v1968, %v1966
  %v1993 = vpack.c.b16 %v1969, %v1967
  %v1994 = vpack.c.b16 %v1972, %v1970
  %v1995 = vpack.c.b16 %v1973, %v1971
  %v1996 = vpack.c.b16 %v1976, %v1974
  %v1997 = vpack.c.b16 %v1977, %v1975
  %v1998 = vpack.c.b16 %v1980, %v1978
  %v1999 = vpack.c.b16 %v1981, %v1979
  %v2000 = vpack.c.b16 %v1984, %v1982
  %v2001 = vpack.c.b16 %v1985, %v1983
  %2018 = vmatprep.subr.bf16.mxu0 0
  %2019 = vmatpush1.bf16.msra.mxu0 %v226
  %2020 = vmatprep.subr.bf16.mxu0 0
  %2021 = vmatpush1.bf16.msra.mxu0 %v227
  %2022 = vmatprep.subr.bf16.mxu0 0
  %2023 = vmatpush1.bf16.msra.mxu0 %v228
  %2024 = vmatprep.subr.bf16.mxu0 0
  %2025 = vmatpush1.bf16.msra.mxu0 %v229
  %2026 = vmatprep.subr.bf16.mxu0 0
  %2027 = vmatpush1.bf16.msra.mxu0 %v230
  %2028 = vmatprep.subr.bf16.mxu0 0
  %2029 = vmatpush1.bf16.msra.mxu0 %v231
  %2030 = vmatprep.subr.bf16.mxu0 0
  %2031 = vmatpush1.bf16.msra.mxu0 %v232
  %2032 = vmatprep.subr.bf16.mxu0 0
  %2033 = vmatpush1.bf16.msra.mxu0 %v233
  %2034 = vmatprep.subr.bf16.mxu0 0
  %2035 = vmatpush1.bf16.msra.mxu0 %v234
  %2036 = vmatprep.subr.bf16.mxu0 0
  %2037 = vmatpush1.bf16.msra.mxu0 %v235
  %2038 = vmatprep.subr.bf16.mxu0 0
  %2039 = vmatpush1.bf16.msra.mxu0 %v236
  %2040 = vmatprep.subr.bf16.mxu0 0
  %2041 = vmatpush1.bf16.msra.mxu0 %v237
  %2042 = vmatprep.subr.bf16.mxu0 0
  %2043 = vmatpush1.bf16.msra.mxu0 %v238
  %2044 = vmatprep.subr.bf16.mxu0 0
  %2045 = vmatpush1.bf16.msra.mxu0 %v239
  %2046 = vmatprep.subr.bf16.mxu0 0
  %2047 = vmatpush1.bf16.msra.mxu0 %v240
  %2048 = vmatprep.subr.bf16.mxu0 0
  %2049 = vmatpush1.bf16.msra.mxu0 %v241
  %2050 = vmatprep.mubr.bf16.mxu0 %v1987
  %2051 = vmatmul.mubr.bf16.gmra.mrb[0].mxu0 %v1986
  %v2052 = vpop.f32.mrb[0].mxu0
  %v2053 = vadd.f32 %v64, %v2052
  %v2054 = vpop.f32.mrb[0].mxu0
  %v2055 = vpop.f32.mrb[0].mxu0
  %v2056 = vadd.f32 %v64, %v2055
  %v2057 = vpop.f32.mrb[0].mxu0
  %2058 = vmatprep.mubr.bf16.mxu0 %v1989
  %2059 = vmatmul.mubr.bf16.gmra.mrb[0].mxu0 %v1988
  %v2060 = vpop.f32.mrb[0].mxu0
  %v2061 = vadd.f32 %v64, %v2060
  %v2062 = vpop.f32.mrb[0].mxu0
  %v2063 = vpop.f32.mrb[0].mxu0
  %v2064 = vadd.f32 %v64, %v2063
  %v2065 = vpop.f32.mrb[0].mxu0
  %2066 = vmatprep.mubr.bf16.mxu0 %v1991
  %2067 = vmatmul.mubr.bf16.gmra.mrb[0].mxu0 %v1990
  %v2068 = vpop.f32.mrb[0].mxu0
  %v2069 = vadd.f32 %v64, %v2068
  %v2070 = vpop.f32.mrb[0].mxu0
  %v2071 = vpop.f32.mrb[0].mxu0
  %v2072 = vadd.f32 %v64, %v2071
  %v2073 = vpop.f32.mrb[0].mxu0
  %2074 = vmatprep.mubr.bf16.mxu0 %v1993
  %2075 = vmatmul.mubr.bf16.gmra.mrb[0].mxu0 %v1992
  %v2076 = vpop.f32.mrb[0].mxu0
  %v2077 = vadd.f32 %v64, %v2076
  %v2078 = vpop.f32.mrb[0].mxu0
  %v2079 = vpop.f32.mrb[0].mxu0
  %v2080 = vadd.f32 %v64, %v2079
  %v2081 = vpop.f32.mrb[0].mxu0
  %2082 = vmatprep.mubr.bf16.mxu0 %v1995
  %2083 = vmatmul.mubr.bf16.gmra.mrb[0].mxu0 %v1994
  %v2084 = vpop.f32.mrb[0].mxu0
  %v2085 = vadd.f32 %v64, %v2084
  %v2086 = vpop.f32.mrb[0].mxu0
  %v2087 = vpop.f32.mrb[0].mxu0
  %v2088 = vadd.f32 %v64, %v2087
  %v2089 = vpop.f32.mrb[0].mxu0
  %2090 = vmatprep.mubr.bf16.mxu0 %v1997
  %2091 = vmatmul.mubr.bf16.gmra.mrb[0].mxu0 %v1996
  %v2092 = vpop.f32.mrb[0].mxu0
  %v2093 = vadd.f32 %v64, %v2092
  %v2094 = vpop.f32.mrb[0].mxu0
  %v2095 = vpop.f32.mrb[0].mxu0
  %v2096 = vadd.f32 %v64, %v2095
  %v2097 = vpop.f32.mrb[0].mxu0
  %2098 = vmatprep.mubr.bf16.mxu0 %v1999
  %2099 = vmatmul.mubr.bf16.gmra.mrb[0].mxu0 %v1998
  %v2100 = vpop.f32.mrb[0].mxu0
  %v2101 = vadd.f32 %v64, %v2100
  %v2102 = vpop.f32.mrb[0].mxu0
  %v2103 = vpop.f32.mrb[0].mxu0
  %v2104 = vadd.f32 %v64, %v2103
  %v2105 = vpop.f32.mrb[0].mxu0
  %2106 = vmatprep.mubr.bf16.mxu0 %v2001
  %2107 = vmatmul.mubr.bf16.gmra.mrb[0].mxu0 %v2000
  %v2108 = vpop.f32.mrb[0].mxu0
  %v2109 = vadd.f32 %v64, %v2108
  %v2110 = vpop.f32.mrb[0].mxu0
  %v2111 = vpop.f32.mrb[0].mxu0
  %v2112 = vadd.f32 %v64, %v2111
  %v2113 = vpop.f32.mrb[0].mxu0
  %2114 = vdwg.mxu0
  %v2115 = vmax.f32 %v2053, 0.0
  %v2116 = vmax.f32 %v2056, 0.0
  %v2117 = vmax.f32 %v2061, 0.0
  %v2118 = vmax.f32 %v2064, 0.0
  %v2119 = vmax.f32 %v2069, 0.0
  %v2120 = vmax.f32 %v2072, 0.0
  %v2121 = vmax.f32 %v2077, 0.0
  %v2122 = vmax.f32 %v2080, 0.0
  %v2123 = vmax.f32 %v2085, 0.0
  %v2124 = vmax.f32 %v2088, 0.0
  %v2125 = vmax.f32 %v2093, 0.0
  %v2126 = vmax.f32 %v2096, 0.0
  %v2127 = vmax.f32 %v2101, 0.0
  %v2128 = vmax.f32 %v2104, 0.0
  %v2129 = vmax.f32 %v2109, 0.0
  %v2130 = vmax.f32 %v2112, 0.0
  %v2131 = vpack.c.bf16 %v2116, %v2115
  %v2132 = vpack.c.bf16 %v2118, %v2117
  %v2133 = vpack.c.bf16 %v2120, %v2119
  %v2134 = vpack.c.bf16 %v2122, %v2121
  %v2135 = vpack.c.bf16 %v2124, %v2123
  %v2136 = vpack.c.bf16 %v2126, %v2125
  %v2137 = vpack.c.bf16 %v2128, %v2127
  %v2138 = vpack.c.bf16 %v2130, %v2129
  %s2139 = scalar_lea.vmem [#allocation2], 112
  %2140 = vst.msk [vmem:[%s2139] sm:$0xff] %vm379, %v2131
  %2142 = vrot.lane.b32.xlu0 %v2132, 32
  %v2143 = vpop.permute.xlu0 %2142
  %2145 = vst.msk [vmem:[%s2139] sm:$0xff] %vm385, %v2143
  %2147 = vrot.lane.b32.xlu0 %v2133, 64
  %v2148 = vpop.permute.xlu0 %2147
  %2150 = vst.msk [vmem:[%s2139] sm:$0xff] %vm391, %v2148
  %2152 = vrot.lane.b32.xlu0 %v2134, 96
  %v2153 = vpop.permute.xlu0 %2152
  %2155 = vst.msk [vmem:[%s2139] sm:$0xff] %vm397, %v2153
  %2156 = vst.msk [vmem:[%s2139 + $0x8] sm:$0xff] %vm379, %v2135
  %2158 = vrot.lane.b32.xlu0 %v2136, 32
  %v2159 = vpop.permute.xlu0 %2158
  %2161 = vst.msk [vmem:[%s2139 + $0x8] sm:$0xff] %vm385, %v2159
  %2163 = vrot.lane.b32.xlu0 %v2137, 64
  %v2164 = vpop.permute.xlu0 %2163
  %2166 = vst.msk [vmem:[%s2139 + $0x8] sm:$0xff] %vm391, %v2164
  %2168 = vrot.lane.b32.xlu0 %v2138, 96
  %v2169 = vpop.permute.xlu0 %2168
  %2171 = vst.msk [vmem:[%s2139 + $0x8] sm:$0xff] %vm397, %v2169
  %v2172 = vld [vmem:[%s3] sm:$0xf]
  %v2173 = vld [vmem:[%s3 + $0x4] sm:$0xf]
  %v2174 = vld [vmem:[%s3 + $0x8] sm:$0xf]
  %v2175 = vld [vmem:[%s3 + $0xc] sm:$0xf]
  %v2176 = vld [vmem:[%s3 + $0x10] sm:$0xf]
  %v2177 = vld [vmem:[%s3 + $0x14] sm:$0xf]
  %v2178 = vld [vmem:[%s3 + $0x18] sm:$0xf]
  %v2179 = vld [vmem:[%s3 + $0x1c] sm:$0xf]
  %v2180 = vld [vmem:[%s3 + $0x20] sm:$0xf]
  %v2181 = vld [vmem:[%s3 + $0x24] sm:$0xf]
  %v2182 = vld [vmem:[%s3 + $0x28] sm:$0xf]
  %v2183 = vld [vmem:[%s3 + $0x2c] sm:$0xf]
  %v2184 = vld [vmem:[%s3 + $0x30] sm:$0xf]
  %v2185 = vld [vmem:[%s3 + $0x34] sm:$0xf]
  %v2186 = vld [vmem:[%s3 + $0x38] sm:$0xf]
  %v2187 = vld [vmem:[%s3 + $0x3c] sm:$0xf]
  %v2188 = vld [vmem:[%s3 + $0x40] sm:$0xf]
  %v2189 = vld [vmem:[%s3 + $0x44] sm:$0xf]
  %v2190 = vld [vmem:[%s3 + $0x48] sm:$0xf]
  %v2191 = vld [vmem:[%s3 + $0x4c] sm:$0xf]
  %v2192 = vld [vmem:[%s3 + $0x50] sm:$0xf]
  %v2193 = vld [vmem:[%s3 + $0x54] sm:$0xf]
  %v2194 = vld [vmem:[%s3 + $0x58] sm:$0xf]
  %v2195 = vld [vmem:[%s3 + $0x5c] sm:$0xf]
  %v2196 = vld [vmem:[%s3 + $0x60] sm:$0xf]
  %v2197 = vld [vmem:[%s3 + $0x64] sm:$0xf]
  %v2198 = vld [vmem:[%s3 + $0x68] sm:$0xf]
  %v2199 = vld [vmem:[%s3 + $0x6c] sm:$0xf]
  %v2200 = vld [vmem:[%s3 + $0x70] sm:$0xf]
  %v2201 = vld [vmem:[%s3 + $0x74] sm:$0xf]
  %v2202 = vld [vmem:[%s3 + $0x78] sm:$0xf]
  %v2203 = vld [vmem:[%s3 + $0x7c] sm:$0xf]
  %v2204 = vld [vmem:[%s3 + $0x80] sm:$0xf]
  %v2205 = vld [vmem:[%s3 + $0x84] sm:$0xf]
  %v2206 = vld [vmem:[%s3 + $0x88] sm:$0xf]
  %v2207 = vld [vmem:[%s3 + $0x8c] sm:$0xf]
  %v2208 = vld [vmem:[%s3 + $0x90] sm:$0xf]
  %v2209 = vld [vmem:[%s3 + $0x94] sm:$0xf]
  %v2210 = vld [vmem:[%s3 + $0x98] sm:$0xf]
  %v2211 = vld [vmem:[%s3 + $0x9c] sm:$0xf]
  %v2212 = vld [vmem:[%s3 + $0xa0] sm:$0xf]
  %v2213 = vld [vmem:[%s3 + $0xa4] sm:$0xf]
  %v2214 = vld [vmem:[%s3 + $0xa8] sm:$0xf]
  %v2215 = vld [vmem:[%s3 + $0xac] sm:$0xf]
  %v2216 = vld [vmem:[%s3 + $0xb0] sm:$0xf]
  %v2217 = vld [vmem:[%s3 + $0xb4] sm:$0xf]
  %v2218 = vld [vmem:[%s3 + $0xb8] sm:$0xf]
  %v2219 = vld [vmem:[%s3 + $0xbc] sm:$0xf]
  %v2220 = vld [vmem:[%s3 + $0xc0] sm:$0xf]
  %v2221 = vld [vmem:[%s3 + $0xc4] sm:$0xf]
  %v2222 = vld [vmem:[%s3 + $0xc8] sm:$0xf]
  %v2223 = vld [vmem:[%s3 + $0xcc] sm:$0xf]
  %v2224 = vld [vmem:[%s3 + $0xd0] sm:$0xf]
  %v2225 = vld [vmem:[%s3 + $0xd4] sm:$0xf]
  %v2226 = vld [vmem:[%s3 + $0xd8] sm:$0xf]
  %v2227 = vld [vmem:[%s3 + $0xdc] sm:$0xf]
  %v2228 = vld [vmem:[%s3 + $0xe0] sm:$0xf]
  %v2229 = vld [vmem:[%s3 + $0xe4] sm:$0xf]
  %v2230 = vld [vmem:[%s3 + $0xe8] sm:$0xf]
  %v2231 = vld [vmem:[%s3 + $0xec] sm:$0xf]
  %v2232 = vld [vmem:[%s3 + $0xf0] sm:$0xf]
  %v2233 = vld [vmem:[%s3 + $0xf4] sm:$0xf]
  %v2234 = vld [vmem:[%s3 + $0xf8] sm:$0xf]
  %v2235 = vld [vmem:[%s3 + $0xfc] sm:$0xf]
  %v2236 = vld [vmem:[%s4] sm:$0x1]
  %v2238 = vlaneseq
  %v2239 = vshrl.u32 %v2238, 7
  %v2240 = vsub.s32 0, %v2239
  %v2241 = vrot.slane %v2236, %v2240
  %v2243 = vld [vmem:[#allocation2] sm:$0xff]
  %v2244 = vld [vmem:[%s633] sm:$0xff]
  %v2261 = vunpack.c.l.b16 %v2188
  %v2262 = vunpack.c.l.b16 %v2189
  %v2263 = vunpack.c.l.b16 %v2190
  %v2264 = vunpack.c.l.b16 %v2191
  %v2265 = vunpack.c.l.b16 %v2192
  %v2266 = vunpack.c.l.b16 %v2193
  %v2267 = vunpack.c.l.b16 %v2194
  %v2268 = vunpack.c.l.b16 %v2195
  %v2269 = vunpack.c.l.b16 %v2196
  %v2270 = vunpack.c.l.b16 %v2197
  %v2271 = vunpack.c.l.b16 %v2198
  %v2272 = vunpack.c.l.b16 %v2199
  %v2273 = vunpack.c.l.b16 %v2200
  %v2274 = vunpack.c.l.b16 %v2201
  %v2275 = vunpack.c.l.b16 %v2202
  %v2276 = vunpack.c.l.b16 %v2203
  %v2277 = vpack.c.b16 %v2262, %v2261
  %v2278 = vpack.c.b16 %v2264, %v2263
  %v2279 = vpack.c.b16 %v2266, %v2265
  %v2280 = vpack.c.b16 %v2268, %v2267
  %v2281 = vpack.c.b16 %v2270, %v2269
  %v2282 = vpack.c.b16 %v2272, %v2271
  %v2283 = vpack.c.b16 %v2274, %v2273
  %v2284 = vpack.c.b16 %v2276, %v2275
  %2293 = vmatprep.subr.bf16.mxu0 0
  %2294 = vmatpush1.bf16.msra.mxu0 %v2277
  %2295 = vmatprep.subr.bf16.mxu0 0
  %2296 = vmatpush1.bf16.msra.mxu0 %v2278
  %2297 = vmatprep.subr.bf16.mxu0 0
  %2298 = vmatpush1.bf16.msra.mxu0 %v2279
  %2299 = vmatprep.subr.bf16.mxu0 0
  %2300 = vmatpush1.bf16.msra.mxu0 %v2280
  %2301 = vmatprep.subr.bf16.mxu0 0
  %2302 = vmatpush1.bf16.msra.mxu0 %v2281
  %2303 = vmatprep.subr.bf16.mxu0 0
  %2304 = vmatpush1.bf16.msra.mxu0 %v2282
  %2305 = vmatprep.subr.bf16.mxu0 0
  %2306 = vmatpush1.bf16.msra.mxu0 %v2283
  %2307 = vmatprep.subr.bf16.mxu0 0
  %2308 = vmatpush1.bf16.msra.mxu0 %v2284
  %2309 = vmatprep.subr.bf16.mxu0 0
  %2310 = vmatpush1.bf16.msra.mxu0 0
  %2311 = vmatprep.subr.bf16.mxu0 0
  %2312 = vmatpush1.bf16.msra.mxu0 0
  %2313 = vmatprep.subr.bf16.mxu0 0
  %2314 = vmatpush1.bf16.msra.mxu0 0
  %2315 = vmatprep.subr.bf16.mxu0 0
  %2316 = vmatpush1.bf16.msra.mxu0 0
  %2317 = vmatprep.subr.bf16.mxu0 0
  %2318 = vmatpush1.bf16.msra.mxu0 0
  %2319 = vmatprep.subr.bf16.mxu0 0
  %2320 = vmatpush1.bf16.msra.mxu0 0
  %2321 = vmatprep.subr.bf16.mxu0 0
  %2322 = vmatpush1.bf16.msra.mxu0 0
  %2323 = vmatprep.subr.bf16.mxu0 0
  %2324 = vmatpush1.bf16.msra.mxu0 0
  %2325 = vmatprep.mubr.bf16.mxu0 0
  %2326 = vmatmul.mubr.bf16.gmra.mrb[0].mxu0 %v2244
  %v2327 = vpop.f32.mrb[0].mxu0
  %v2328 = vadd.f32 0.0, %v2327
  %v2329 = vpop.f32.mrb[0].mxu0
  %v2330 = vpop.f32.mrb[0].mxu0
  %v2331 = vadd.f32 0.0, %v2330
  %v2332 = vpop.f32.mrb[0].mxu0
  %2333 = vdwg.mxu0
  %v2350 = vunpack.c.l.b16 %v2172
  %v2351 = vunpack.c.l.b16 %v2173
  %v2352 = vunpack.c.l.b16 %v2174
  %v2353 = vunpack.c.l.b16 %v2175
  %v2354 = vunpack.c.l.b16 %v2176
  %v2355 = vunpack.c.l.b16 %v2177
  %v2356 = vunpack.c.l.b16 %v2178
  %v2357 = vunpack.c.l.b16 %v2179
  %v2358 = vunpack.c.l.b16 %v2180
  %v2359 = vunpack.c.l.b16 %v2181
  %v2360 = vunpack.c.l.b16 %v2182
  %v2361 = vunpack.c.l.b16 %v2183
  %v2362 = vunpack.c.l.b16 %v2184
  %v2363 = vunpack.c.l.b16 %v2185
  %v2364 = vunpack.c.l.b16 %v2186
  %v2365 = vunpack.c.l.b16 %v2187
  %v2366 = vpack.c.b16 %v2351, %v2350
  %v2367 = vpack.c.b16 %v2353, %v2352
  %v2368 = vpack.c.b16 %v2355, %v2354
  %v2369 = vpack.c.b16 %v2357, %v2356
  %v2370 = vpack.c.b16 %v2359, %v2358
  %v2371 = vpack.c.b16 %v2361, %v2360
  %v2372 = vpack.c.b16 %v2363, %v2362
  %v2373 = vpack.c.b16 %v2365, %v2364
  %2382 = vmatprep.subr.bf16.mxu0 0
  %2383 = vmatpush1.bf16.msra.mxu0 %v2366
  %2384 = vmatprep.subr.bf16.mxu0 0
  %2385 = vmatpush1.bf16.msra.mxu0 %v2367
  %2386 = vmatprep.subr.bf16.mxu0 0
  %2387 = vmatpush1.bf16.msra.mxu0 %v2368
  %2388 = vmatprep.subr.bf16.mxu0 0
  %2389 = vmatpush1.bf16.msra.mxu0 %v2369
  %2390 = vmatprep.subr.bf16.mxu0 0
  %2391 = vmatpush1.bf16.msra.mxu0 %v2370
  %2392 = vmatprep.subr.bf16.mxu0 0
  %2393 = vmatpush1.bf16.msra.mxu0 %v2371
  %2394 = vmatprep.subr.bf16.mxu0 0
  %2395 = vmatpush1.bf16.msra.mxu0 %v2372
  %2396 = vmatprep.subr.bf16.mxu0 0
  %2397 = vmatpush1.bf16.msra.mxu0 %v2373
  %2398 = vmatprep.subr.bf16.mxu0 0
  %2399 = vmatpush1.bf16.msra.mxu0 0
  %2400 = vmatprep.subr.bf16.mxu0 0
  %2401 = vmatpush1.bf16.msra.mxu0 0
  %2402 = vmatprep.subr.bf16.mxu0 0
  %2403 = vmatpush1.bf16.msra.mxu0 0
  %2404 = vmatprep.subr.bf16.mxu0 0
  %2405 = vmatpush1.bf16.msra.mxu0 0
  %2406 = vmatprep.subr.bf16.mxu0 0
  %2407 = vmatpush1.bf16.msra.mxu0 0
  %2408 = vmatprep.subr.bf16.mxu0 0
  %2409 = vmatpush1.bf16.msra.mxu0 0
  %2410 = vmatprep.subr.bf16.mxu0 0
  %2411 = vmatpush1.bf16.msra.mxu0 0
  %2412 = vmatprep.subr.bf16.mxu0 0
  %2413 = vmatpush1.bf16.msra.mxu0 0
  %2414 = vmatprep.mubr.bf16.mxu0 0
  %2415 = vmatmul.mubr.bf16.gmra.mrb[0].mxu0 %v2243
  %v2416 = vpop.f32.mrb[0].mxu0
  %v2417 = vadd.f32 %v2328, %v2416
  %v2418 = vpop.f32.mrb[0].mxu0
  %v2419 = vpop.f32.mrb[0].mxu0
  %v2420 = vadd.f32 %v2331, %v2419
  %v2421 = vpop.f32.mrb[0].mxu0
  %2422 = vdwg.mxu0
  %v2423 = vld [vmem:[%s884] sm:$0xff]
  %v2440 = vunpack.c.l.b16 %v2204
  %v2441 = vunpack.c.l.b16 %v2205
  %v2442 = vunpack.c.l.b16 %v2206
  %v2443 = vunpack.c.l.b16 %v2207
  %v2444 = vunpack.c.l.b16 %v2208
  %v2445 = vunpack.c.l.b16 %v2209
  %v2446 = vunpack.c.l.b16 %v2210
  %v2447 = vunpack.c.l.b16 %v2211
  %v2448 = vunpack.c.l.b16 %v2212
  %v2449 = vunpack.c.l.b16 %v2213
  %v2450 = vunpack.c.l.b16 %v2214
  %v2451 = vunpack.c.l.b16 %v2215
  %v2452 = vunpack.c.l.b16 %v2216
  %v2453 = vunpack.c.l.b16 %v2217
  %v2454 = vunpack.c.l.b16 %v2218
  %v2455 = vunpack.c.l.b16 %v2219
  %v2456 = vpack.c.b16 %v2441, %v2440
  %v2457 = vpack.c.b16 %v2443, %v2442
  %v2458 = vpack.c.b16 %v2445, %v2444
  %v2459 = vpack.c.b16 %v2447, %v2446
  %v2460 = vpack.c.b16 %v2449, %v2448
  %v2461 = vpack.c.b16 %v2451, %v2450
  %v2462 = vpack.c.b16 %v2453, %v2452
  %v2463 = vpack.c.b16 %v2455, %v2454
  %2472 = vmatprep.subr.bf16.mxu0 0
  %2473 = vmatpush1.bf16.msra.mxu0 %v2456
  %2474 = vmatprep.subr.bf16.mxu0 0
  %2475 = vmatpush1.bf16.msra.mxu0 %v2457
  %2476 = vmatprep.subr.bf16.mxu0 0
  %2477 = vmatpush1.bf16.msra.mxu0 %v2458
  %2478 = vmatprep.subr.bf16.mxu0 0
  %2479 = vmatpush1.bf16.msra.mxu0 %v2459
  %2480 = vmatprep.subr.bf16.mxu0 0
  %2481 = vmatpush1.bf16.msra.mxu0 %v2460
  %2482 = vmatprep.subr.bf16.mxu0 0
  %2483 = vmatpush1.bf16.msra.mxu0 %v2461
  %2484 = vmatprep.subr.bf16.mxu0 0
  %2485 = vmatpush1.bf16.msra.mxu0 %v2462
  %2486 = vmatprep.subr.bf16.mxu0 0
  %2487 = vmatpush1.bf16.msra.mxu0 %v2463
  %2488 = vmatprep.subr.bf16.mxu0 0
  %2489 = vmatpush1.bf16.msra.mxu0 0
  %2490 = vmatprep.subr.bf16.mxu0 0
  %2491 = vmatpush1.bf16.msra.mxu0 0
  %2492 = vmatprep.subr.bf16.mxu0 0
  %2493 = vmatpush1.bf16.msra.mxu0 0
  %2494 = vmatprep.subr.bf16.mxu0 0
  %2495 = vmatpush1.bf16.msra.mxu0 0
  %2496 = vmatprep.subr.bf16.mxu0 0
  %2497 = vmatpush1.bf16.msra.mxu0 0
  %2498 = vmatprep.subr.bf16.mxu0 0
  %2499 = vmatpush1.bf16.msra.mxu0 0
  %2500 = vmatprep.subr.bf16.mxu0 0
  %2501 = vmatpush1.bf16.msra.mxu0 0
  %2502 = vmatprep.subr.bf16.mxu0 0
  %2503 = vmatpush1.bf16.msra.mxu0 0
  %2504 = vmatprep.mubr.bf16.mxu0 0
  %2505 = vmatmul.mubr.bf16.gmra.mrb[0].mxu0 %v2423
  %v2506 = vpop.f32.mrb[0].mxu0
  %v2507 = vadd.f32 0.0, %v2506
  %v2508 = vpop.f32.mrb[0].mxu0
  %v2509 = vpop.f32.mrb[0].mxu0
  %v2510 = vadd.f32 0.0, %v2509
  %v2511 = vpop.f32.mrb[0].mxu0
  %2512 = vdwg.mxu0
  %v2513 = vadd.f32 %v2417, %v2507
  %v2514 = vadd.f32 %v2420, %v2510
  %v2515 = vld [vmem:[%s1135] sm:$0xff]
  %v2532 = vunpack.c.l.b16 %v2220
  %v2533 = vunpack.c.l.b16 %v2221
  %v2534 = vunpack.c.l.b16 %v2222
  %v2535 = vunpack.c.l.b16 %v2223
  %v2536 = vunpack.c.l.b16 %v2224
  %v2537 = vunpack.c.l.b16 %v2225
  %v2538 = vunpack.c.l.b16 %v2226
  %v2539 = vunpack.c.l.b16 %v2227
  %v2540 = vunpack.c.l.b16 %v2228
  %v2541 = vunpack.c.l.b16 %v2229
  %v2542 = vunpack.c.l.b16 %v2230
  %v2543 = vunpack.c.l.b16 %v2231
  %v2544 = vunpack.c.l.b16 %v2232
  %v2545 = vunpack.c.l.b16 %v2233
  %v2546 = vunpack.c.l.b16 %v2234
  %v2547 = vunpack.c.l.b16 %v2235
  %v2548 = vpack.c.b16 %v2533, %v2532
  %v2549 = vpack.c.b16 %v2535, %v2534
  %v2550 = vpack.c.b16 %v2537, %v2536
  %v2551 = vpack.c.b16 %v2539, %v2538
  %v2552 = vpack.c.b16 %v2541, %v2540
  %v2553 = vpack.c.b16 %v2543, %v2542
  %v2554 = vpack.c.b16 %v2545, %v2544
  %v2555 = vpack.c.b16 %v2547, %v2546
  %2564 = vmatprep.subr.bf16.mxu0 0
  %2565 = vmatpush1.bf16.msra.mxu0 %v2548
  %2566 = vmatprep.subr.bf16.mxu0 0
  %2567 = vmatpush1.bf16.msra.mxu0 %v2549
  %2568 = vmatprep.subr.bf16.mxu0 0
  %2569 = vmatpush1.bf16.msra.mxu0 %v2550
  %2570 = vmatprep.subr.bf16.mxu0 0
  %2571 = vmatpush1.bf16.msra.mxu0 %v2551
  %2572 = vmatprep.subr.bf16.mxu0 0
  %2573 = vmatpush1.bf16.msra.mxu0 %v2552
  %2574 = vmatprep.subr.bf16.mxu0 0
  %2575 = vmatpush1.bf16.msra.mxu0 %v2553
  %2576 = vmatprep.subr.bf16.mxu0 0
  %2577 = vmatpush1.bf16.msra.mxu0 %v2554
  %2578 = vmatprep.subr.bf16.mxu0 0
  %2579 = vmatpush1.bf16.msra.mxu0 %v2555
  %2580 = vmatprep.subr.bf16.mxu0 0
  %2581 = vmatpush1.bf16.msra.mxu0 0
  %2582 = vmatprep.subr.bf16.mxu0 0
  %2583 = vmatpush1.bf16.msra.mxu0 0
  %2584 = vmatprep.subr.bf16.mxu0 0
  %2585 = vmatpush1.bf16.msra.mxu0 0
  %2586 = vmatprep.subr.bf16.mxu0 0
  %2587 = vmatpush1.bf16.msra.mxu0 0
  %2588 = vmatprep.subr.bf16.mxu0 0
  %2589 = vmatpush1.bf16.msra.mxu0 0
  %2590 = vmatprep.subr.bf16.mxu0 0
  %2591 = vmatpush1.bf16.msra.mxu0 0
  %2592 = vmatprep.subr.bf16.mxu0 0
  %2593 = vmatpush1.bf16.msra.mxu0 0
  %2594 = vmatprep.subr.bf16.mxu0 0
  %2595 = vmatpush1.bf16.msra.mxu0 0
  %2596 = vmatprep.mubr.bf16.mxu0 0
  %2597 = vmatmul.mubr.bf16.gmra.mrb[0].mxu0 %v2515
  %v2598 = vpop.f32.mrb[0].mxu0
  %v2599 = vadd.f32 0.0, %v2598
  %v2600 = vpop.f32.mrb[0].mxu0
  %v2601 = vpop.f32.mrb[0].mxu0
  %v2602 = vadd.f32 0.0, %v2601
  %v2603 = vpop.f32.mrb[0].mxu0
  %2604 = vdwg.mxu0
  %v2605 = vadd.f32 %v2513, %v2599
  %v2606 = vadd.f32 %v2514, %v2602
  %v2607 = vadd.f32 %v2605, %v2241
  %v2608 = vadd.f32 %v2606, %v2241
  %v2609 = vmax.f32 %v2607, 0.0
  %v2610 = vmax.f32 %v2608, 0.0
  %v2611 = vpack.c.bf16 %v2610, %v2609
  %vm2612 = vcmask 523264
  %2613 = vst.msk [vmem:[#allocation3] sm:$0xff] %vm2612, %v2611
  %v2614 = vld [vmem:[#allocation2] sm:$0xff]
  %v2615 = vld [vmem:[#allocation2 + $0x8] sm:$0xff]
  %v2616 = vld [vmem:[%s633] sm:$0xff]
  %v2617 = vld [vmem:[%s633 + $0x8] sm:$0xff]
  %2620 = vrot.lane.b32.xlu0 %v2616, 64
  %v2621 = vpop.permute.xlu0 %2620
  %2622 = vrot.lane.b32.xlu0 %v2617, 64
  %v2623 = vpop.permute.xlu0 %2622
  %vm2624 = vcmask 523264
  %v2625 = vsel %vm2624, %v2621, %v2623
  %2627 = vmatprep.subr.bf16.mxu0 0
  %2628 = vmatpush1.bf16.msra.mxu0 %v2277
  %2629 = vmatprep.subr.bf16.mxu0 0
  %2630 = vmatpush1.bf16.msra.mxu0 %v2278
  %2631 = vmatprep.subr.bf16.mxu0 0
  %2632 = vmatpush1.bf16.msra.mxu0 %v2279
  %2633 = vmatprep.subr.bf16.mxu0 0
  %2634 = vmatpush1.bf16.msra.mxu0 %v2280
  %2635 = vmatprep.subr.bf16.mxu0 0
  %2636 = vmatpush1.bf16.msra.mxu0 %v2281
  %2637 = vmatprep.subr.bf16.mxu0 0
  %2638 = vmatpush1.bf16.msra.mxu0 %v2282
  %2639 = vmatprep.subr.bf16.mxu0 0
  %2640 = vmatpush1.bf16.msra.mxu0 %v2283
  %2641 = vmatprep.subr.bf16.mxu0 0
  %2642 = vmatpush1.bf16.msra.mxu0 %v2284
  %2643 = vmatprep.subr.bf16.mxu0 0
  %2644 = vmatpush1.bf16.msra.mxu0 0
  %2645 = vmatprep.subr.bf16.mxu0 0
  %2646 = vmatpush1.bf16.msra.mxu0 0
  %2647 = vmatprep.subr.bf16.mxu0 0
  %2648 = vmatpush1.bf16.msra.mxu0 0
  %2649 = vmatprep.subr.bf16.mxu0 0
  %2650 = vmatpush1.bf16.msra.mxu0 0
  %2651 = vmatprep.subr.bf16.mxu0 0
  %2652 = vmatpush1.bf16.msra.mxu0 0
  %2653 = vmatprep.subr.bf16.mxu0 0
  %2654 = vmatpush1.bf16.msra.mxu0 0
  %2655 = vmatprep.subr.bf16.mxu0 0
  %2656 = vmatpush1.bf16.msra.mxu0 0
  %2657 = vmatprep.subr.bf16.mxu0 0
  %2658 = vmatpush1.bf16.msra.mxu0 0
  %2659 = vmatprep.mubr.bf16.mxu0 0
  %2660 = vmatmul.mubr.bf16.gmra.mrb[0].mxu0 %v2625
  %v2661 = vpop.f32.mrb[0].mxu0
  %v2662 = vadd.f32 0.0, %v2661
  %v2663 = vpop.f32.mrb[0].mxu0
  %v2664 = vpop.f32.mrb[0].mxu0
  %v2665 = vadd.f32 0.0, %v2664
  %v2666 = vpop.f32.mrb[0].mxu0
  %2667 = vdwg.mxu0
  %2670 = vrot.lane.b32.xlu0 %v2614, 64
  %v2671 = vpop.permute.xlu0 %2670
  %2672 = vrot.lane.b32.xlu0 %v2615, 64
  %v2673 = vpop.permute.xlu0 %2672
  %v2674 = vsel %vm2624, %v2671, %v2673
  %2676 = vmatprep.subr.bf16.mxu0 0
  %2677 = vmatpush1.bf16.msra.mxu0 %v2366
  %2678 = vmatprep.subr.bf16.mxu0 0
  %2679 = vmatpush1.bf16.msra.mxu0 %v2367
  %2680 = vmatprep.subr.bf16.mxu0 0
  %2681 = vmatpush1.bf16.msra.mxu0 %v2368
  %2682 = vmatprep.subr.bf16.mxu0 0
  %2683 = vmatpush1.bf16.msra.mxu0 %v2369
  %2684 = vmatprep.subr.bf16.mxu0 0
  %2685 = vmatpush1.bf16.msra.mxu0 %v2370
  %2686 = vmatprep.subr.bf16.mxu0 0
  %2687 = vmatpush1.bf16.msra.mxu0 %v2371
  %2688 = vmatprep.subr.bf16.mxu0 0
  %2689 = vmatpush1.bf16.msra.mxu0 %v2372
  %2690 = vmatprep.subr.bf16.mxu0 0
  %2691 = vmatpush1.bf16.msra.mxu0 %v2373
  %2692 = vmatprep.subr.bf16.mxu0 0
  %2693 = vmatpush1.bf16.msra.mxu0 0
  %2694 = vmatprep.subr.bf16.mxu0 0
  %2695 = vmatpush1.bf16.msra.mxu0 0
  %2696 = vmatprep.subr.bf16.mxu0 0
  %2697 = vmatpush1.bf16.msra.mxu0 0
  %2698 = vmatprep.subr.bf16.mxu0 0
  %2699 = vmatpush1.bf16.msra.mxu0 0
  %2700 = vmatprep.subr.bf16.mxu0 0
  %2701 = vmatpush1.bf16.msra.mxu0 0
  %2702 = vmatprep.subr.bf16.mxu0 0
  %2703 = vmatpush1.bf16.msra.mxu0 0
  %2704 = vmatprep.subr.bf16.mxu0 0
  %2705 = vmatpush1.bf16.msra.mxu0 0
  %2706 = vmatprep.subr.bf16.mxu0 0
  %2707 = vmatpush1.bf16.msra.mxu0 0
  %2708 = vmatprep.mubr.bf16.mxu0 0
  %2709 = vmatmul.mubr.bf16.gmra.mrb[0].mxu0 %v2674
  %v2710 = vpop.f32.mrb[0].mxu0
  %v2711 = vadd.f32 %v2662, %v2710
  %v2712 = vpop.f32.mrb[0].mxu0
  %v2713 = vpop.f32.mrb[0].mxu0
  %v2714 = vadd.f32 %v2665, %v2713
  %v2715 = vpop.f32.mrb[0].mxu0
  %2716 = vdwg.mxu0
  %v2717 = vld [vmem:[%s884] sm:$0xff]
  %v2718 = vld [vmem:[%s884 + $0x8] sm:$0xff]
  %2721 = vrot.lane.b32.xlu0 %v2717, 64
  %v2722 = vpop.permute.xlu0 %2721
  %2723 = vrot.lane.b32.xlu0 %v2718, 64
  %v2724 = vpop.permute.xlu0 %2723
  %v2725 = vsel %vm2624, %v2722, %v2724
  %2727 = vmatprep.subr.bf16.mxu0 0
  %2728 = vmatpush1.bf16.msra.mxu0 %v2456
  %2729 = vmatprep.subr.bf16.mxu0 0
  %2730 = vmatpush1.bf16.msra.mxu0 %v2457
  %2731 = vmatprep.subr.bf16.mxu0 0
  %2732 = vmatpush1.bf16.msra.mxu0 %v2458
  %2733 = vmatprep.subr.bf16.mxu0 0
  %2734 = vmatpush1.bf16.msra.mxu0 %v2459
  %2735 = vmatprep.subr.bf16.mxu0 0
  %2736 = vmatpush1.bf16.msra.mxu0 %v2460
  %2737 = vmatprep.subr.bf16.mxu0 0
  %2738 = vmatpush1.bf16.msra.mxu0 %v2461
  %2739 = vmatprep.subr.bf16.mxu0 0
  %2740 = vmatpush1.bf16.msra.mxu0 %v2462
  %2741 = vmatprep.subr.bf16.mxu0 0
  %2742 = vmatpush1.bf16.msra.mxu0 %v2463
  %2743 = vmatprep.subr.bf16.mxu0 0
  %2744 = vmatpush1.bf16.msra.mxu0 0
  %2745 = vmatprep.subr.bf16.mxu0 0
  %2746 = vmatpush1.bf16.msra.mxu0 0
  %2747 = vmatprep.subr.bf16.mxu0 0
  %2748 = vmatpush1.bf16.msra.mxu0 0
  %2749 = vmatprep.subr.bf16.mxu0 0
  %2750 = vmatpush1.bf16.msra.mxu0 0
  %2751 = vmatprep.subr.bf16.mxu0 0
  %2752 = vmatpush1.bf16.msra.mxu0 0
  %2753 = vmatprep.subr.bf16.mxu0 0
  %2754 = vmatpush1.bf16.msra.mxu0 0
  %2755 = vmatprep.subr.bf16.mxu0 0
  %2756 = vmatpush1.bf16.msra.mxu0 0
  %2757 = vmatprep.subr.bf16.mxu0 0
  %2758 = vmatpush1.bf16.msra.mxu0 0
  %2759 = vmatprep.mubr.bf16.mxu0 0
  %2760 = vmatmul.mubr.bf16.gmra.mrb[0].mxu0 %v2725
  %v2761 = vpop.f32.mrb[0].mxu0
  %v2762 = vadd.f32 0.0, %v2761
  %v2763 = vpop.f32.mrb[0].mxu0
  %v2764 = vpop.f32.mrb[0].mxu0
  %v2765 = vadd.f32 0.0, %v2764
  %v2766 = vpop.f32.mrb[0].mxu0
  %2767 = vdwg.mxu0
  %v2768 = vadd.f32 %v2711, %v2762
  %v2769 = vadd.f32 %v2714, %v2765
  %v2770 = vld [vmem:[%s1135] sm:$0xff]
  %v2771 = vld [vmem:[%s1135 + $0x8] sm:$0xff]
  %2774 = vrot.lane.b32.xlu0 %v2770, 64
  %v2775 = vpop.permute.xlu0 %2774
  %2776 = vrot.lane.b32.xlu0 %v2771, 64
  %v2777 = vpop.permute.xlu0 %2776
  %v2778 = vsel %vm2624, %v2775, %v2777
  %2780 = vmatprep.subr.bf16.mxu0 0
  %2781 = vmatpush1.bf16.msra.mxu0 %v2548
  %2782 = vmatprep.subr.bf16.mxu0 0
  %2783 = vmatpush1.bf16.msra.mxu0 %v2549
  %2784 = vmatprep.subr.bf16.mxu0 0
  %2785 = vmatpush1.bf16.msra.mxu0 %v2550
  %2786 = vmatprep.subr.bf16.mxu0 0
  %2787 = vmatpush1.bf16.msra.mxu0 %v2551
  %2788 = vmatprep.subr.bf16.mxu0 0
  %2789 = vmatpush1.bf16.msra.mxu0 %v2552
  %2790 = vmatprep.subr.bf16.mxu0 0
  %2791 = vmatpush1.bf16.msra.mxu0 %v2553
  %2792 = vmatprep.subr.bf16.mxu0 0
  %2793 = vmatpush1.bf16.msra.mxu0 %v2554
  %2794 = vmatprep.subr.bf16.mxu0 0
  %2795 = vmatpush1.bf16.msra.mxu0 %v2555
  %2796 = vmatprep.subr.bf16.mxu0 0
  %2797 = vmatpush1.bf16.msra.mxu0 0
  %2798 = vmatprep.subr.bf16.mxu0 0
  %2799 = vmatpush1.bf16.msra.mxu0 0
  %2800 = vmatprep.subr.bf16.mxu0 0
  %2801 = vmatpush1.bf16.msra.mxu0 0
  %2802 = vmatprep.subr.bf16.mxu0 0
  %2803 = vmatpush1.bf16.msra.mxu0 0
  %2804 = vmatprep.subr.bf16.mxu0 0
  %2805 = vmatpush1.bf16.msra.mxu0 0
  %2806 = vmatprep.subr.bf16.mxu0 0
  %2807 = vmatpush1.bf16.msra.mxu0 0
  %2808 = vmatprep.subr.bf16.mxu0 0
  %2809 = vmatpush1.bf16.msra.mxu0 0
  %2810 = vmatprep.subr.bf16.mxu0 0
  %2811 = vmatpush1.bf16.msra.mxu0 0
  %2812 = vmatprep.mubr.bf16.mxu0 0
  %2813 = vmatmul.mubr.bf16.gmra.mrb[0].mxu0 %v2778
  %v2814 = vpop.f32.mrb[0].mxu0
  %v2815 = vadd.f32 0.0, %v2814
  %v2816 = vpop.f32.mrb[0].mxu0
  %v2817 = vpop.f32.mrb[0].mxu0
  %v2818 = vadd.f32 0.0, %v2817
  %v2819 = vpop.f32.mrb[0].mxu0
  %2820 = vdwg.mxu0
  %v2821 = vadd.f32 %v2768, %v2815
  %v2822 = vadd.f32 %v2769, %v2818
  %v2823 = vadd.f32 %v2821, %v2241
  %v2824 = vadd.f32 %v2822, %v2241
  %v2825 = vmax.f32 %v2823, 0.0
  %v2826 = vmax.f32 %v2824, 0.0
  %v2827 = vpack.c.bf16 %v2826, %v2825
  %2829 = vrot.lane.b32.xlu0 %v2827, 64
  %v2830 = vpop.permute.xlu0 %2829
  %vm2832 = vcmask 1048064
  %2833 = vst.msk [vmem:[#allocation3] sm:$0xff] %vm2832, %v2830
  %v2834 = vld [vmem:[#allocation2 + $0x8] sm:$0xff]
  %v2835 = vld [vmem:[%s633 + $0x8] sm:$0xff]
  %2836 = vmatprep.subr.bf16.mxu0 0
  %2837 = vmatpush1.bf16.msra.mxu0 %v2277
  %2838 = vmatprep.subr.bf16.mxu0 0
  %2839 = vmatpush1.bf16.msra.mxu0 %v2278
  %2840 = vmatprep.subr.bf16.mxu0 0
  %2841 = vmatpush1.bf16.msra.mxu0 %v2279
  %2842 = vmatprep.subr.bf16.mxu0 0
  %2843 = vmatpush1.bf16.msra.mxu0 %v2280
  %2844 = vmatprep.subr.bf16.mxu0 0
  %2845 = vmatpush1.bf16.msra.mxu0 %v2281
  %2846 = vmatprep.subr.bf16.mxu0 0
  %2847 = vmatpush1.bf16.msra.mxu0 %v2282
  %2848 = vmatprep.subr.bf16.mxu0 0
  %2849 = vmatpush1.bf16.msra.mxu0 %v2283
  %2850 = vmatprep.subr.bf16.mxu0 0
  %2851 = vmatpush1.bf16.msra.mxu0 %v2284
  %2852 = vmatprep.subr.bf16.mxu0 0
  %2853 = vmatpush1.bf16.msra.mxu0 0
  %2854 = vmatprep.subr.bf16.mxu0 0
  %2855 = vmatpush1.bf16.msra.mxu0 0
  %2856 = vmatprep.subr.bf16.mxu0 0
  %2857 = vmatpush1.bf16.msra.mxu0 0
  %2858 = vmatprep.subr.bf16.mxu0 0
  %2859 = vmatpush1.bf16.msra.mxu0 0
  %2860 = vmatprep.subr.bf16.mxu0 0
  %2861 = vmatpush1.bf16.msra.mxu0 0
  %2862 = vmatprep.subr.bf16.mxu0 0
  %2863 = vmatpush1.bf16.msra.mxu0 0
  %2864 = vmatprep.subr.bf16.mxu0 0
  %2865 = vmatpush1.bf16.msra.mxu0 0
  %2866 = vmatprep.subr.bf16.mxu0 0
  %2867 = vmatpush1.bf16.msra.mxu0 0
  %2868 = vmatprep.mubr.bf16.mxu0 0
  %2869 = vmatmul.mubr.bf16.gmra.mrb[0].mxu0 %v2835
  %v2870 = vpop.f32.mrb[0].mxu0
  %v2871 = vadd.f32 0.0, %v2870
  %v2872 = vpop.f32.mrb[0].mxu0
  %v2873 = vpop.f32.mrb[0].mxu0
  %v2874 = vadd.f32 0.0, %v2873
  %v2875 = vpop.f32.mrb[0].mxu0
  %2876 = vdwg.mxu0
  %2877 = vmatprep.subr.bf16.mxu0 0
  %2878 = vmatpush1.bf16.msra.mxu0 %v2366
  %2879 = vmatprep.subr.bf16.mxu0 0
  %2880 = vmatpush1.bf16.msra.mxu0 %v2367
  %2881 = vmatprep.subr.bf16.mxu0 0
  %2882 = vmatpush1.bf16.msra.mxu0 %v2368
  %2883 = vmatprep.subr.bf16.mxu0 0
  %2884 = vmatpush1.bf16.msra.mxu0 %v2369
  %2885 = vmatprep.subr.bf16.mxu0 0
  %2886 = vmatpush1.bf16.msra.mxu0 %v2370
  %2887 = vmatprep.subr.bf16.mxu0 0
  %2888 = vmatpush1.bf16.msra.mxu0 %v2371
  %2889 = vmatprep.subr.bf16.mxu0 0
  %2890 = vmatpush1.bf16.msra.mxu0 %v2372
  %2891 = vmatprep.subr.bf16.mxu0 0
  %2892 = vmatpush1.bf16.msra.mxu0 %v2373
  %2893 = vmatprep.subr.bf16.mxu0 0
  %2894 = vmatpush1.bf16.msra.mxu0 0
  %2895 = vmatprep.subr.bf16.mxu0 0
  %2896 = vmatpush1.bf16.msra.mxu0 0
  %2897 = vmatprep.subr.bf16.mxu0 0
  %2898 = vmatpush1.bf16.msra.mxu0 0
  %2899 = vmatprep.subr.bf16.mxu0 0
  %2900 = vmatpush1.bf16.msra.mxu0 0
  %2901 = vmatprep.subr.bf16.mxu0 0
  %2902 = vmatpush1.bf16.msra.mxu0 0
  %2903 = vmatprep.subr.bf16.mxu0 0
  %2904 = vmatpush1.bf16.msra.mxu0 0
  %2905 = vmatprep.subr.bf16.mxu0 0
  %2906 = vmatpush1.bf16.msra.mxu0 0
  %2907 = vmatprep.subr.bf16.mxu0 0
  %2908 = vmatpush1.bf16.msra.mxu0 0
  %2909 = vmatprep.mubr.bf16.mxu0 0
  %2910 = vmatmul.mubr.bf16.gmra.mrb[0].mxu0 %v2834
  %v2911 = vpop.f32.mrb[0].mxu0
  %v2912 = vadd.f32 %v2871, %v2911
  %v2913 = vpop.f32.mrb[0].mxu0
  %v2914 = vpop.f32.mrb[0].mxu0
  %v2915 = vadd.f32 %v2874, %v2914
  %v2916 = vpop.f32.mrb[0].mxu0
  %2917 = vdwg.mxu0
  %v2918 = vld [vmem:[%s884 + $0x8] sm:$0xff]
  %2919 = vmatprep.subr.bf16.mxu0 0
  %2920 = vmatpush1.bf16.msra.mxu0 %v2456
  %2921 = vmatprep.subr.bf16.mxu0 0
  %2922 = vmatpush1.bf16.msra.mxu0 %v2457
  %2923 = vmatprep.subr.bf16.mxu0 0
  %2924 = vmatpush1.bf16.msra.mxu0 %v2458
  %2925 = vmatprep.subr.bf16.mxu0 0
  %2926 = vmatpush1.bf16.msra.mxu0 %v2459
  %2927 = vmatprep.subr.bf16.mxu0 0
  %2928 = vmatpush1.bf16.msra.mxu0 %v2460
  %2929 = vmatprep.subr.bf16.mxu0 0
  %2930 = vmatpush1.bf16.msra.mxu0 %v2461
  %2931 = vmatprep.subr.bf16.mxu0 0
  %2932 = vmatpush1.bf16.msra.mxu0 %v2462
  %2933 = vmatprep.subr.bf16.mxu0 0
  %2934 = vmatpush1.bf16.msra.mxu0 %v2463
  %2935 = vmatprep.subr.bf16.mxu0 0
  %2936 = vmatpush1.bf16.msra.mxu0 0
  %2937 = vmatprep.subr.bf16.mxu0 0
  %2938 = vmatpush1.bf16.msra.mxu0 0
  %2939 = vmatprep.subr.bf16.mxu0 0
  %2940 = vmatpush1.bf16.msra.mxu0 0
  %2941 = vmatprep.subr.bf16.mxu0 0
  %2942 = vmatpush1.bf16.msra.mxu0 0
  %2943 = vmatprep.subr.bf16.mxu0 0
  %2944 = vmatpush1.bf16.msra.mxu0 0
  %2945 = vmatprep.subr.bf16.mxu0 0
  %2946 = vmatpush1.bf16.msra.mxu0 0
  %2947 = vmatprep.subr.bf16.mxu0 0
  %2948 = vmatpush1.bf16.msra.mxu0 0
  %2949 = vmatprep.subr.bf16.mxu0 0
  %2950 = vmatpush1.bf16.msra.mxu0 0
  %2951 = vmatprep.mubr.bf16.mxu0 0
  %2952 = vmatmul.mubr.bf16.gmra.mrb[0].mxu0 %v2918
  %v2953 = vpop.f32.mrb[0].mxu0
  %v2954 = vadd.f32 0.0, %v2953
  %v2955 = vpop.f32.mrb[0].mxu0
  %v2956 = vpop.f32.mrb[0].mxu0
  %v2957 = vadd.f32 0.0, %v2956
  %v2958 = vpop.f32.mrb[0].mxu0
  %2959 = vdwg.mxu0
  %v2960 = vadd.f32 %v2912, %v2954
  %v2961 = vadd.f32 %v2915, %v2957
  %v2962 = vld [vmem:[%s1135 + $0x8] sm:$0xff]
  %2963 = vmatprep.subr.bf16.mxu0 0
  %2964 = vmatpush1.bf16.msra.mxu0 %v2548
  %2965 = vmatprep.subr.bf16.mxu0 0
  %2966 = vmatpush1.bf16.msra.mxu0 %v2549
  %2967 = vmatprep.subr.bf16.mxu0 0
  %2968 = vmatpush1.bf16.msra.mxu0 %v2550
  %2969 = vmatprep.subr.bf16.mxu0 0
  %2970 = vmatpush1.bf16.msra.mxu0 %v2551
  %2971 = vmatprep.subr.bf16.mxu0 0
  %2972 = vmatpush1.bf16.msra.mxu0 %v2552
  %2973 = vmatprep.subr.bf16.mxu0 0
  %2974 = vmatpush1.bf16.msra.mxu0 %v2553
  %2975 = vmatprep.subr.bf16.mxu0 0
  %2976 = vmatpush1.bf16.msra.mxu0 %v2554
  %2977 = vmatprep.subr.bf16.mxu0 0
  %2978 = vmatpush1.bf16.msra.mxu0 %v2555
  %2979 = vmatprep.subr.bf16.mxu0 0
  %2980 = vmatpush1.bf16.msra.mxu0 0
  %2981 = vmatprep.subr.bf16.mxu0 0
  %2982 = vmatpush1.bf16.msra.mxu0 0
  %2983 = vmatprep.subr.bf16.mxu0 0
  %2984 = vmatpush1.bf16.msra.mxu0 0
  %2985 = vmatprep.subr.bf16.mxu0 0
  %2986 = vmatpush1.bf16.msra.mxu0 0
  %2987 = vmatprep.subr.bf16.mxu0 0
  %2988 = vmatpush1.bf16.msra.mxu0 0
  %2989 = vmatprep.subr.bf16.mxu0 0
  %2990 = vmatpush1.bf16.msra.mxu0 0
  %2991 = vmatprep.subr.bf16.mxu0 0
  %2992 = vmatpush1.bf16.msra.mxu0 0
  %2993 = vmatprep.subr.bf16.mxu0 0
  %2994 = vmatpush1.bf16.msra.mxu0 0
  %2995 = vmatprep.mubr.bf16.mxu0 0
  %2996 = vmatmul.mubr.bf16.gmra.mrb[0].mxu0 %v2962
  %v2997 = vpop.f32.mrb[0].mxu0
  %v2998 = vadd.f32 0.0, %v2997
  %v2999 = vpop.f32.mrb[0].mxu0
  %v3000 = vpop.f32.mrb[0].mxu0
  %v3001 = vadd.f32 0.0, %v3000
  %v3002 = vpop.f32.mrb[0].mxu0
  %3003 = vdwg.mxu0
  %v3004 = vadd.f32 %v2960, %v2998
  %v3005 = vadd.f32 %v2961, %v3001
  %v3006 = vadd.f32 %v3004, %v2241
  %v3007 = vadd.f32 %v3005, %v2241
  %v3008 = vmax.f32 %v3006, 0.0
  %v3009 = vmax.f32 %v3007, 0.0
  %v3010 = vpack.c.bf16 %v3009, %v3008
  %3011 = vst.msk [vmem:[#allocation3 + $0x8] sm:$0xff] %vm2612, %v3010
  %v3012 = vld [vmem:[%s884] sm:$0xff]
  %v3013 = vld [vmem:[%s1135] sm:$0xff]
  %3014 = vmatprep.subr.bf16.mxu0 0
  %3015 = vmatpush1.bf16.msra.mxu0 %v2277
  %3016 = vmatprep.subr.bf16.mxu0 0
  %3017 = vmatpush1.bf16.msra.mxu0 %v2278
  %3018 = vmatprep.subr.bf16.mxu0 0
  %3019 = vmatpush1.bf16.msra.mxu0 %v2279
  %3020 = vmatprep.subr.bf16.mxu0 0
  %3021 = vmatpush1.bf16.msra.mxu0 %v2280
  %3022 = vmatprep.subr.bf16.mxu0 0
  %3023 = vmatpush1.bf16.msra.mxu0 %v2281
  %3024 = vmatprep.subr.bf16.mxu0 0
  %3025 = vmatpush1.bf16.msra.mxu0 %v2282
  %3026 = vmatprep.subr.bf16.mxu0 0
  %3027 = vmatpush1.bf16.msra.mxu0 %v2283
  %3028 = vmatprep.subr.bf16.mxu0 0
  %3029 = vmatpush1.bf16.msra.mxu0 %v2284
  %3030 = vmatprep.subr.bf16.mxu0 0
  %3031 = vmatpush1.bf16.msra.mxu0 0
  %3032 = vmatprep.subr.bf16.mxu0 0
  %3033 = vmatpush1.bf16.msra.mxu0 0
  %3034 = vmatprep.subr.bf16.mxu0 0
  %3035 = vmatpush1.bf16.msra.mxu0 0
  %3036 = vmatprep.subr.bf16.mxu0 0
  %3037 = vmatpush1.bf16.msra.mxu0 0
  %3038 = vmatprep.subr.bf16.mxu0 0
  %3039 = vmatpush1.bf16.msra.mxu0 0
  %3040 = vmatprep.subr.bf16.mxu0 0
  %3041 = vmatpush1.bf16.msra.mxu0 0
  %3042 = vmatprep.subr.bf16.mxu0 0
  %3043 = vmatpush1.bf16.msra.mxu0 0
  %3044 = vmatprep.subr.bf16.mxu0 0
  %3045 = vmatpush1.bf16.msra.mxu0 0
  %3046 = vmatprep.mubr.bf16.mxu0 0
  %3047 = vmatmul.mubr.bf16.gmra.mrb[0].mxu0 %v3013
  %v3048 = vpop.f32.mrb[0].mxu0
  %v3049 = vadd.f32 0.0, %v3048
  %v3050 = vpop.f32.mrb[0].mxu0
  %v3051 = vpop.f32.mrb[0].mxu0
  %v3052 = vadd.f32 0.0, %v3051
  %v3053 = vpop.f32.mrb[0].mxu0
  %3054 = vdwg.mxu0
  %3055 = vmatprep.subr.bf16.mxu0 0
  %3056 = vmatpush1.bf16.msra.mxu0 %v2366
  %3057 = vmatprep.subr.bf16.mxu0 0
  %3058 = vmatpush1.bf16.msra.mxu0 %v2367
  %3059 = vmatprep.subr.bf16.mxu0 0
  %3060 = vmatpush1.bf16.msra.mxu0 %v2368
  %3061 = vmatprep.subr.bf16.mxu0 0
  %3062 = vmatpush1.bf16.msra.mxu0 %v2369
  %3063 = vmatprep.subr.bf16.mxu0 0
  %3064 = vmatpush1.bf16.msra.mxu0 %v2370
  %3065 = vmatprep.subr.bf16.mxu0 0
  %3066 = vmatpush1.bf16.msra.mxu0 %v2371
  %3067 = vmatprep.subr.bf16.mxu0 0
  %3068 = vmatpush1.bf16.msra.mxu0 %v2372
  %3069 = vmatprep.subr.bf16.mxu0 0
  %3070 = vmatpush1.bf16.msra.mxu0 %v2373
  %3071 = vmatprep.subr.bf16.mxu0 0
  %3072 = vmatpush1.bf16.msra.mxu0 0
  %3073 = vmatprep.subr.bf16.mxu0 0
  %3074 = vmatpush1.bf16.msra.mxu0 0
  %3075 = vmatprep.subr.bf16.mxu0 0
  %3076 = vmatpush1.bf16.msra.mxu0 0
  %3077 = vmatprep.subr.bf16.mxu0 0
  %3078 = vmatpush1.bf16.msra.mxu0 0
  %3079 = vmatprep.subr.bf16.mxu0 0
  %3080 = vmatpush1.bf16.msra.mxu0 0
  %3081 = vmatprep.subr.bf16.mxu0 0
  %3082 = vmatpush1.bf16.msra.mxu0 0
  %3083 = vmatprep.subr.bf16.mxu0 0
  %3084 = vmatpush1.bf16.msra.mxu0 0
  %3085 = vmatprep.subr.bf16.mxu0 0
  %3086 = vmatpush1.bf16.msra.mxu0 0
  %3087 = vmatprep.mubr.bf16.mxu0 0
  %3088 = vmatmul.mubr.bf16.gmra.mrb[0].mxu0 %v3012
  %v3089 = vpop.f32.mrb[0].mxu0
  %v3090 = vadd.f32 %v3049, %v3089
  %v3091 = vpop.f32.mrb[0].mxu0
  %v3092 = vpop.f32.mrb[0].mxu0
  %v3093 = vadd.f32 %v3052, %v3092
  %v3094 = vpop.f32.mrb[0].mxu0
  %3095 = vdwg.mxu0
  %v3096 = vld [vmem:[%s1386] sm:$0xff]
  %3097 = vmatprep.subr.bf16.mxu0 0
  %3098 = vmatpush1.bf16.msra.mxu0 %v2456
  %3099 = vmatprep.subr.bf16.mxu0 0
  %3100 = vmatpush1.bf16.msra.mxu0 %v2457
  %3101 = vmatprep.subr.bf16.mxu0 0
  %3102 = vmatpush1.bf16.msra.mxu0 %v2458
  %3103 = vmatprep.subr.bf16.mxu0 0
  %3104 = vmatpush1.bf16.msra.mxu0 %v2459
  %3105 = vmatprep.subr.bf16.mxu0 0
  %3106 = vmatpush1.bf16.msra.mxu0 %v2460
  %3107 = vmatprep.subr.bf16.mxu0 0
  %3108 = vmatpush1.bf16.msra.mxu0 %v2461
  %3109 = vmatprep.subr.bf16.mxu0 0
  %3110 = vmatpush1.bf16.msra.mxu0 %v2462
  %3111 = vmatprep.subr.bf16.mxu0 0
  %3112 = vmatpush1.bf16.msra.mxu0 %v2463
  %3113 = vmatprep.subr.bf16.mxu0 0
  %3114 = vmatpush1.bf16.msra.mxu0 0
  %3115 = vmatprep.subr.bf16.mxu0 0
  %3116 = vmatpush1.bf16.msra.mxu0 0
  %3117 = vmatprep.subr.bf16.mxu0 0
  %3118 = vmatpush1.bf16.msra.mxu0 0
  %3119 = vmatprep.subr.bf16.mxu0 0
  %3120 = vmatpush1.bf16.msra.mxu0 0
  %3121 = vmatprep.subr.bf16.mxu0 0
  %3122 = vmatpush1.bf16.msra.mxu0 0
  %3123 = vmatprep.subr.bf16.mxu0 0
  %3124 = vmatpush1.bf16.msra.mxu0 0
  %3125 = vmatprep.subr.bf16.mxu0 0
  %3126 = vmatpush1.bf16.msra.mxu0 0
  %3127 = vmatprep.subr.bf16.mxu0 0
  %3128 = vmatpush1.bf16.msra.mxu0 0
  %3129 = vmatprep.mubr.bf16.mxu0 0
  %3130 = vmatmul.mubr.bf16.gmra.mrb[0].mxu0 %v3096
  %v3131 = vpop.f32.mrb[0].mxu0
  %v3132 = vadd.f32 0.0, %v3131
  %v3133 = vpop.f32.mrb[0].mxu0
  %v3134 = vpop.f32.mrb[0].mxu0
  %v3135 = vadd.f32 0.0, %v3134
  %v3136 = vpop.f32.mrb[0].mxu0
  %3137 = vdwg.mxu0
  %v3138 = vadd.f32 %v3090, %v3132
  %v3139 = vadd.f32 %v3093, %v3135
  %v3140 = vld [vmem:[%s1637] sm:$0xff]
  %3141 = vmatprep.subr.bf16.mxu0 0
  %3142 = vmatpush1.bf16.msra.mxu0 %v2548
  %3143 = vmatprep.subr.bf16.mxu0 0
  %3144 = vmatpush1.bf16.msra.mxu0 %v2549
  %3145 = vmatprep.subr.bf16.mxu0 0
  %3146 = vmatpush1.bf16.msra.mxu0 %v2550
  %3147 = vmatprep.subr.bf16.mxu0 0
  %3148 = vmatpush1.bf16.msra.mxu0 %v2551
  %3149 = vmatprep.subr.bf16.mxu0 0
  %3150 = vmatpush1.bf16.msra.mxu0 %v2552
  %3151 = vmatprep.subr.bf16.mxu0 0
  %3152 = vmatpush1.bf16.msra.mxu0 %v2553
  %3153 = vmatprep.subr.bf16.mxu0 0
  %3154 = vmatpush1.bf16.msra.mxu0 %v2554
  %3155 = vmatprep.subr.bf16.mxu0 0
  %3156 = vmatpush1.bf16.msra.mxu0 %v2555
  %3157 = vmatprep.subr.bf16.mxu0 0
  %3158 = vmatpush1.bf16.msra.mxu0 0
  %3159 = vmatprep.subr.bf16.mxu0 0
  %3160 = vmatpush1.bf16.msra.mxu0 0
  %3161 = vmatprep.subr.bf16.mxu0 0
  %3162 = vmatpush1.bf16.msra.mxu0 0
  %3163 = vmatprep.subr.bf16.mxu0 0
  %3164 = vmatpush1.bf16.msra.mxu0 0
  %3165 = vmatprep.subr.bf16.mxu0 0
  %3166 = vmatpush1.bf16.msra.mxu0 0
  %3167 = vmatprep.subr.bf16.mxu0 0
  %3168 = vmatpush1.bf16.msra.mxu0 0
  %3169 = vmatprep.subr.bf16.mxu0 0
  %3170 = vmatpush1.bf16.msra.mxu0 0
  %3171 = vmatprep.subr.bf16.mxu0 0
  %3172 = vmatpush1.bf16.msra.mxu0 0
  %3173 = vmatprep.mubr.bf16.mxu0 0
  %3174 = vmatmul.mubr.bf16.gmra.mrb[0].mxu0 %v3140
  %v3175 = vpop.f32.mrb[0].mxu0
  %v3176 = vadd.f32 0.0, %v3175
  %v3177 = vpop.f32.mrb[0].mxu0
  %v3178 = vpop.f32.mrb[0].mxu0
  %v3179 = vadd.f32 0.0, %v3178
  %v3180 = vpop.f32.mrb[0].mxu0
  %3181 = vdwg.mxu0
  %v3182 = vadd.f32 %v3138, %v3176
  %v3183 = vadd.f32 %v3139, %v3179
  %v3184 = vadd.f32 %v3182, %v2241
  %v3185 = vadd.f32 %v3183, %v2241
  %v3186 = vmax.f32 %v3184, 0.0
  %v3187 = vmax.f32 %v3185, 0.0
  %v3188 = vpack.c.bf16 %v3187, %v3186
  %s3189 = scalar_lea.vmem [#allocation3], 16
  %3190 = vst.msk [vmem:[%s3189] sm:$0xff] %vm2612, %v3188
  %v3191 = vld [vmem:[%s884] sm:$0xff]
  %v3192 = vld [vmem:[%s884 + $0x8] sm:$0xff]
  %v3193 = vld [vmem:[%s1135] sm:$0xff]
  %v3194 = vld [vmem:[%s1135 + $0x8] sm:$0xff]
  %3197 = vrot.lane.b32.xlu0 %v3193, 64
  %v3198 = vpop.permute.xlu0 %3197
  %3199 = vrot.lane.b32.xlu0 %v3194, 64
  %v3200 = vpop.permute.xlu0 %3199
  %v3201 = vsel %vm2624, %v3198, %v3200
  %3203 = vmatprep.subr.bf16.mxu0 0
  %3204 = vmatpush1.bf16.msra.mxu0 %v2277
  %3205 = vmatprep.subr.bf16.mxu0 0
  %3206 = vmatpush1.bf16.msra.mxu0 %v2278
  %3207 = vmatprep.subr.bf16.mxu0 0
  %3208 = vmatpush1.bf16.msra.mxu0 %v2279
  %3209 = vmatprep.subr.bf16.mxu0 0
  %3210 = vmatpush1.bf16.msra.mxu0 %v2280
  %3211 = vmatprep.subr.bf16.mxu0 0
  %3212 = vmatpush1.bf16.msra.mxu0 %v2281
  %3213 = vmatprep.subr.bf16.mxu0 0
  %3214 = vmatpush1.bf16.msra.mxu0 %v2282
  %3215 = vmatprep.subr.bf16.mxu0 0
  %3216 = vmatpush1.bf16.msra.mxu0 %v2283
  %3217 = vmatprep.subr.bf16.mxu0 0
  %3218 = vmatpush1.bf16.msra.mxu0 %v2284
  %3219 = vmatprep.subr.bf16.mxu0 0
  %3220 = vmatpush1.bf16.msra.mxu0 0
  %3221 = vmatprep.subr.bf16.mxu0 0
  %3222 = vmatpush1.bf16.msra.mxu0 0
  %3223 = vmatprep.subr.bf16.mxu0 0
  %3224 = vmatpush1.bf16.msra.mxu0 0
  %3225 = vmatprep.subr.bf16.mxu0 0
  %3226 = vmatpush1.bf16.msra.mxu0 0
  %3227 = vmatprep.subr.bf16.mxu0 0
  %3228 = vmatpush1.bf16.msra.mxu0 0
  %3229 = vmatprep.subr.bf16.mxu0 0
  %3230 = vmatpush1.bf16.msra.mxu0 0
  %3231 = vmatprep.subr.bf16.mxu0 0
  %3232 = vmatpush1.bf16.msra.mxu0 0
  %3233 = vmatprep.subr.bf16.mxu0 0
  %3234 = vmatpush1.bf16.msra.mxu0 0
  %3235 = vmatprep.mubr.bf16.mxu0 0
  %3236 = vmatmul.mubr.bf16.gmra.mrb[0].mxu0 %v3201
  %v3237 = vpop.f32.mrb[0].mxu0
  %v3238 = vadd.f32 0.0, %v3237
  %v3239 = vpop.f32.mrb[0].mxu0
  %v3240 = vpop.f32.mrb[0].mxu0
  %v3241 = vadd.f32 0.0, %v3240
  %v3242 = vpop.f32.mrb[0].mxu0
  %3243 = vdwg.mxu0
  %3246 = vrot.lane.b32.xlu0 %v3191, 64
  %v3247 = vpop.permute.xlu0 %3246
  %3248 = vrot.lane.b32.xlu0 %v3192, 64
  %v3249 = vpop.permute.xlu0 %3248
  %v3250 = vsel %vm2624, %v3247, %v3249
  %3252 = vmatprep.subr.bf16.mxu0 0
  %3253 = vmatpush1.bf16.msra.mxu0 %v2366
  %3254 = vmatprep.subr.bf16.mxu0 0
  %3255 = vmatpush1.bf16.msra.mxu0 %v2367
  %3256 = vmatprep.subr.bf16.mxu0 0
  %3257 = vmatpush1.bf16.msra.mxu0 %v2368
  %3258 = vmatprep.subr.bf16.mxu0 0
  %3259 = vmatpush1.bf16.msra.mxu0 %v2369
  %3260 = vmatprep.subr.bf16.mxu0 0
  %3261 = vmatpush1.bf16.msra.mxu0 %v2370
  %3262 = vmatprep.subr.bf16.mxu0 0
  %3263 = vmatpush1.bf16.msra.mxu0 %v2371
  %3264 = vmatprep.subr.bf16.mxu0 0
  %3265 = vmatpush1.bf16.msra.mxu0 %v2372
  %3266 = vmatprep.subr.bf16.mxu0 0
  %3267 = vmatpush1.bf16.msra.mxu0 %v2373
  %3268 = vmatprep.subr.bf16.mxu0 0
  %3269 = vmatpush1.bf16.msra.mxu0 0
  %3270 = vmatprep.subr.bf16.mxu0 0
  %3271 = vmatpush1.bf16.msra.mxu0 0
  %3272 = vmatprep.subr.bf16.mxu0 0
  %3273 = vmatpush1.bf16.msra.mxu0 0
  %3274 = vmatprep.subr.bf16.mxu0 0
  %3275 = vmatpush1.bf16.msra.mxu0 0
  %3276 = vmatprep.subr.bf16.mxu0 0
  %3277 = vmatpush1.bf16.msra.mxu0 0
  %3278 = vmatprep.subr.bf16.mxu0 0
  %3279 = vmatpush1.bf16.msra.mxu0 0
  %3280 = vmatprep.subr.bf16.mxu0 0
  %3281 = vmatpush1.bf16.msra.mxu0 0
  %3282 = vmatprep.subr.bf16.mxu0 0
  %3283 = vmatpush1.bf16.msra.mxu0 0
  %3284 = vmatprep.mubr.bf16.mxu0 0
  %3285 = vmatmul.mubr.bf16.gmra.mrb[0].mxu0 %v3250
  %v3286 = vpop.f32.mrb[0].mxu0
  %v3287 = vadd.f32 %v3238, %v3286
  %v3288 = vpop.f32.mrb[0].mxu0
  %v3289 = vpop.f32.mrb[0].mxu0
  %v3290 = vadd.f32 %v3241, %v3289
  %v3291 = vpop.f32.mrb[0].mxu0
  %3292 = vdwg.mxu0
  %v3293 = vld [vmem:[%s1386] sm:$0xff]
  %v3294 = vld [vmem:[%s1386 + $0x8] sm:$0xff]
  %3297 = vrot.lane.b32.xlu0 %v3293, 64
  %v3298 = vpop.permute.xlu0 %3297
  %3299 = vrot.lane.b32.xlu0 %v3294, 64
  %v3300 = vpop.permute.xlu0 %3299
  %v3301 = vsel %vm2624, %v3298, %v3300
  %3303 = vmatprep.subr.bf16.mxu0 0
  %3304 = vmatpush1.bf16.msra.mxu0 %v2456
  %3305 = vmatprep.subr.bf16.mxu0 0
  %3306 = vmatpush1.bf16.msra.mxu0 %v2457
  %3307 = vmatprep.subr.bf16.mxu0 0
  %3308 = vmatpush1.bf16.msra.mxu0 %v2458
  %3309 = vmatprep.subr.bf16.mxu0 0
  %3310 = vmatpush1.bf16.msra.mxu0 %v2459
  %3311 = vmatprep.subr.bf16.mxu0 0
  %3312 = vmatpush1.bf16.msra.mxu0 %v2460
  %3313 = vmatprep.subr.bf16.mxu0 0
  %3314 = vmatpush1.bf16.msra.mxu0 %v2461
  %3315 = vmatprep.subr.bf16.mxu0 0
  %3316 = vmatpush1.bf16.msra.mxu0 %v2462
  %3317 = vmatprep.subr.bf16.mxu0 0
  %3318 = vmatpush1.bf16.msra.mxu0 %v2463
  %3319 = vmatprep.subr.bf16.mxu0 0
  %3320 = vmatpush1.bf16.msra.mxu0 0
  %3321 = vmatprep.subr.bf16.mxu0 0
  %3322 = vmatpush1.bf16.msra.mxu0 0
  %3323 = vmatprep.subr.bf16.mxu0 0
  %3324 = vmatpush1.bf16.msra.mxu0 0
  %3325 = vmatprep.subr.bf16.mxu0 0
  %3326 = vmatpush1.bf16.msra.mxu0 0
  %3327 = vmatprep.subr.bf16.mxu0 0
  %3328 = vmatpush1.bf16.msra.mxu0 0
  %3329 = vmatprep.subr.bf16.mxu0 0
  %3330 = vmatpush1.bf16.msra.mxu0 0
  %3331 = vmatprep.subr.bf16.mxu0 0
  %3332 = vmatpush1.bf16.msra.mxu0 0
  %3333 = vmatprep.subr.bf16.mxu0 0
  %3334 = vmatpush1.bf16.msra.mxu0 0
  %3335 = vmatprep.mubr.bf16.mxu0 0
  %3336 = vmatmul.mubr.bf16.gmra.mrb[0].mxu0 %v3301
  %v3337 = vpop.f32.mrb[0].mxu0
  %v3338 = vadd.f32 0.0, %v3337
  %v3339 = vpop.f32.mrb[0].mxu0
  %v3340 = vpop.f32.mrb[0].mxu0
  %v3341 = vadd.f32 0.0, %v3340
  %v3342 = vpop.f32.mrb[0].mxu0
  %3343 = vdwg.mxu0
  %v3344 = vadd.f32 %v3287, %v3338
  %v3345 = vadd.f32 %v3290, %v3341
  %v3346 = vld [vmem:[%s1637] sm:$0xff]
  %v3347 = vld [vmem:[%s1637 + $0x8] sm:$0xff]
  %3350 = vrot.lane.b32.xlu0 %v3346, 64
  %v3351 = vpop.permute.xlu0 %3350
  %3352 = vrot.lane.b32.xlu0 %v3347, 64
  %v3353 = vpop.permute.xlu0 %3352
  %v3354 = vsel %vm2624, %v3351, %v3353
  %3356 = vmatprep.subr.bf16.mxu0 0
  %3357 = vmatpush1.bf16.msra.mxu0 %v2548
  %3358 = vmatprep.subr.bf16.mxu0 0
  %3359 = vmatpush1.bf16.msra.mxu0 %v2549
  %3360 = vmatprep.subr.bf16.mxu0 0
  %3361 = vmatpush1.bf16.msra.mxu0 %v2550
  %3362 = vmatprep.subr.bf16.mxu0 0
  %3363 = vmatpush1.bf16.msra.mxu0 %v2551
  %3364 = vmatprep.subr.bf16.mxu0 0
  %3365 = vmatpush1.bf16.msra.mxu0 %v2552
  %3366 = vmatprep.subr.bf16.mxu0 0
  %3367 = vmatpush1.bf16.msra.mxu0 %v2553
  %3368 = vmatprep.subr.bf16.mxu0 0
  %3369 = vmatpush1.bf16.msra.mxu0 %v2554
  %3370 = vmatprep.subr.bf16.mxu0 0
  %3371 = vmatpush1.bf16.msra.mxu0 %v2555
  %3372 = vmatprep.subr.bf16.mxu0 0
  %3373 = vmatpush1.bf16.msra.mxu0 0
  %3374 = vmatprep.subr.bf16.mxu0 0
  %3375 = vmatpush1.bf16.msra.mxu0 0
  %3376 = vmatprep.subr.bf16.mxu0 0
  %3377 = vmatpush1.bf16.msra.mxu0 0
  %3378 = vmatprep.subr.bf16.mxu0 0
  %3379 = vmatpush1.bf16.msra.mxu0 0
  %3380 = vmatprep.subr.bf16.mxu0 0
  %3381 = vmatpush1.bf16.msra.mxu0 0
  %3382 = vmatprep.subr.bf16.mxu0 0
  %3383 = vmatpush1.bf16.msra.mxu0 0
  %3384 = vmatprep.subr.bf16.mxu0 0
  %3385 = vmatpush1.bf16.msra.mxu0 0
  %3386 = vmatprep.subr.bf16.mxu0 0
  %3387 = vmatpush1.bf16.msra.mxu0 0
  %3388 = vmatprep.mubr.bf16.mxu0 0
  %3389 = vmatmul.mubr.bf16.gmra.mrb[0].mxu0 %v3354
  %v3390 = vpop.f32.mrb[0].mxu0
  %v3391 = vadd.f32 0.0, %v3390
  %v3392 = vpop.f32.mrb[0].mxu0
  %v3393 = vpop.f32.mrb[0].mxu0
  %v3394 = vadd.f32 0.0, %v3393
  %v3395 = vpop.f32.mrb[0].mxu0
  %3396 = vdwg.mxu0
  %v3397 = vadd.f32 %v3344, %v3391
  %v3398 = vadd.f32 %v3345, %v3394
  %v3399 = vadd.f32 %v3397, %v2241
  %v3400 = vadd.f32 %v3398, %v2241
  %v3401 = vmax.f32 %v3399, 0.0
  %v3402 = vmax.f32 %v3400, 0.0
  %v3403 = vpack.c.bf16 %v3402, %v3401
  %3405 = vrot.lane.b32.xlu0 %v3403, 64
  %v3406 = vpop.permute.xlu0 %3405
  %3408 = vst.msk [vmem:[%s3189] sm:$0xff] %vm2832, %v3406
  %v3409 = vld [vmem:[%s884 + $0x8] sm:$0xff]
  %v3410 = vld [vmem:[%s1135 + $0x8] sm:$0xff]
  %3411 = vmatprep.subr.bf16.mxu0 0
  %3412 = vmatpush1.bf16.msra.mxu0 %v2277
  %3413 = vmatprep.subr.bf16.mxu0 0
  %3414 = vmatpush1.bf16.msra.mxu0 %v2278
  %3415 = vmatprep.subr.bf16.mxu0 0
  %3416 = vmatpush1.bf16.msra.mxu0 %v2279
  %3417 = vmatprep.subr.bf16.mxu0 0
  %3418 = vmatpush1.bf16.msra.mxu0 %v2280
  %3419 = vmatprep.subr.bf16.mxu0 0
  %3420 = vmatpush1.bf16.msra.mxu0 %v2281
  %3421 = vmatprep.subr.bf16.mxu0 0
  %3422 = vmatpush1.bf16.msra.mxu0 %v2282
  %3423 = vmatprep.subr.bf16.mxu0 0
  %3424 = vmatpush1.bf16.msra.mxu0 %v2283
  %3425 = vmatprep.subr.bf16.mxu0 0
  %3426 = vmatpush1.bf16.msra.mxu0 %v2284
  %3427 = vmatprep.subr.bf16.mxu0 0
  %3428 = vmatpush1.bf16.msra.mxu0 0
  %3429 = vmatprep.subr.bf16.mxu0 0
  %3430 = vmatpush1.bf16.msra.mxu0 0
  %3431 = vmatprep.subr.bf16.mxu0 0
  %3432 = vmatpush1.bf16.msra.mxu0 0
  %3433 = vmatprep.subr.bf16.mxu0 0
  %3434 = vmatpush1.bf16.msra.mxu0 0
  %3435 = vmatprep.subr.bf16.mxu0 0
  %3436 = vmatpush1.bf16.msra.mxu0 0
  %3437 = vmatprep.subr.bf16.mxu0 0
  %3438 = vmatpush1.bf16.msra.mxu0 0
  %3439 = vmatprep.subr.bf16.mxu0 0
  %3440 = vmatpush1.bf16.msra.mxu0 0
  %3441 = vmatprep.subr.bf16.mxu0 0
  %3442 = vmatpush1.bf16.msra.mxu0 0
  %3443 = vmatprep.mubr.bf16.mxu0 0
  %3444 = vmatmul.mubr.bf16.gmra.mrb[0].mxu0 %v3410
  %v3445 = vpop.f32.mrb[0].mxu0
  %v3446 = vadd.f32 0.0, %v3445
  %v3447 = vpop.f32.mrb[0].mxu0
  %v3448 = vpop.f32.mrb[0].mxu0
  %v3449 = vadd.f32 0.0, %v3448
  %v3450 = vpop.f32.mrb[0].mxu0
  %3451 = vdwg.mxu0
  %3452 = vmatprep.subr.bf16.mxu0 0
  %3453 = vmatpush1.bf16.msra.mxu0 %v2366
  %3454 = vmatprep.subr.bf16.mxu0 0
  %3455 = vmatpush1.bf16.msra.mxu0 %v2367
  %3456 = vmatprep.subr.bf16.mxu0 0
  %3457 = vmatpush1.bf16.msra.mxu0 %v2368
  %3458 = vmatprep.subr.bf16.mxu0 0
  %3459 = vmatpush1.bf16.msra.mxu0 %v2369
  %3460 = vmatprep.subr.bf16.mxu0 0
  %3461 = vmatpush1.bf16.msra.mxu0 %v2370
  %3462 = vmatprep.subr.bf16.mxu0 0
  %3463 = vmatpush1.bf16.msra.mxu0 %v2371
  %3464 = vmatprep.subr.bf16.mxu0 0
  %3465 = vmatpush1.bf16.msra.mxu0 %v2372
  %3466 = vmatprep.subr.bf16.mxu0 0
  %3467 = vmatpush1.bf16.msra.mxu0 %v2373
  %3468 = vmatprep.subr.bf16.mxu0 0
  %3469 = vmatpush1.bf16.msra.mxu0 0
  %3470 = vmatprep.subr.bf16.mxu0 0
  %3471 = vmatpush1.bf16.msra.mxu0 0
  %3472 = vmatprep.subr.bf16.mxu0 0
  %3473 = vmatpush1.bf16.msra.mxu0 0
  %3474 = vmatprep.subr.bf16.mxu0 0
  %3475 = vmatpush1.bf16.msra.mxu0 0
  %3476 = vmatprep.subr.bf16.mxu0 0
  %3477 = vmatpush1.bf16.msra.mxu0 0
  %3478 = vmatprep.subr.bf16.mxu0 0
  %3479 = vmatpush1.bf16.msra.mxu0 0
  %3480 = vmatprep.subr.bf16.mxu0 0
  %3481 = vmatpush1.bf16.msra.mxu0 0
  %3482 = vmatprep.subr.bf16.mxu0 0
  %3483 = vmatpush1.bf16.msra.mxu0 0
  %3484 = vmatprep.mubr.bf16.mxu0 0
  %3485 = vmatmul.mubr.bf16.gmra.mrb[0].mxu0 %v3409
  %v3486 = vpop.f32.mrb[0].mxu0
  %v3487 = vadd.f32 %v3446, %v3486
  %v3488 = vpop.f32.mrb[0].mxu0
  %v3489 = vpop.f32.mrb[0].mxu0
  %v3490 = vadd.f32 %v3449, %v3489
  %v3491 = vpop.f32.mrb[0].mxu0
  %3492 = vdwg.mxu0
  %v3493 = vld [vmem:[%s1386 + $0x8] sm:$0xff]
  %3494 = vmatprep.subr.bf16.mxu0 0
  %3495 = vmatpush1.bf16.msra.mxu0 %v2456
  %3496 = vmatprep.subr.bf16.mxu0 0
  %3497 = vmatpush1.bf16.msra.mxu0 %v2457
  %3498 = vmatprep.subr.bf16.mxu0 0
  %3499 = vmatpush1.bf16.msra.mxu0 %v2458
  %3500 = vmatprep.subr.bf16.mxu0 0
  %3501 = vmatpush1.bf16.msra.mxu0 %v2459
  %3502 = vmatprep.subr.bf16.mxu0 0
  %3503 = vmatpush1.bf16.msra.mxu0 %v2460
  %3504 = vmatprep.subr.bf16.mxu0 0
  %3505 = vmatpush1.bf16.msra.mxu0 %v2461
  %3506 = vmatprep.subr.bf16.mxu0 0
  %3507 = vmatpush1.bf16.msra.mxu0 %v2462
  %3508 = vmatprep.subr.bf16.mxu0 0
  %3509 = vmatpush1.bf16.msra.mxu0 %v2463
  %3510 = vmatprep.subr.bf16.mxu0 0
  %3511 = vmatpush1.bf16.msra.mxu0 0
  %3512 = vmatprep.subr.bf16.mxu0 0
  %3513 = vmatpush1.bf16.msra.mxu0 0
  %3514 = vmatprep.subr.bf16.mxu0 0
  %3515 = vmatpush1.bf16.msra.mxu0 0
  %3516 = vmatprep.subr.bf16.mxu0 0
  %3517 = vmatpush1.bf16.msra.mxu0 0
  %3518 = vmatprep.subr.bf16.mxu0 0
  %3519 = vmatpush1.bf16.msra.mxu0 0
  %3520 = vmatprep.subr.bf16.mxu0 0
  %3521 = vmatpush1.bf16.msra.mxu0 0
  %3522 = vmatprep.subr.bf16.mxu0 0
  %3523 = vmatpush1.bf16.msra.mxu0 0
  %3524 = vmatprep.subr.bf16.mxu0 0
  %3525 = vmatpush1.bf16.msra.mxu0 0
  %3526 = vmatprep.mubr.bf16.mxu0 0
  %3527 = vmatmul.mubr.bf16.gmra.mrb[0].mxu0 %v3493
  %v3528 = vpop.f32.mrb[0].mxu0
  %v3529 = vadd.f32 0.0, %v3528
  %v3530 = vpop.f32.mrb[0].mxu0
  %v3531 = vpop.f32.mrb[0].mxu0
  %v3532 = vadd.f32 0.0, %v3531
  %v3533 = vpop.f32.mrb[0].mxu0
  %3534 = vdwg.mxu0
  %v3535 = vadd.f32 %v3487, %v3529
  %v3536 = vadd.f32 %v3490, %v3532
  %v3537 = vld [vmem:[%s1637 + $0x8] sm:$0xff]
  %3538 = vmatprep.subr.bf16.mxu0 0
  %3539 = vmatpush1.bf16.msra.mxu0 %v2548
  %3540 = vmatprep.subr.bf16.mxu0 0
  %3541 = vmatpush1.bf16.msra.mxu0 %v2549
  %3542 = vmatprep.subr.bf16.mxu0 0
  %3543 = vmatpush1.bf16.msra.mxu0 %v2550
  %3544 = vmatprep.subr.bf16.mxu0 0
  %3545 = vmatpush1.bf16.msra.mxu0 %v2551
  %3546 = vmatprep.subr.bf16.mxu0 0
  %3547 = vmatpush1.bf16.msra.mxu0 %v2552
  %3548 = vmatprep.subr.bf16.mxu0 0
  %3549 = vmatpush1.bf16.msra.mxu0 %v2553
  %3550 = vmatprep.subr.bf16.mxu0 0
  %3551 = vmatpush1.bf16.msra.mxu0 %v2554
  %3552 = vmatprep.subr.bf16.mxu0 0
  %3553 = vmatpush1.bf16.msra.mxu0 %v2555
  %3554 = vmatprep.subr.bf16.mxu0 0
  %3555 = vmatpush1.bf16.msra.mxu0 0
  %3556 = vmatprep.subr.bf16.mxu0 0
  %3557 = vmatpush1.bf16.msra.mxu0 0
  %3558 = vmatprep.subr.bf16.mxu0 0
  %3559 = vmatpush1.bf16.msra.mxu0 0
  %3560 = vmatprep.subr.bf16.mxu0 0
  %3561 = vmatpush1.bf16.msra.mxu0 0
  %3562 = vmatprep.subr.bf16.mxu0 0
  %3563 = vmatpush1.bf16.msra.mxu0 0
  %3564 = vmatprep.subr.bf16.mxu0 0
  %3565 = vmatpush1.bf16.msra.mxu0 0
  %3566 = vmatprep.subr.bf16.mxu0 0
  %3567 = vmatpush1.bf16.msra.mxu0 0
  %3568 = vmatprep.subr.bf16.mxu0 0
  %3569 = vmatpush1.bf16.msra.mxu0 0
  %3570 = vmatprep.mubr.bf16.mxu0 0
  %3571 = vmatmul.mubr.bf16.gmra.mrb[0].mxu0 %v3537
  %v3572 = vpop.f32.mrb[0].mxu0
  %v3573 = vadd.f32 0.0, %v3572
  %v3574 = vpop.f32.mrb[0].mxu0
  %v3575 = vpop.f32.mrb[0].mxu0
  %v3576 = vadd.f32 0.0, %v3575
  %v3577 = vpop.f32.mrb[0].mxu0
  %3578 = vdwg.mxu0
  %v3579 = vadd.f32 %v3535, %v3573
  %v3580 = vadd.f32 %v3536, %v3576
  %v3581 = vadd.f32 %v3579, %v2241
  %v3582 = vadd.f32 %v3580, %v2241
  %v3583 = vmax.f32 %v3581, 0.0
  %v3584 = vmax.f32 %v3582, 0.0
  %v3585 = vpack.c.bf16 %v3584, %v3583
  %3586 = vst.msk [vmem:[%s3189 + $0x8] sm:$0xff] %vm2612, %v3585
  %v3587 = vld [vmem:[%s1386] sm:$0xff]
  %v3588 = vld [vmem:[%s1637] sm:$0xff]
  %3589 = vmatprep.subr.bf16.mxu0 0
  %3590 = vmatpush1.bf16.msra.mxu0 %v2277
  %3591 = vmatprep.subr.bf16.mxu0 0
  %3592 = vmatpush1.bf16.msra.mxu0 %v2278
  %3593 = vmatprep.subr.bf16.mxu0 0
  %3594 = vmatpush1.bf16.msra.mxu0 %v2279
  %3595 = vmatprep.subr.bf16.mxu0 0
  %3596 = vmatpush1.bf16.msra.mxu0 %v2280
  %3597 = vmatprep.subr.bf16.mxu0 0
  %3598 = vmatpush1.bf16.msra.mxu0 %v2281
  %3599 = vmatprep.subr.bf16.mxu0 0
  %3600 = vmatpush1.bf16.msra.mxu0 %v2282
  %3601 = vmatprep.subr.bf16.mxu0 0
  %3602 = vmatpush1.bf16.msra.mxu0 %v2283
  %3603 = vmatprep.subr.bf16.mxu0 0
  %3604 = vmatpush1.bf16.msra.mxu0 %v2284
  %3605 = vmatprep.subr.bf16.mxu0 0
  %3606 = vmatpush1.bf16.msra.mxu0 0
  %3607 = vmatprep.subr.bf16.mxu0 0
  %3608 = vmatpush1.bf16.msra.mxu0 0
  %3609 = vmatprep.subr.bf16.mxu0 0
  %3610 = vmatpush1.bf16.msra.mxu0 0
  %3611 = vmatprep.subr.bf16.mxu0 0
  %3612 = vmatpush1.bf16.msra.mxu0 0
  %3613 = vmatprep.subr.bf16.mxu0 0
  %3614 = vmatpush1.bf16.msra.mxu0 0
  %3615 = vmatprep.subr.bf16.mxu0 0
  %3616 = vmatpush1.bf16.msra.mxu0 0
  %3617 = vmatprep.subr.bf16.mxu0 0
  %3618 = vmatpush1.bf16.msra.mxu0 0
  %3619 = vmatprep.subr.bf16.mxu0 0
  %3620 = vmatpush1.bf16.msra.mxu0 0
  %3621 = vmatprep.mubr.bf16.mxu0 0
  %3622 = vmatmul.mubr.bf16.gmra.mrb[0].mxu0 %v3588
  %v3623 = vpop.f32.mrb[0].mxu0
  %v3624 = vadd.f32 0.0, %v3623
  %v3625 = vpop.f32.mrb[0].mxu0
  %v3626 = vpop.f32.mrb[0].mxu0
  %v3627 = vadd.f32 0.0, %v3626
  %v3628 = vpop.f32.mrb[0].mxu0
  %3629 = vdwg.mxu0
  %3630 = vmatprep.subr.bf16.mxu0 0
  %3631 = vmatpush1.bf16.msra.mxu0 %v2366
  %3632 = vmatprep.subr.bf16.mxu0 0
  %3633 = vmatpush1.bf16.msra.mxu0 %v2367
  %3634 = vmatprep.subr.bf16.mxu0 0
  %3635 = vmatpush1.bf16.msra.mxu0 %v2368
  %3636 = vmatprep.subr.bf16.mxu0 0
  %3637 = vmatpush1.bf16.msra.mxu0 %v2369
  %3638 = vmatprep.subr.bf16.mxu0 0
  %3639 = vmatpush1.bf16.msra.mxu0 %v2370
  %3640 = vmatprep.subr.bf16.mxu0 0
  %3641 = vmatpush1.bf16.msra.mxu0 %v2371
  %3642 = vmatprep.subr.bf16.mxu0 0
  %3643 = vmatpush1.bf16.msra.mxu0 %v2372
  %3644 = vmatprep.subr.bf16.mxu0 0
  %3645 = vmatpush1.bf16.msra.mxu0 %v2373
  %3646 = vmatprep.subr.bf16.mxu0 0
  %3647 = vmatpush1.bf16.msra.mxu0 0
  %3648 = vmatprep.subr.bf16.mxu0 0
  %3649 = vmatpush1.bf16.msra.mxu0 0
  %3650 = vmatprep.subr.bf16.mxu0 0
  %3651 = vmatpush1.bf16.msra.mxu0 0
  %3652 = vmatprep.subr.bf16.mxu0 0
  %3653 = vmatpush1.bf16.msra.mxu0 0
  %3654 = vmatprep.subr.bf16.mxu0 0
  %3655 = vmatpush1.bf16.msra.mxu0 0
  %3656 = vmatprep.subr.bf16.mxu0 0
  %3657 = vmatpush1.bf16.msra.mxu0 0
  %3658 = vmatprep.subr.bf16.mxu0 0
  %3659 = vmatpush1.bf16.msra.mxu0 0
  %3660 = vmatprep.subr.bf16.mxu0 0
  %3661 = vmatpush1.bf16.msra.mxu0 0
  %3662 = vmatprep.mubr.bf16.mxu0 0
  %3663 = vmatmul.mubr.bf16.gmra.mrb[0].mxu0 %v3587
  %v3664 = vpop.f32.mrb[0].mxu0
  %v3665 = vadd.f32 %v3624, %v3664
  %v3666 = vpop.f32.mrb[0].mxu0
  %v3667 = vpop.f32.mrb[0].mxu0
  %v3668 = vadd.f32 %v3627, %v3667
  %v3669 = vpop.f32.mrb[0].mxu0
  %3670 = vdwg.mxu0
  %v3671 = vld [vmem:[%s1888] sm:$0xff]
  %3672 = vmatprep.subr.bf16.mxu0 0
  %3673 = vmatpush1.bf16.msra.mxu0 %v2456
  %3674 = vmatprep.subr.bf16.mxu0 0
  %3675 = vmatpush1.bf16.msra.mxu0 %v2457
  %3676 = vmatprep.subr.bf16.mxu0 0
  %3677 = vmatpush1.bf16.msra.mxu0 %v2458
  %3678 = vmatprep.subr.bf16.mxu0 0
  %3679 = vmatpush1.bf16.msra.mxu0 %v2459
  %3680 = vmatprep.subr.bf16.mxu0 0
  %3681 = vmatpush1.bf16.msra.mxu0 %v2460
  %3682 = vmatprep.subr.bf16.mxu0 0
  %3683 = vmatpush1.bf16.msra.mxu0 %v2461
  %3684 = vmatprep.subr.bf16.mxu0 0
  %3685 = vmatpush1.bf16.msra.mxu0 %v2462
  %3686 = vmatprep.subr.bf16.mxu0 0
  %3687 = vmatpush1.bf16.msra.mxu0 %v2463
  %3688 = vmatprep.subr.bf16.mxu0 0
  %3689 = vmatpush1.bf16.msra.mxu0 0
  %3690 = vmatprep.subr.bf16.mxu0 0
  %3691 = vmatpush1.bf16.msra.mxu0 0
  %3692 = vmatprep.subr.bf16.mxu0 0
  %3693 = vmatpush1.bf16.msra.mxu0 0
  %3694 = vmatprep.subr.bf16.mxu0 0
  %3695 = vmatpush1.bf16.msra.mxu0 0
  %3696 = vmatprep.subr.bf16.mxu0 0
  %3697 = vmatpush1.bf16.msra.mxu0 0
  %3698 = vmatprep.subr.bf16.mxu0 0
  %3699 = vmatpush1.bf16.msra.mxu0 0
  %3700 = vmatprep.subr.bf16.mxu0 0
  %3701 = vmatpush1.bf16.msra.mxu0 0
  %3702 = vmatprep.subr.bf16.mxu0 0
  %3703 = vmatpush1.bf16.msra.mxu0 0
  %3704 = vmatprep.mubr.bf16.mxu0 0
  %3705 = vmatmul.mubr.bf16.gmra.mrb[0].mxu0 %v3671
  %v3706 = vpop.f32.mrb[0].mxu0
  %v3707 = vadd.f32 0.0, %v3706
  %v3708 = vpop.f32.mrb[0].mxu0
  %v3709 = vpop.f32.mrb[0].mxu0
  %v3710 = vadd.f32 0.0, %v3709
  %v3711 = vpop.f32.mrb[0].mxu0
  %3712 = vdwg.mxu0
  %v3713 = vadd.f32 %v3665, %v3707
  %v3714 = vadd.f32 %v3668, %v3710
  %v3715 = vld [vmem:[%s2139] sm:$0xff]
  %3716 = vmatprep.subr.bf16.mxu0 0
  %3717 = vmatpush1.bf16.msra.mxu0 %v2548
  %3718 = vmatprep.subr.bf16.mxu0 0
  %3719 = vmatpush1.bf16.msra.mxu0 %v2549
  %3720 = vmatprep.subr.bf16.mxu0 0
  %3721 = vmatpush1.bf16.msra.mxu0 %v2550
  %3722 = vmatprep.subr.bf16.mxu0 0
  %3723 = vmatpush1.bf16.msra.mxu0 %v2551
  %3724 = vmatprep.subr.bf16.mxu0 0
  %3725 = vmatpush1.bf16.msra.mxu0 %v2552
  %3726 = vmatprep.subr.bf16.mxu0 0
  %3727 = vmatpush1.bf16.msra.mxu0 %v2553
  %3728 = vmatprep.subr.bf16.mxu0 0
  %3729 = vmatpush1.bf16.msra.mxu0 %v2554
  %3730 = vmatprep.subr.bf16.mxu0 0
  %3731 = vmatpush1.bf16.msra.mxu0 %v2555
  %3732 = vmatprep.subr.bf16.mxu0 0
  %3733 = vmatpush1.bf16.msra.mxu0 0
  %3734 = vmatprep.subr.bf16.mxu0 0
  %3735 = vmatpush1.bf16.msra.mxu0 0
  %3736 = vmatprep.subr.bf16.mxu0 0
  %3737 = vmatpush1.bf16.msra.mxu0 0
  %3738 = vmatprep.subr.bf16.mxu0 0
  %3739 = vmatpush1.bf16.msra.mxu0 0
  %3740 = vmatprep.subr.bf16.mxu0 0
  %3741 = vmatpush1.bf16.msra.mxu0 0
  %3742 = vmatprep.subr.bf16.mxu0 0
  %3743 = vmatpush1.bf16.msra.mxu0 0
  %3744 = vmatprep.subr.bf16.mxu0 0
  %3745 = vmatpush1.bf16.msra.mxu0 0
  %3746 = vmatprep.subr.bf16.mxu0 0
  %3747 = vmatpush1.bf16.msra.mxu0 0
  %3748 = vmatprep.mubr.bf16.mxu0 0
  %3749 = vmatmul.mubr.bf16.gmra.mrb[0].mxu0 %v3715
  %v3750 = vpop.f32.mrb[0].mxu0
  %v3751 = vadd.f32 0.0, %v3750
  %v3752 = vpop.f32.mrb[0].mxu0
  %v3753 = vpop.f32.mrb[0].mxu0
  %v3754 = vadd.f32 0.0, %v3753
  %v3755 = vpop.f32.mrb[0].mxu0
  %3756 = vdwg.mxu0
  %v3757 = vadd.f32 %v3713, %v3751
  %v3758 = vadd.f32 %v3714, %v3754
  %v3759 = vadd.f32 %v3757, %v2241
  %v3760 = vadd.f32 %v3758, %v2241
  %v3761 = vmax.f32 %v3759, 0.0
  %v3762 = vmax.f32 %v3760, 0.0
  %v3763 = vpack.c.bf16 %v3762, %v3761
  %s3764 = scalar_lea.vmem [#allocation3], 32
  %3765 = vst.msk [vmem:[%s3764] sm:$0xff] %vm2612, %v3763
  %v3766 = vld [vmem:[%s1386] sm:$0xff]
  %v3767 = vld [vmem:[%s1386 + $0x8] sm:$0xff]
  %v3768 = vld [vmem:[%s1637] sm:$0xff]
  %v3769 = vld [vmem:[%s1637 + $0x8] sm:$0xff]
  %3772 = vrot.lane.b32.xlu0 %v3768, 64
  %v3773 = vpop.permute.xlu0 %3772
  %3774 = vrot.lane.b32.xlu0 %v3769, 64
  %v3775 = vpop.permute.xlu0 %3774
  %v3776 = vsel %vm2624, %v3773, %v3775
  %3778 = vmatprep.subr.bf16.mxu0 0
  %3779 = vmatpush1.bf16.msra.mxu0 %v2277
  %3780 = vmatprep.subr.bf16.mxu0 0
  %3781 = vmatpush1.bf16.msra.mxu0 %v2278
  %3782 = vmatprep.subr.bf16.mxu0 0
  %3783 = vmatpush1.bf16.msra.mxu0 %v2279
  %3784 = vmatprep.subr.bf16.mxu0 0
  %3785 = vmatpush1.bf16.msra.mxu0 %v2280
  %3786 = vmatprep.subr.bf16.mxu0 0
  %3787 = vmatpush1.bf16.msra.mxu0 %v2281
  %3788 = vmatprep.subr.bf16.mxu0 0
  %3789 = vmatpush1.bf16.msra.mxu0 %v2282
  %3790 = vmatprep.subr.bf16.mxu0 0
  %3791 = vmatpush1.bf16.msra.mxu0 %v2283
  %3792 = vmatprep.subr.bf16.mxu0 0
  %3793 = vmatpush1.bf16.msra.mxu0 %v2284
  %3794 = vmatprep.subr.bf16.mxu0 0
  %3795 = vmatpush1.bf16.msra.mxu0 0
  %3796 = vmatprep.subr.bf16.mxu0 0
  %3797 = vmatpush1.bf16.msra.mxu0 0
  %3798 = vmatprep.subr.bf16.mxu0 0
  %3799 = vmatpush1.bf16.msra.mxu0 0
  %3800 = vmatprep.subr.bf16.mxu0 0
  %3801 = vmatpush1.bf16.msra.mxu0 0
  %3802 = vmatprep.subr.bf16.mxu0 0
  %3803 = vmatpush1.bf16.msra.mxu0 0
  %3804 = vmatprep.subr.bf16.mxu0 0
  %3805 = vmatpush1.bf16.msra.mxu0 0
  %3806 = vmatprep.subr.bf16.mxu0 0
  %3807 = vmatpush1.bf16.msra.mxu0 0
  %3808 = vmatprep.subr.bf16.mxu0 0
  %3809 = vmatpush1.bf16.msra.mxu0 0
  %3810 = vmatprep.mubr.bf16.mxu0 0
  %3811 = vmatmul.mubr.bf16.gmra.mrb[0].mxu0 %v3776
  %v3812 = vpop.f32.mrb[0].mxu0
  %v3813 = vadd.f32 0.0, %v3812
  %v3814 = vpop.f32.mrb[0].mxu0
  %v3815 = vpop.f32.mrb[0].mxu0
  %v3816 = vadd.f32 0.0, %v3815
  %v3817 = vpop.f32.mrb[0].mxu0
  %3818 = vdwg.mxu0
  %3821 = vrot.lane.b32.xlu0 %v3766, 64
  %v3822 = vpop.permute.xlu0 %3821
  %3823 = vrot.lane.b32.xlu0 %v3767, 64
  %v3824 = vpop.permute.xlu0 %3823
  %v3825 = vsel %vm2624, %v3822, %v3824
  %3827 = vmatprep.subr.bf16.mxu0 0
  %3828 = vmatpush1.bf16.msra.mxu0 %v2366
  %3829 = vmatprep.subr.bf16.mxu0 0
  %3830 = vmatpush1.bf16.msra.mxu0 %v2367
  %3831 = vmatprep.subr.bf16.mxu0 0
  %3832 = vmatpush1.bf16.msra.mxu0 %v2368
  %3833 = vmatprep.subr.bf16.mxu0 0
  %3834 = vmatpush1.bf16.msra.mxu0 %v2369
  %3835 = vmatprep.subr.bf16.mxu0 0
  %3836 = vmatpush1.bf16.msra.mxu0 %v2370
  %3837 = vmatprep.subr.bf16.mxu0 0
  %3838 = vmatpush1.bf16.msra.mxu0 %v2371
  %3839 = vmatprep.subr.bf16.mxu0 0
  %3840 = vmatpush1.bf16.msra.mxu0 %v2372
  %3841 = vmatprep.subr.bf16.mxu0 0
  %3842 = vmatpush1.bf16.msra.mxu0 %v2373
  %3843 = vmatprep.subr.bf16.mxu0 0
  %3844 = vmatpush1.bf16.msra.mxu0 0
  %3845 = vmatprep.subr.bf16.mxu0 0
  %3846 = vmatpush1.bf16.msra.mxu0 0
  %3847 = vmatprep.subr.bf16.mxu0 0
  %3848 = vmatpush1.bf16.msra.mxu0 0
  %3849 = vmatprep.subr.bf16.mxu0 0
  %3850 = vmatpush1.bf16.msra.mxu0 0
  %3851 = vmatprep.subr.bf16.mxu0 0
  %3852 = vmatpush1.bf16.msra.mxu0 0
  %3853 = vmatprep.subr.bf16.mxu0 0
  %3854 = vmatpush1.bf16.msra.mxu0 0
  %3855 = vmatprep.subr.bf16.mxu0 0
  %3856 = vmatpush1.bf16.msra.mxu0 0
  %3857 = vmatprep.subr.bf16.mxu0 0
  %3858 = vmatpush1.bf16.msra.mxu0 0
  %3859 = vmatprep.mubr.bf16.mxu0 0
  %3860 = vmatmul.mubr.bf16.gmra.mrb[0].mxu0 %v3825
  %v3861 = vpop.f32.mrb[0].mxu0
  %v3862 = vadd.f32 %v3813, %v3861
  %v3863 = vpop.f32.mrb[0].mxu0
  %v3864 = vpop.f32.mrb[0].mxu0
  %v3865 = vadd.f32 %v3816, %v3864
  %v3866 = vpop.f32.mrb[0].mxu0
  %3867 = vdwg.mxu0
  %v3868 = vld [vmem:[%s1888] sm:$0xff]
  %v3869 = vld [vmem:[%s1888 + $0x8] sm:$0xff]
  %3872 = vrot.lane.b32.xlu0 %v3868, 64
  %v3873 = vpop.permute.xlu0 %3872
  %3874 = vrot.lane.b32.xlu0 %v3869, 64
  %v3875 = vpop.permute.xlu0 %3874
  %v3876 = vsel %vm2624, %v3873, %v3875
  %3878 = vmatprep.subr.bf16.mxu0 0
  %3879 = vmatpush1.bf16.msra.mxu0 %v2456
  %3880 = vmatprep.subr.bf16.mxu0 0
  %3881 = vmatpush1.bf16.msra.mxu0 %v2457
  %3882 = vmatprep.subr.bf16.mxu0 0
  %3883 = vmatpush1.bf16.msra.mxu0 %v2458
  %3884 = vmatprep.subr.bf16.mxu0 0
  %3885 = vmatpush1.bf16.msra.mxu0 %v2459
  %3886 = vmatprep.subr.bf16.mxu0 0
  %3887 = vmatpush1.bf16.msra.mxu0 %v2460
  %3888 = vmatprep.subr.bf16.mxu0 0
  %3889 = vmatpush1.bf16.msra.mxu0 %v2461
  %3890 = vmatprep.subr.bf16.mxu0 0
  %3891 = vmatpush1.bf16.msra.mxu0 %v2462
  %3892 = vmatprep.subr.bf16.mxu0 0
  %3893 = vmatpush1.bf16.msra.mxu0 %v2463
  %3894 = vmatprep.subr.bf16.mxu0 0
  %3895 = vmatpush1.bf16.msra.mxu0 0
  %3896 = vmatprep.subr.bf16.mxu0 0
  %3897 = vmatpush1.bf16.msra.mxu0 0
  %3898 = vmatprep.subr.bf16.mxu0 0
  %3899 = vmatpush1.bf16.msra.mxu0 0
  %3900 = vmatprep.subr.bf16.mxu0 0
  %3901 = vmatpush1.bf16.msra.mxu0 0
  %3902 = vmatprep.subr.bf16.mxu0 0
  %3903 = vmatpush1.bf16.msra.mxu0 0
  %3904 = vmatprep.subr.bf16.mxu0 0
  %3905 = vmatpush1.bf16.msra.mxu0 0
  %3906 = vmatprep.subr.bf16.mxu0 0
  %3907 = vmatpush1.bf16.msra.mxu0 0
  %3908 = vmatprep.subr.bf16.mxu0 0
  %3909 = vmatpush1.bf16.msra.mxu0 0
  %3910 = vmatprep.mubr.bf16.mxu0 0
  %3911 = vmatmul.mubr.bf16.gmra.mrb[0].mxu0 %v3876
  %v3912 = vpop.f32.mrb[0].mxu0
  %v3913 = vadd.f32 0.0, %v3912
  %v3914 = vpop.f32.mrb[0].mxu0
  %v3915 = vpop.f32.mrb[0].mxu0
  %v3916 = vadd.f32 0.0, %v3915
  %v3917 = vpop.f32.mrb[0].mxu0
  %3918 = vdwg.mxu0
  %v3919 = vadd.f32 %v3862, %v3913
  %v3920 = vadd.f32 %v3865, %v3916
  %v3921 = vld [vmem:[%s2139] sm:$0xff]
  %v3922 = vld [vmem:[%s2139 + $0x8] sm:$0xff]
  %3925 = vrot.lane.b32.xlu0 %v3921, 64
  %v3926 = vpop.permute.xlu0 %3925
  %3927 = vrot.lane.b32.xlu0 %v3922, 64
  %v3928 = vpop.permute.xlu0 %3927
  %v3929 = vsel %vm2624, %v3926, %v3928
  %3931 = vmatprep.subr.bf16.mxu0 0
  %3932 = vmatpush1.bf16.msra.mxu0 %v2548
  %3933 = vmatprep.subr.bf16.mxu0 0
  %3934 = vmatpush1.bf16.msra.mxu0 %v2549
  %3935 = vmatprep.subr.bf16.mxu0 0
  %3936 = vmatpush1.bf16.msra.mxu0 %v2550
  %3937 = vmatprep.subr.bf16.mxu0 0
  %3938 = vmatpush1.bf16.msra.mxu0 %v2551
  %3939 = vmatprep.subr.bf16.mxu0 0
  %3940 = vmatpush1.bf16.msra.mxu0 %v2552
  %3941 = vmatprep.subr.bf16.mxu0 0
  %3942 = vmatpush1.bf16.msra.mxu0 %v2553
  %3943 = vmatprep.subr.bf16.mxu0 0
  %3944 = vmatpush1.bf16.msra.mxu0 %v2554
  %3945 = vmatprep.subr.bf16.mxu0 0
  %3946 = vmatpush1.bf16.msra.mxu0 %v2555
  %3947 = vmatprep.subr.bf16.mxu0 0
  %3948 = vmatpush1.bf16.msra.mxu0 0
  %3949 = vmatprep.subr.bf16.mxu0 0
  %3950 = vmatpush1.bf16.msra.mxu0 0
  %3951 = vmatprep.subr.bf16.mxu0 0
  %3952 = vmatpush1.bf16.msra.mxu0 0
  %3953 = vmatprep.subr.bf16.mxu0 0
  %3954 = vmatpush1.bf16.msra.mxu0 0
  %3955 = vmatprep.subr.bf16.mxu0 0
  %3956 = vmatpush1.bf16.msra.mxu0 0
  %3957 = vmatprep.subr.bf16.mxu0 0
  %3958 = vmatpush1.bf16.msra.mxu0 0
  %3959 = vmatprep.subr.bf16.mxu0 0
  %3960 = vmatpush1.bf16.msra.mxu0 0
  %3961 = vmatprep.subr.bf16.mxu0 0
  %3962 = vmatpush1.bf16.msra.mxu0 0
  %3963 = vmatprep.mubr.bf16.mxu0 0
  %3964 = vmatmul.mubr.bf16.gmra.mrb[0].mxu0 %v3929
  %v3965 = vpop.f32.mrb[0].mxu0
  %v3966 = vadd.f32 0.0, %v3965
  %v3967 = vpop.f32.mrb[0].mxu0
  %v3968 = vpop.f32.mrb[0].mxu0
  %v3969 = vadd.f32 0.0, %v3968
  %v3970 = vpop.f32.mrb[0].mxu0
  %3971 = vdwg.mxu0
  %v3972 = vadd.f32 %v3919, %v3966
  %v3973 = vadd.f32 %v3920, %v3969
  %v3974 = vadd.f32 %v3972, %v2241
  %v3975 = vadd.f32 %v3973, %v2241
  %v3976 = vmax.f32 %v3974, 0.0
  %v3977 = vmax.f32 %v3975, 0.0
  %v3978 = vpack.c.bf16 %v3977, %v3976
  %3980 = vrot.lane.b32.xlu0 %v3978, 64
  %v3981 = vpop.permute.xlu0 %3980
  %3983 = vst.msk [vmem:[%s3764] sm:$0xff] %vm2832, %v3981
  %v3984 = vld [vmem:[%s1386 + $0x8] sm:$0xff]
  %v3985 = vld [vmem:[%s1637 + $0x8] sm:$0xff]
  %3986 = vmatprep.subr.bf16.mxu0 0
  %3987 = vmatpush1.bf16.msra.mxu0 %v2277
  %3988 = vmatprep.subr.bf16.mxu0 0
  %3989 = vmatpush1.bf16.msra.mxu0 %v2278
  %3990 = vmatprep.subr.bf16.mxu0 0
  %3991 = vmatpush1.bf16.msra.mxu0 %v2279
  %3992 = vmatprep.subr.bf16.mxu0 0
  %3993 = vmatpush1.bf16.msra.mxu0 %v2280
  %3994 = vmatprep.subr.bf16.mxu0 0
  %3995 = vmatpush1.bf16.msra.mxu0 %v2281
  %3996 = vmatprep.subr.bf16.mxu0 0
  %3997 = vmatpush1.bf16.msra.mxu0 %v2282
  %3998 = vmatprep.subr.bf16.mxu0 0
  %3999 = vmatpush1.bf16.msra.mxu0 %v2283
  %4000 = vmatprep.subr.bf16.mxu0 0
  %4001 = vmatpush1.bf16.msra.mxu0 %v2284
  %4002 = vmatprep.subr.bf16.mxu0 0
  %4003 = vmatpush1.bf16.msra.mxu0 0
  %4004 = vmatprep.subr.bf16.mxu0 0
  %4005 = vmatpush1.bf16.msra.mxu0 0
  %4006 = vmatprep.subr.bf16.mxu0 0
  %4007 = vmatpush1.bf16.msra.mxu0 0
  %4008 = vmatprep.subr.bf16.mxu0 0
  %4009 = vmatpush1.bf16.msra.mxu0 0
  %4010 = vmatprep.subr.bf16.mxu0 0
  %4011 = vmatpush1.bf16.msra.mxu0 0
  %4012 = vmatprep.subr.bf16.mxu0 0
  %4013 = vmatpush1.bf16.msra.mxu0 0
  %4014 = vmatprep.subr.bf16.mxu0 0
  %4015 = vmatpush1.bf16.msra.mxu0 0
  %4016 = vmatprep.subr.bf16.mxu0 0
  %4017 = vmatpush1.bf16.msra.mxu0 0
  %4018 = vmatprep.mubr.bf16.mxu0 0
  %4019 = vmatmul.mubr.bf16.gmra.mrb[0].mxu0 %v3985
  %v4020 = vpop.f32.mrb[0].mxu0
  %v4021 = vadd.f32 0.0, %v4020
  %v4022 = vpop.f32.mrb[0].mxu0
  %v4023 = vpop.f32.mrb[0].mxu0
  %v4024 = vadd.f32 0.0, %v4023
  %v4025 = vpop.f32.mrb[0].mxu0
  %4026 = vdwg.mxu0
  %4027 = vmatprep.subr.bf16.mxu0 0
  %4028 = vmatpush1.bf16.msra.mxu0 %v2366
  %4029 = vmatprep.subr.bf16.mxu0 0
  %4030 = vmatpush1.bf16.msra.mxu0 %v2367
  %4031 = vmatprep.subr.bf16.mxu0 0
  %4032 = vmatpush1.bf16.msra.mxu0 %v2368
  %4033 = vmatprep.subr.bf16.mxu0 0
  %4034 = vmatpush1.bf16.msra.mxu0 %v2369
  %4035 = vmatprep.subr.bf16.mxu0 0
  %4036 = vmatpush1.bf16.msra.mxu0 %v2370
  %4037 = vmatprep.subr.bf16.mxu0 0
  %4038 = vmatpush1.bf16.msra.mxu0 %v2371
  %4039 = vmatprep.subr.bf16.mxu0 0
  %4040 = vmatpush1.bf16.msra.mxu0 %v2372
  %4041 = vmatprep.subr.bf16.mxu0 0
  %4042 = vmatpush1.bf16.msra.mxu0 %v2373
  %4043 = vmatprep.subr.bf16.mxu0 0
  %4044 = vmatpush1.bf16.msra.mxu0 0
  %4045 = vmatprep.subr.bf16.mxu0 0
  %4046 = vmatpush1.bf16.msra.mxu0 0
  %4047 = vmatprep.subr.bf16.mxu0 0
  %4048 = vmatpush1.bf16.msra.mxu0 0
  %4049 = vmatprep.subr.bf16.mxu0 0
  %4050 = vmatpush1.bf16.msra.mxu0 0
  %4051 = vmatprep.subr.bf16.mxu0 0
  %4052 = vmatpush1.bf16.msra.mxu0 0
  %4053 = vmatprep.subr.bf16.mxu0 0
  %4054 = vmatpush1.bf16.msra.mxu0 0
  %4055 = vmatprep.subr.bf16.mxu0 0
  %4056 = vmatpush1.bf16.msra.mxu0 0
  %4057 = vmatprep.subr.bf16.mxu0 0
  %4058 = vmatpush1.bf16.msra.mxu0 0
  %4059 = vmatprep.mubr.bf16.mxu0 0
  %4060 = vmatmul.mubr.bf16.gmra.mrb[0].mxu0 %v3984
  %v4061 = vpop.f32.mrb[0].mxu0
  %v4062 = vadd.f32 %v4021, %v4061
  %v4063 = vpop.f32.mrb[0].mxu0
  %v4064 = vpop.f32.mrb[0].mxu0
  %v4065 = vadd.f32 %v4024, %v4064
  %v4066 = vpop.f32.mrb[0].mxu0
  %4067 = vdwg.mxu0
  %v4068 = vld [vmem:[%s1888 + $0x8] sm:$0xff]
  %4069 = vmatprep.subr.bf16.mxu0 0
  %4070 = vmatpush1.bf16.msra.mxu0 %v2456
  %4071 = vmatprep.subr.bf16.mxu0 0
  %4072 = vmatpush1.bf16.msra.mxu0 %v2457
  %4073 = vmatprep.subr.bf16.mxu0 0
  %4074 = vmatpush1.bf16.msra.mxu0 %v2458
  %4075 = vmatprep.subr.bf16.mxu0 0
  %4076 = vmatpush1.bf16.msra.mxu0 %v2459
  %4077 = vmatprep.subr.bf16.mxu0 0
  %4078 = vmatpush1.bf16.msra.mxu0 %v2460
  %4079 = vmatprep.subr.bf16.mxu0 0
  %4080 = vmatpush1.bf16.msra.mxu0 %v2461
  %4081 = vmatprep.subr.bf16.mxu0 0
  %4082 = vmatpush1.bf16.msra.mxu0 %v2462
  %4083 = vmatprep.subr.bf16.mxu0 0
  %4084 = vmatpush1.bf16.msra.mxu0 %v2463
  %4085 = vmatprep.subr.bf16.mxu0 0
  %4086 = vmatpush1.bf16.msra.mxu0 0
  %4087 = vmatprep.subr.bf16.mxu0 0
  %4088 = vmatpush1.bf16.msra.mxu0 0
  %4089 = vmatprep.subr.bf16.mxu0 0
  %4090 = vmatpush1.bf16.msra.mxu0 0
  %4091 = vmatprep.subr.bf16.mxu0 0
  %4092 = vmatpush1.bf16.msra.mxu0 0
  %4093 = vmatprep.subr.bf16.mxu0 0
  %4094 = vmatpush1.bf16.msra.mxu0 0
  %4095 = vmatprep.subr.bf16.mxu0 0
  %4096 = vmatpush1.bf16.msra.mxu0 0
  %4097 = vmatprep.subr.bf16.mxu0 0
  %4098 = vmatpush1.bf16.msra.mxu0 0
  %4099 = vmatprep.subr.bf16.mxu0 0
  %4100 = vmatpush1.bf16.msra.mxu0 0
  %4101 = vmatprep.mubr.bf16.mxu0 0
  %4102 = vmatmul.mubr.bf16.gmra.mrb[0].mxu0 %v4068
  %v4103 = vpop.f32.mrb[0].mxu0
  %v4104 = vadd.f32 0.0, %v4103
  %v4105 = vpop.f32.mrb[0].mxu0
  %v4106 = vpop.f32.mrb[0].mxu0
  %v4107 = vadd.f32 0.0, %v4106
  %v4108 = vpop.f32.mrb[0].mxu0
  %4109 = vdwg.mxu0
  %v4110 = vadd.f32 %v4062, %v4104
  %v4111 = vadd.f32 %v4065, %v4107
  %v4112 = vld [vmem:[%s2139 + $0x8] sm:$0xff]
  %4113 = vmatprep.subr.bf16.mxu0 0
  %4114 = vmatpush1.bf16.msra.mxu0 %v2548
  %4115 = vmatprep.subr.bf16.mxu0 0
  %4116 = vmatpush1.bf16.msra.mxu0 %v2549
  %4117 = vmatprep.subr.bf16.mxu0 0
  %4118 = vmatpush1.bf16.msra.mxu0 %v2550
  %4119 = vmatprep.subr.bf16.mxu0 0
  %4120 = vmatpush1.bf16.msra.mxu0 %v2551
  %4121 = vmatprep.subr.bf16.mxu0 0
  %4122 = vmatpush1.bf16.msra.mxu0 %v2552
  %4123 = vmatprep.subr.bf16.mxu0 0
  %4124 = vmatpush1.bf16.msra.mxu0 %v2553
  %4125 = vmatprep.subr.bf16.mxu0 0
  %4126 = vmatpush1.bf16.msra.mxu0 %v2554
  %4127 = vmatprep.subr.bf16.mxu0 0
  %4128 = vmatpush1.bf16.msra.mxu0 %v2555
  %4129 = vmatprep.subr.bf16.mxu0 0
  %4130 = vmatpush1.bf16.msra.mxu0 0
  %4131 = vmatprep.subr.bf16.mxu0 0
  %4132 = vmatpush1.bf16.msra.mxu0 0
  %4133 = vmatprep.subr.bf16.mxu0 0
  %4134 = vmatpush1.bf16.msra.mxu0 0
  %4135 = vmatprep.subr.bf16.mxu0 0
  %4136 = vmatpush1.bf16.msra.mxu0 0
  %4137 = vmatprep.subr.bf16.mxu0 0
  %4138 = vmatpush1.bf16.msra.mxu0 0
  %4139 = vmatprep.subr.bf16.mxu0 0
  %4140 = vmatpush1.bf16.msra.mxu0 0
  %4141 = vmatprep.subr.bf16.mxu0 0
  %4142 = vmatpush1.bf16.msra.mxu0 0
  %4143 = vmatprep.subr.bf16.mxu0 0
  %4144 = vmatpush1.bf16.msra.mxu0 0
  %4145 = vmatprep.mubr.bf16.mxu0 0
  %4146 = vmatmul.mubr.bf16.gmra.mrb[0].mxu0 %v4112
  %v4147 = vpop.f32.mrb[0].mxu0
  %v4148 = vadd.f32 0.0, %v4147
  %v4149 = vpop.f32.mrb[0].mxu0
  %v4150 = vpop.f32.mrb[0].mxu0
  %v4151 = vadd.f32 0.0, %v4150
  %v4152 = vpop.f32.mrb[0].mxu0
  %4153 = vdwg.mxu0
  %v4154 = vadd.f32 %v4110, %v4148
  %v4155 = vadd.f32 %v4111, %v4151
  %v4156 = vadd.f32 %v4154, %v2241
  %v4157 = vadd.f32 %v4155, %v2241
  %v4158 = vmax.f32 %v4156, 0.0
  %v4159 = vmax.f32 %v4157, 0.0
  %v4160 = vpack.c.bf16 %v4159, %v4158
  %4161 = vst.msk [vmem:[%s3764 + $0x8] sm:$0xff] %vm2612, %v4160
  %v4162 = vld [vmem:[%s5] sm:$0xf]
  %v4163 = vld [vmem:[%s5 + $0x4] sm:$0xf]
  %v4164 = vld [vmem:[%s5 + $0x8] sm:$0xf]
  %v4165 = vld [vmem:[%s5 + $0xc] sm:$0xf]
  %v4166 = vld [vmem:[%s5 + $0x10] sm:$0xf]
  %v4167 = vld [vmem:[%s5 + $0x14] sm:$0xf]
  %v4168 = vld [vmem:[%s5 + $0x18] sm:$0xf]
  %v4169 = vld [vmem:[%s5 + $0x1c] sm:$0xf]
  %v4170 = vld [vmem:[%s5 + $0x20] sm:$0xf]
  %v4171 = vld [vmem:[%s5 + $0x24] sm:$0xf]
  %v4172 = vld [vmem:[%s5 + $0x28] sm:$0xf]
  %v4173 = vld [vmem:[%s5 + $0x2c] sm:$0xf]
  %v4174 = vld [vmem:[%s5 + $0x30] sm:$0xf]
  %v4175 = vld [vmem:[%s5 + $0x34] sm:$0xf]
  %v4176 = vld [vmem:[%s5 + $0x38] sm:$0xf]
  %v4177 = vld [vmem:[%s5 + $0x3c] sm:$0xf]
  %v4178 = vld [vmem:[%s5 + $0x40] sm:$0xf]
  %v4179 = vld [vmem:[%s5 + $0x44] sm:$0xf]
  %v4180 = vld [vmem:[%s5 + $0x48] sm:$0xf]
  %v4181 = vld [vmem:[%s5 + $0x4c] sm:$0xf]
  %v4182 = vld [vmem:[%s5 + $0x50] sm:$0xf]
  %v4183 = vld [vmem:[%s5 + $0x54] sm:$0xf]
  %v4184 = vld [vmem:[%s5 + $0x58] sm:$0xf]
  %v4185 = vld [vmem:[%s5 + $0x5c] sm:$0xf]
  %v4186 = vld [vmem:[%s5 + $0x60] sm:$0xf]
  %v4187 = vld [vmem:[%s5 + $0x64] sm:$0xf]
  %v4188 = vld [vmem:[%s5 + $0x68] sm:$0xf]
  %v4189 = vld [vmem:[%s5 + $0x6c] sm:$0xf]
  %v4190 = vld [vmem:[%s5 + $0x70] sm:$0xf]
  %v4191 = vld [vmem:[%s5 + $0x74] sm:$0xf]
  %v4192 = vld [vmem:[%s5 + $0x78] sm:$0xf]
  %v4193 = vld [vmem:[%s5 + $0x7c] sm:$0xf]
  %v4194 = vld [vmem:[%s5 + $0x80] sm:$0xf]
  %v4195 = vld [vmem:[%s5 + $0x84] sm:$0xf]
  %v4196 = vld [vmem:[%s5 + $0x88] sm:$0xf]
  %v4197 = vld [vmem:[%s5 + $0x8c] sm:$0xf]
  %v4198 = vld [vmem:[%s5 + $0x90] sm:$0xf]
  %v4199 = vld [vmem:[%s5 + $0x94] sm:$0xf]
  %v4200 = vld [vmem:[%s5 + $0x98] sm:$0xf]
  %v4201 = vld [vmem:[%s5 + $0x9c] sm:$0xf]
  %v4202 = vld [vmem:[%s5 + $0xa0] sm:$0xf]
  %v4203 = vld [vmem:[%s5 + $0xa4] sm:$0xf]
  %v4204 = vld [vmem:[%s5 + $0xa8] sm:$0xf]
  %v4205 = vld [vmem:[%s5 + $0xac] sm:$0xf]
  %v4206 = vld [vmem:[%s5 + $0xb0] sm:$0xf]
  %v4207 = vld [vmem:[%s5 + $0xb4] sm:$0xf]
  %v4208 = vld [vmem:[%s5 + $0xb8] sm:$0xf]
  %v4209 = vld [vmem:[%s5 + $0xbc] sm:$0xf]
  %v4210 = vld [vmem:[%s5 + $0xc0] sm:$0xf]
  %v4211 = vld [vmem:[%s5 + $0xc4] sm:$0xf]
  %v4212 = vld [vmem:[%s5 + $0xc8] sm:$0xf]
  %v4213 = vld [vmem:[%s5 + $0xcc] sm:$0xf]
  %v4214 = vld [vmem:[%s5 + $0xd0] sm:$0xf]
  %v4215 = vld [vmem:[%s5 + $0xd4] sm:$0xf]
  %v4216 = vld [vmem:[%s5 + $0xd8] sm:$0xf]
  %v4217 = vld [vmem:[%s5 + $0xdc] sm:$0xf]
  %v4218 = vld [vmem:[%s5 + $0xe0] sm:$0xf]
  %v4219 = vld [vmem:[%s5 + $0xe4] sm:$0xf]
  %v4220 = vld [vmem:[%s5 + $0xe8] sm:$0xf]
  %v4221 = vld [vmem:[%s5 + $0xec] sm:$0xf]
  %v4222 = vld [vmem:[%s5 + $0xf0] sm:$0xf]
  %v4223 = vld [vmem:[%s5 + $0xf4] sm:$0xf]
  %v4224 = vld [vmem:[%s5 + $0xf8] sm:$0xf]
  %v4225 = vld [vmem:[%s5 + $0xfc] sm:$0xf]
  %v4226 = vld [vmem:[%s5 + $0x100] sm:$0xf]
  %v4227 = vld [vmem:[%s5 + $0x104] sm:$0xf]
  %v4228 = vld [vmem:[%s5 + $0x108] sm:$0xf]
  %v4229 = vld [vmem:[%s5 + $0x10c] sm:$0xf]
  %v4230 = vld [vmem:[%s5 + $0x110] sm:$0xf]
  %v4231 = vld [vmem:[%s5 + $0x114] sm:$0xf]
  %v4232 = vld [vmem:[%s5 + $0x118] sm:$0xf]
  %v4233 = vld [vmem:[%s5 + $0x11c] sm:$0xf]
  %v4234 = vld [vmem:[%s6] sm:$0x1]
  %v4236 = vlaneseq
  %v4237 = vshrl.u32 %v4236, 7
  %v4238 = vsub.s32 0, %v4237
  %v4239 = vrot.slane %v4234, %v4238
  %v4241 = vld [vmem:[#allocation3] sm:$0xff]
  %v4242 = vld [vmem:[#allocation3 + $0x8] sm:$0xff]
  %v4243 = vld [vmem:[%s3189] sm:$0xff]
  %v4244 = vld [vmem:[%s3189 + $0x8] sm:$0xff]
  %v4269 = vunpack.c.l.b16 %v4186
  %v4270 = vunpack.c.l.b16 %v4187
  %v4271 = vunpack.c.l.b16 %v4188
  %v4272 = vunpack.c.l.b16 %v4189
  %v4273 = vunpack.c.l.b16 %v4190
  %v4274 = vunpack.c.l.b16 %v4191
  %v4275 = vunpack.c.l.b16 %v4192
  %v4276 = vunpack.c.l.b16 %v4193
  %v4277 = vunpack.c.l.b16 %v4194
  %v4278 = vunpack.c.l.b16 %v4195
  %v4279 = vunpack.c.l.b16 %v4196
  %v4280 = vunpack.c.l.b16 %v4197
  %v4281 = vunpack.c.l.b16 %v4198
  %v4282 = vunpack.c.l.b16 %v4199
  %v4283 = vunpack.c.l.b16 %v4200
  %v4284 = vunpack.c.l.b16 %v4201
  %v4285 = vunpack.c.l.b16 %v4202
  %v4286 = vunpack.c.l.b16 %v4203
  %v4287 = vunpack.c.l.b16 %v4204
  %v4288 = vunpack.c.l.b16 %v4205
  %v4289 = vunpack.c.l.b16 %v4206
  %v4290 = vunpack.c.l.b16 %v4207
  %v4291 = vunpack.c.l.b16 %v4208
  %v4292 = vunpack.c.l.b16 %v4209
  %v4293 = vpack.c.b16 %v4270, %v4269
  %v4294 = vpack.c.b16 %v4272, %v4271
  %v4295 = vpack.c.b16 %v4274, %v4273
  %v4296 = vpack.c.b16 %v4276, %v4275
  %v4297 = vpack.c.b16 %v4278, %v4277
  %v4298 = vpack.c.b16 %v4280, %v4279
  %v4299 = vpack.c.b16 %v4282, %v4281
  %v4300 = vpack.c.b16 %v4284, %v4283
  %v4301 = vpack.c.b16 %v4286, %v4285
  %v4302 = vpack.c.b16 %v4288, %v4287
  %v4303 = vpack.c.b16 %v4290, %v4289
  %v4304 = vpack.c.b16 %v4292, %v4291
  %v4318 = vsel %vm2612, %v4244, 0
  %4320 = vmatprep.subr.bf16.mxu0 0
  %4321 = vmatpush1.bf16.msra.mxu0 %v4293
  %4322 = vmatprep.subr.bf16.mxu0 0
  %4323 = vmatpush1.bf16.msra.mxu0 %v4294
  %4324 = vmatprep.subr.bf16.mxu0 0
  %4325 = vmatpush1.bf16.msra.mxu0 %v4295
  %4326 = vmatprep.subr.bf16.mxu0 0
  %4327 = vmatpush1.bf16.msra.mxu0 %v4296
  %4328 = vmatprep.subr.bf16.mxu0 0
  %4329 = vmatpush1.bf16.msra.mxu0 %v4297
  %4330 = vmatprep.subr.bf16.mxu0 0
  %4331 = vmatpush1.bf16.msra.mxu0 %v4298
  %4332 = vmatprep.subr.bf16.mxu0 0
  %4333 = vmatpush1.bf16.msra.mxu0 %v4299
  %4334 = vmatprep.subr.bf16.mxu0 0
  %4335 = vmatpush1.bf16.msra.mxu0 %v4300
  %4336 = vmatprep.subr.bf16.mxu0 0
  %4337 = vmatpush1.bf16.msra.mxu0 %v4301
  %4338 = vmatprep.subr.bf16.mxu0 0
  %4339 = vmatpush1.bf16.msra.mxu0 %v4302
  %4340 = vmatprep.subr.bf16.mxu0 0
  %4341 = vmatpush1.bf16.msra.mxu0 %v4303
  %4342 = vmatprep.subr.bf16.mxu0 0
  %4343 = vmatpush1.bf16.msra.mxu0 %v4304
  %4344 = vmatprep.subr.bf16.mxu0 0
  %4345 = vmatpush1.bf16.msra.mxu0 0
  %4346 = vmatprep.subr.bf16.mxu0 0
  %4347 = vmatpush1.bf16.msra.mxu0 0
  %4348 = vmatprep.subr.bf16.mxu0 0
  %4349 = vmatpush1.bf16.msra.mxu0 0
  %4350 = vmatprep.subr.bf16.mxu0 0
  %4351 = vmatpush1.bf16.msra.mxu0 0
  %4352 = vmatprep.mubr.bf16.mxu0 %v4318
  %4353 = vmatmul.mubr.bf16.gmra.mrb[0].mxu0 %v4243
  %v4354 = vpop.f32.mrb[0].mxu0
  %v4355 = vadd.f32 0.0, %v4354
  %v4356 = vpop.f32.mrb[0].mxu0
  %v4357 = vpop.f32.mrb[0].mxu0
  %v4358 = vadd.f32 0.0, %v4357
  %v4359 = vpop.f32.mrb[0].mxu0
  %4360 = vdwg.mxu0
  %v4385 = vunpack.c.l.b16 %v4162
  %v4386 = vunpack.c.l.b16 %v4163
  %v4387 = vunpack.c.l.b16 %v4164
  %v4388 = vunpack.c.l.b16 %v4165
  %v4389 = vunpack.c.l.b16 %v4166
  %v4390 = vunpack.c.l.b16 %v4167
  %v4391 = vunpack.c.l.b16 %v4168
  %v4392 = vunpack.c.l.b16 %v4169
  %v4393 = vunpack.c.l.b16 %v4170
  %v4394 = vunpack.c.l.b16 %v4171
  %v4395 = vunpack.c.l.b16 %v4172
  %v4396 = vunpack.c.l.b16 %v4173
  %v4397 = vunpack.c.l.b16 %v4174
  %v4398 = vunpack.c.l.b16 %v4175
  %v4399 = vunpack.c.l.b16 %v4176
  %v4400 = vunpack.c.l.b16 %v4177
  %v4401 = vunpack.c.l.b16 %v4178
  %v4402 = vunpack.c.l.b16 %v4179
  %v4403 = vunpack.c.l.b16 %v4180
  %v4404 = vunpack.c.l.b16 %v4181
  %v4405 = vunpack.c.l.b16 %v4182
  %v4406 = vunpack.c.l.b16 %v4183
  %v4407 = vunpack.c.l.b16 %v4184
  %v4408 = vunpack.c.l.b16 %v4185
  %v4409 = vpack.c.b16 %v4386, %v4385
  %v4410 = vpack.c.b16 %v4388, %v4387
  %v4411 = vpack.c.b16 %v4390, %v4389
  %v4412 = vpack.c.b16 %v4392, %v4391
  %v4413 = vpack.c.b16 %v4394, %v4393
  %v4414 = vpack.c.b16 %v4396, %v4395
  %v4415 = vpack.c.b16 %v4398, %v4397
  %v4416 = vpack.c.b16 %v4400, %v4399
  %v4417 = vpack.c.b16 %v4402, %v4401
  %v4418 = vpack.c.b16 %v4404, %v4403
  %v4419 = vpack.c.b16 %v4406, %v4405
  %v4420 = vpack.c.b16 %v4408, %v4407
  %v4434 = vsel %vm2612, %v4242, 0
  %4436 = vmatprep.subr.bf16.mxu0 0
  %4437 = vmatpush1.bf16.msra.mxu0 %v4409
  %4438 = vmatprep.subr.bf16.mxu0 0
  %4439 = vmatpush1.bf16.msra.mxu0 %v4410
  %4440 = vmatprep.subr.bf16.mxu0 0
  %4441 = vmatpush1.bf16.msra.mxu0 %v4411
  %4442 = vmatprep.subr.bf16.mxu0 0
  %4443 = vmatpush1.bf16.msra.mxu0 %v4412
  %4444 = vmatprep.subr.bf16.mxu0 0
  %4445 = vmatpush1.bf16.msra.mxu0 %v4413
  %4446 = vmatprep.subr.bf16.mxu0 0
  %4447 = vmatpush1.bf16.msra.mxu0 %v4414
  %4448 = vmatprep.subr.bf16.mxu0 0
  %4449 = vmatpush1.bf16.msra.mxu0 %v4415
  %4450 = vmatprep.subr.bf16.mxu0 0
  %4451 = vmatpush1.bf16.msra.mxu0 %v4416
  %4452 = vmatprep.subr.bf16.mxu0 0
  %4453 = vmatpush1.bf16.msra.mxu0 %v4417
  %4454 = vmatprep.subr.bf16.mxu0 0
  %4455 = vmatpush1.bf16.msra.mxu0 %v4418
  %4456 = vmatprep.subr.bf16.mxu0 0
  %4457 = vmatpush1.bf16.msra.mxu0 %v4419
  %4458 = vmatprep.subr.bf16.mxu0 0
  %4459 = vmatpush1.bf16.msra.mxu0 %v4420
  %4460 = vmatprep.subr.bf16.mxu0 0
  %4461 = vmatpush1.bf16.msra.mxu0 0
  %4462 = vmatprep.subr.bf16.mxu0 0
  %4463 = vmatpush1.bf16.msra.mxu0 0
  %4464 = vmatprep.subr.bf16.mxu0 0
  %4465 = vmatpush1.bf16.msra.mxu0 0
  %4466 = vmatprep.subr.bf16.mxu0 0
  %4467 = vmatpush1.bf16.msra.mxu0 0
  %4468 = vmatprep.mubr.bf16.mxu0 %v4434
  %4469 = vmatmul.mubr.bf16.gmra.mrb[0].mxu0 %v4241
  %v4470 = vpop.f32.mrb[0].mxu0
  %v4471 = vadd.f32 %v4355, %v4470
  %v4472 = vpop.f32.mrb[0].mxu0
  %v4473 = vpop.f32.mrb[0].mxu0
  %v4474 = vadd.f32 %v4358, %v4473
  %v4475 = vpop.f32.mrb[0].mxu0
  %4476 = vdwg.mxu0
  %v4477 = vld [vmem:[%s3764] sm:$0xff]
  %v4478 = vld [vmem:[%s3764 + $0x8] sm:$0xff]
  %v4503 = vunpack.c.l.b16 %v4210
  %v4504 = vunpack.c.l.b16 %v4211
  %v4505 = vunpack.c.l.b16 %v4212
  %v4506 = vunpack.c.l.b16 %v4213
  %v4507 = vunpack.c.l.b16 %v4214
  %v4508 = vunpack.c.l.b16 %v4215
  %v4509 = vunpack.c.l.b16 %v4216
  %v4510 = vunpack.c.l.b16 %v4217
  %v4511 = vunpack.c.l.b16 %v4218
  %v4512 = vunpack.c.l.b16 %v4219
  %v4513 = vunpack.c.l.b16 %v4220
  %v4514 = vunpack.c.l.b16 %v4221
  %v4515 = vunpack.c.l.b16 %v4222
  %v4516 = vunpack.c.l.b16 %v4223
  %v4517 = vunpack.c.l.b16 %v4224
  %v4518 = vunpack.c.l.b16 %v4225
  %v4519 = vunpack.c.l.b16 %v4226
  %v4520 = vunpack.c.l.b16 %v4227
  %v4521 = vunpack.c.l.b16 %v4228
  %v4522 = vunpack.c.l.b16 %v4229
  %v4523 = vunpack.c.l.b16 %v4230
  %v4524 = vunpack.c.l.b16 %v4231
  %v4525 = vunpack.c.l.b16 %v4232
  %v4526 = vunpack.c.l.b16 %v4233
  %v4527 = vpack.c.b16 %v4504, %v4503
  %v4528 = vpack.c.b16 %v4506, %v4505
  %v4529 = vpack.c.b16 %v4508, %v4507
  %v4530 = vpack.c.b16 %v4510, %v4509
  %v4531 = vpack.c.b16 %v4512, %v4511
  %v4532 = vpack.c.b16 %v4514, %v4513
  %v4533 = vpack.c.b16 %v4516, %v4515
  %v4534 = vpack.c.b16 %v4518, %v4517
  %v4535 = vpack.c.b16 %v4520, %v4519
  %v4536 = vpack.c.b16 %v4522, %v4521
  %v4537 = vpack.c.b16 %v4524, %v4523
  %v4538 = vpack.c.b16 %v4526, %v4525
  %v4552 = vsel %vm2612, %v4478, 0
  %4554 = vmatprep.subr.bf16.mxu0 0
  %4555 = vmatpush1.bf16.msra.mxu0 %v4527
  %4556 = vmatprep.subr.bf16.mxu0 0
  %4557 = vmatpush1.bf16.msra.mxu0 %v4528
  %4558 = vmatprep.subr.bf16.mxu0 0
  %4559 = vmatpush1.bf16.msra.mxu0 %v4529
  %4560 = vmatprep.subr.bf16.mxu0 0
  %4561 = vmatpush1.bf16.msra.mxu0 %v4530
  %4562 = vmatprep.subr.bf16.mxu0 0
  %4563 = vmatpush1.bf16.msra.mxu0 %v4531
  %4564 = vmatprep.subr.bf16.mxu0 0
  %4565 = vmatpush1.bf16.msra.mxu0 %v4532
  %4566 = vmatprep.subr.bf16.mxu0 0
  %4567 = vmatpush1.bf16.msra.mxu0 %v4533
  %4568 = vmatprep.subr.bf16.mxu0 0
  %4569 = vmatpush1.bf16.msra.mxu0 %v4534
  %4570 = vmatprep.subr.bf16.mxu0 0
  %4571 = vmatpush1.bf16.msra.mxu0 %v4535
  %4572 = vmatprep.subr.bf16.mxu0 0
  %4573 = vmatpush1.bf16.msra.mxu0 %v4536
  %4574 = vmatprep.subr.bf16.mxu0 0
  %4575 = vmatpush1.bf16.msra.mxu0 %v4537
  %4576 = vmatprep.subr.bf16.mxu0 0
  %4577 = vmatpush1.bf16.msra.mxu0 %v4538
  %4578 = vmatprep.subr.bf16.mxu0 0
  %4579 = vmatpush1.bf16.msra.mxu0 0
  %4580 = vmatprep.subr.bf16.mxu0 0
  %4581 = vmatpush1.bf16.msra.mxu0 0
  %4582 = vmatprep.subr.bf16.mxu0 0
  %4583 = vmatpush1.bf16.msra.mxu0 0
  %4584 = vmatprep.subr.bf16.mxu0 0
  %4585 = vmatpush1.bf16.msra.mxu0 0
  %4586 = vmatprep.mubr.bf16.mxu0 %v4552
  %4587 = vmatmul.mubr.bf16.gmra.mrb[0].mxu0 %v4477
  %v4588 = vpop.f32.mrb[0].mxu0
  %v4589 = vadd.f32 0.0, %v4588
  %v4590 = vpop.f32.mrb[0].mxu0
  %v4591 = vpop.f32.mrb[0].mxu0
  %v4592 = vadd.f32 0.0, %v4591
  %v4593 = vpop.f32.mrb[0].mxu0
  %4594 = vdwg.mxu0
  %v4595 = vadd.f32 %v4471, %v4589
  %v4596 = vadd.f32 %v4474, %v4592
  %v4597 = vadd.f32 %v4595, %v4239
  %v4598 = vadd.f32 %v4596, %v4239
  %v4599 = vmax.f32 %v4597, 0.0
  %v4600 = vmax.f32 %v4598, 0.0
  %4601 = vst.msk [vmem:[%s7] sm:$0xff] %vm2612, %v4599
  %4602 = vst.msk [vmem:[%s7 + $0x8] sm:$0xff] %vm2612, %v4600
  // Predicated region
  $region30: #{dqn_base_forward.1} parent=0 // pred_check
    _
  $region31: #{dqn_base_forward.1} parent=0 // pred_check_branch
    %4604 = sbr.rel (0) target = $region33
  $region32: #{dqn_base_forward.1} parent=0 // pred_region
    _
  $region33: #{dqn_base_forward.1} parent=0 // pred_fallthru
    _
  // Predicated region
  $region34: #{dqn_base_forward.1} parent=0 // pred_check
    _
  $region35: #{dqn_base_forward.1} parent=0 // pred_check_branch
    %4606 = sbr.rel (0) target = $region37
  $region36: #{dqn_base_forward.1} parent=0 // pred_region
    _
  $region37: #{dqn_base_forward.1} parent=0 // pred_fallthru
    _

</llo_original>
